<compile_context>
chip_gen: v7x
topology: tpu7x:2x2x1
jax: 0.10.0
libtpu: 0.0.40
codegen_flags: <defaults>
</compile_context>

<pallas_src>
import functools

import jax
import jax.numpy as jnp
import numpy as np
from jax import lax
from jax.experimental import pallas as pl
from jax.experimental.pallas import tpu as pltpu

POOL_K = 5
POOL_S = 3
BN_EPS = 1e-5
CONV_OUT = 128
FC1_IN = 2048
FC1_OUT = 1024
FC_COL_TILES = 2          # fc1 column tiles (2 MB w1 tile each) -> DMA pipelining
LANE = 128


def _avg_pool_matrix(h, w, oh, ow):
    """P^T with P[o, s] = 1/25 over the 5x5 window of output o -> (H*W, OH*OW)."""
    pt = np.zeros((h * w, oh * ow), dtype=np.float32)
    inv = 1.0 / float(POOL_K * POOL_K)
    for i in range(oh):
        for j in range(ow):
            o = i * ow + j
            for di in range(POOL_K):
                for dj in range(POOL_K):
                    pt[(i * POOL_S + di) * w + (j * POOL_S + dj), o] = inv
    return jnp.asarray(pt)


def prepare_params(params, h, w):
    """One-time parameter preparation (hoisted out of the inference hot path)."""
    oh = (h - POOL_K) // POOL_S + 1
    ow = (w - POOL_K) // POOL_S + 1
    ohow = oh * ow
    assert CONV_OUT * ohow == FC1_IN, "fc1 expects 2048 flattened features"
    num_classes = params["w2"].shape[1]
    ncp = ((num_classes + LANE - 1) // LANE) * LANE          # lane-dense fc2 width

    # Fold BatchNorm (eval, running stats) into the 1x1 conv weight/bias.
    scale = params["bn_gamma"] * lax.rsqrt(params["bn_var"] + BN_EPS)
    w_fold = (params["w_conv"] * scale[None, :]).astype(jnp.float32)   # (Cin, Cout)
    b_fold = ((params["b_conv"] - params["bn_mean"]) * scale
              + params["bn_beta"]).reshape(1, CONV_OUT).astype(jnp.float32)

    # fc1 weight permuted to the conv output's natural (OHOW, Cout) layout:
    # w1p[s, c, o] = w1[c*OHOW + s, o]  (PyTorch flatten order is channel-major).
    w1p = (params["w1"].astype(jnp.bfloat16)
           .reshape(CONV_OUT, ohow, FC1_OUT)
           .transpose(1, 0, 2))                                        # (OHOW, Cout, 1024)
    b1r = params["b1"].reshape(1, FC1_OUT).astype(jnp.float32)

    # fc2 weight/bias padded once to a lane-dense 128-wide output.
    w2p = jnp.pad(params["w2"].astype(jnp.bfloat16),
                  ((0, 0), (0, ncp - num_classes)))                    # (1024, ncp)
    b2p = jnp.pad(params["b2"].astype(jnp.float32),
                  (0, ncp - num_classes)).reshape(1, ncp)              # (1, ncp)

    return {
        "pt": _avg_pool_matrix(h, w, oh, ow),                          # (HW, OHOW)
        "w_fold": w_fold, "b_fold": b_fold,
        "w1": w1p, "b1": b1r, "w2": w2p, "b2": b2p,
    }


def aux_fused_kernel(x_ref, pt_ref, wc_ref, bc_ref, b1_ref, b2_ref,
                     w1_ref, w2_ref, o_ref, feat_ref):
    """Fused: AvgPool(5,3) + 1x1 conv (BN folded) + ReLU + fc1 + ReLU
    + (dropout: identity in eval) + fc2 (+ b2), accumulated over column tiles.

    x_ref:  (N*Cin, HW) f32    pt_ref: (HW, OHOW) f32
    wc_ref: (Cin, Cout) f32    bc_ref: (1, Cout) f32
    b1_ref: (1, col) f32       b2_ref: (1, NCP) f32
    w1_ref: (OHOW, Cout, col) bf16      w2_ref: (col, NCP) bf16
    o_ref:  (N, NCP) f32 accumulator (VMEM-resident across the grid)
    feat_ref: (N, OHOW, Cout) bf16 scratch (persists across grid steps)
    """
    j = pl.program_id(0)
    n_img, ohow, _ = feat_ref.shape
    cin = wc_ref.shape[0]

    # ---- stage 1 (first column tile only): pool + conv/BN + ReLU -------------
    @pl.when(j == 0)
    def _stage1():
        # AvgPool(5,3) for the whole batch as one MXU matmul.
        pooled = jnp.dot(x_ref[...], pt_ref[...],
                         preferred_element_type=jnp.float32)           # (N*Cin, OHOW)
        wc = wc_ref[...]
        bc = bc_ref[...]
        for n in range(n_img):                                         # N tiny & static
            pooled_n = pooled[n * cin:(n + 1) * cin, :]                # (Cin, OHOW)
            z = jnp.dot(pooled_n.T, wc,
                        preferred_element_type=jnp.float32) + bc       # (OHOW, Cout)
            feat_ref[n] = jnp.maximum(z, 0.0).astype(feat_ref.dtype)
        # Fold the fc2 bias into the output accumulator.
        o_ref[...] = jnp.broadcast_to(b2_ref[...], o_ref.shape)

    # ---- every step: fc1 column tile + ReLU + partial fc2, accumulate --------
    f = feat_ref[...]                                                  # (N, OHOW, Cout) bf16
    h = jnp.dot(f[:, 0, :], w1_ref[0], preferred_element_type=jnp.float32)
    for s in range(1, ohow):                       # 16 accumulated (N,128)@(128,col) dots
        h = h + jnp.dot(f[:, s, :], w1_ref[s],
                        preferred_element_type=jnp.float32)
    h = jnp.maximum(h + b1_ref[...], 0.0)                              # (N, col)
    # Dropout(p=0.7) is the identity in eval mode.
    o_ref[...] += jnp.dot(h.astype(w2_ref.dtype), w2_ref[...],
                          preferred_element_type=jnp.float32)          # (N, NCP)


@functools.partial(jax.jit, static_argnames=("num_classes",))
def aux_block_forward(x_nchw, prep, num_classes):
    n, cin, h, w = x_nchw.shape
    hw = h * w
    ohow, cout, fc1_out = prep["w1"].shape
    ncp = prep["w2"].shape[1]
    col = fc1_out // FC_COL_TILES

    x2 = x_nchw.reshape(n * cin, hw)                                   # free (contiguous)

    out = pl.pallas_call(
        aux_fused_kernel,
        out_shape=jax.ShapeDtypeStruct((n, ncp), jnp.float32),
        grid=(FC_COL_TILES,),
        in_specs=[
            pl.BlockSpec((n * cin, hw), lambda j: (0, 0)),             # x
            pl.BlockSpec((hw, ohow), lambda j: (0, 0)),                # pooling matrix
            pl.BlockSpec((cin, cout), lambda j: (0, 0)),               # folded conv w
            pl.BlockSpec((1, cout), lambda j: (0, 0)),                 # folded conv b
            pl.BlockSpec((1, col), lambda j: (0, j)),                  # b1 tile
            pl.BlockSpec((1, ncp), lambda j: (0, 0)),                  # b2 (padded)
            pl.BlockSpec((ohow, cout, col), lambda j: (0, 0, j)),      # w1 tile (2 MB)
            pl.BlockSpec((col, ncp), lambda j: (j, 0)),                # w2 tile
        ],
        out_specs=pl.BlockSpec((n, ncp), lambda j: (0, 0)),            # accumulator
        scratch_shapes=[pltpu.VMEM((n, ohow, cout), jnp.bfloat16)],    # feature bridge
        compiler_params=pltpu.CompilerParams(
            dimension_semantics=("arbitrary",),
            vmem_limit_bytes=16 * 1024 * 1024),
    )(x2, prep["pt"], prep["w_fold"], prep["b_fold"],
      prep["b1"], prep["b2"], prep["w1"], prep["w2"])

    return out[:, :num_classes]


def aux_block_reference(x_nchw, params, prep):
    """Pure-JAX reference mirroring the kernel's bf16 cast points."""
    n, cin, h, w = x_nchw.shape
    hp = lax.Precision.HIGHEST
    xr = x_nchw.reshape(n, cin, h * w)
    pooled = jnp.einsum("nch,ho->nco", xr, prep["pt"], precision=hp)   # (N, Cin, OHOW)
    z = (jnp.einsum("nco,cd->ndo", pooled, prep["w_fold"], precision=hp)
         + prep["b_fold"].reshape(1, CONV_OUT, 1))                     # (N, Cout, OHOW)
    feat = jnp.maximum(z, 0.0).reshape(n, FC1_IN)
    feat = feat.astype(jnp.bfloat16).astype(jnp.float32)
    w1 = params["w1"].astype(jnp.bfloat16).astype(jnp.float32)
    w2 = params["w2"].astype(jnp.bfloat16).astype(jnp.float32)
    h1 = jnp.maximum(jnp.dot(feat, w1, precision=hp) + params["b1"][None, :], 0.0)
    h1 = h1.astype(jnp.bfloat16).astype(jnp.float32)
    return jnp.dot(h1, w2, precision=hp) + params["b2"][None, :]


if __name__ == "__main__":
    key = jax.random.PRNGKey(0)
    ks = jax.random.split(key, 11)

    # AvgPool(5,3) on 14x14 -> 4x4; 1x1 conv to 128 ch -> 128*4*4 = 2048 = fc1 in.
    N, Cin, H, W = 2, 8, 14, 14
    num_classes = 10

    x = jax.random.normal(ks[0], (N, Cin, H, W), jnp.float32)

    params = {
        # Conv2d(Cin, 128, 1): weight stored as (Cin, Cout) (PyTorch weight.T)
        "w_conv": jax.random.normal(ks[1], (Cin, CONV_OUT), jnp.float32)
                  / jnp.sqrt(float(Cin)),
        "b_conv": 0.1 * jax.random.normal(ks[2], (CONV_OUT,), jnp.float32),
        # BatchNorm2d(128) parameters + running stats (eval mode)
        "bn_gamma": 1.0 + 0.1 * jax.random.normal(ks[3], (CONV_OUT,), jnp.float32),
        "bn_beta": 0.1 * jax.random.normal(ks[4], (CONV_OUT,), jnp.float32),
        "bn_mean": 0.05 * jax.random.normal(ks[5], (CONV_OUT,), jnp.float32),
        "bn_var": 0.5 + jax.random.uniform(ks[6], (CONV_OUT,), jnp.float32),
        # Linear weights stored transposed ((in, out)); prepare_params casts to bf16.
        "w1": jax.random.normal(ks[7], (FC1_IN, FC1_OUT), jnp.float32)
              / jnp.sqrt(float(FC1_IN)),
        "b1": 0.01 * jax.random.normal(ks[8], (FC1_OUT,), jnp.float32),
        "w2": jax.random.normal(ks[9], (FC1_OUT, num_classes), jnp.float32)
              / jnp.sqrt(float(FC1_OUT)),
        "b2": 0.01 * jax.random.normal(ks[10], (num_classes,), jnp.float32),
    }

    # One-time parameter preparation (NOT part of the per-call hot path).
    prep = jax.block_until_ready(prepare_params(params, H, W))

    out = aux_block_forward(x, prep, num_classes)
    out = jax.block_until_ready(out)
    assert out.shape == (N, num_classes)
    assert bool(jnp.all(jnp.isfinite(out)))

    ref = aux_block_reference(x, params, prep)
    max_err = float(jnp.max(jnp.abs(out - ref)))
    assert jnp.allclose(out, ref, rtol=2e-2, atol=2e-2), max_err

    print("KERNEL_OK")
</pallas_src>

<mosaic_0001>
module attributes {stable_mosaic.version = 11 : i64} {
  func.func @aux_fused_kernel(%arg0: i32, %arg1: memref<16x196xf32, #tpu.memory_space<vmem>>, %arg2: memref<196x16xf32, #tpu.memory_space<vmem>>, %arg3: memref<8x128xf32, #tpu.memory_space<vmem>>, %arg4: memref<1x128xf32, #tpu.memory_space<vmem>>, %arg5: memref<1x512xf32, #tpu.memory_space<vmem>>, %arg6: memref<1x128xf32, #tpu.memory_space<vmem>>, %arg7: memref<16x128x512xbf16, #tpu.memory_space<vmem>>, %arg8: memref<512x128xbf16, #tpu.memory_space<vmem>>, %arg9: memref<2x128xf32, #tpu.memory_space<vmem>>, %arg10: memref<2x16x128xbf16, #tpu.memory_space<vmem>>) attributes {dimension_semantics = [#tpu.dimension_semantics<arbitrary>], iteration_bounds = array<i64: 2>, scalar_prefetch = 0 : i64, scratch_operands = 1 : i64, tpu.core_type = #tpu.core_type<tc>, window_params = [{pipeline_mode = #tpu.pipeline_mode<synchronous>, transform_indices = @transform_0, window_bounds = array<i64: 16, 196>}, {pipeline_mode = #tpu.pipeline_mode<synchronous>, transform_indices = @transform_1, window_bounds = array<i64: 196, 16>}, {pipeline_mode = #tpu.pipeline_mode<synchronous>, transform_indices = @transform_2, window_bounds = array<i64: 8, 128>}, {pipeline_mode = #tpu.pipeline_mode<synchronous>, transform_indices = @transform_3, window_bounds = array<i64: 1, 128>}, {transform_indices = @transform_4, window_bounds = array<i64: 1, 512>}, {pipeline_mode = #tpu.pipeline_mode<synchronous>, transform_indices = @transform_5, window_bounds = array<i64: 1, 128>}, {transform_indices = @transform_6, window_bounds = array<i64: 16, 128, 512>}, {transform_indices = @transform_7, window_bounds = array<i64: 512, 128>}, {pipeline_mode = #tpu.pipeline_mode<synchronous>, transform_indices = @transform_8, window_bounds = array<i64: 2, 128>}]} {
    %c0_i32 = arith.constant 0 : i32
    %0 = arith.cmpi eq, %arg0, %c0_i32 : i32
    %1 = arith.extui %0 : i1 to i32
    %c0_i32_0 = arith.constant 0 : i32
    %2 = arith.cmpi ne, %1, %c0_i32_0 : i32
    scf.if %2 {
      %c0_61 = arith.constant 0 : index
      %c0_62 = arith.constant 0 : index
      %110 = vector.load %arg1[%c0_61, %c0_62] : memref<16x196xf32, #tpu.memory_space<vmem>>, vector<16x196xf32>
      %c0_63 = arith.constant 0 : index
      %c0_64 = arith.constant 0 : index
      %111 = vector.load %arg2[%c0_63, %c0_64] : memref<196x16xf32, #tpu.memory_space<vmem>>, vector<196x16xf32>
      %cst_65 = arith.constant dense<0.000000e+00> : vector<16x16xf32>
      %112 = tpu.matmul %110, %111, %cst_65 {dimension_numbers = #tpu.dot_dimension_numbers<[1], [0], [0], [1], [0, 0, 1, 1], [], []>} : vector<16x196xf32>, vector<196x16xf32>, vector<16x16xf32> -> vector<16x16xf32>
      %c0_66 = arith.constant 0 : index
      %c0_67 = arith.constant 0 : index
      %113 = vector.load %arg3[%c0_66, %c0_67] : memref<8x128xf32, #tpu.memory_space<vmem>>, vector<8x128xf32>
      %c0_68 = arith.constant 0 : index
      %c0_69 = arith.constant 0 : index
      %114 = vector.load %arg4[%c0_68, %c0_69] : memref<1x128xf32, #tpu.memory_space<vmem>>, vector<1x128xf32>
      %115 = vector.extract_strided_slice %112 {offsets = [0, 0], sizes = [8, 16], strides = [1, 1]} : vector<16x16xf32> to vector<8x16xf32>
      %116 = tpu.transpose %115, [1, 0] : vector<8x16xf32> -> vector<16x8xf32>
      %cst_70 = arith.constant dense<0.000000e+00> : vector<16x128xf32>
      %117 = tpu.matmul %116, %113, %cst_70 {dimension_numbers = #tpu.dot_dimension_numbers<[1], [0], [0], [1], [0, 0, 1, 1], [], []>} : vector<16x8xf32>, vector<8x128xf32>, vector<16x128xf32> -> vector<16x128xf32>
      %118 = vector.broadcast %114 : vector<1x128xf32> to vector<16x128xf32>
      %119 = arith.addf %117, %118 : vector<16x128xf32>
      %cst_71 = arith.constant 0.000000e+00 : f32
      %120 = vector.broadcast %cst_71 : f32 to vector<16x128xf32>
      %121 = arith.maximumf %119, %120 : vector<16x128xf32>
      %122 = arith.truncf %121 : vector<16x128xf32> to vector<16x128xbf16>
      %c0_72 = arith.constant 0 : index
      %c0_73 = arith.constant 0 : index
      %c0_74 = arith.constant 0 : index
      %123 = vector.load %arg10[%c0_72, %c0_73, %c0_74] : memref<2x16x128xbf16, #tpu.memory_space<vmem>>, vector<1x16x128xbf16>
      %124 = vector.shape_cast %123 : vector<1x16x128xbf16> to vector<16x128xbf16>
      %125 = vector.shape_cast %122 : vector<16x128xbf16> to vector<1x16x128xbf16>
      tpu.vector_store %arg10[%c0_72, %c0_73, %c0_74], %125 {strides = array<i32>} : memref<2x16x128xbf16, #tpu.memory_space<vmem>>, vector<1x16x128xbf16>,
      %126 = vector.extract_strided_slice %112 {offsets = [8, 0], sizes = [8, 16], strides = [1, 1]} : vector<16x16xf32> to vector<8x16xf32>
      %127 = tpu.transpose %126, [1, 0] : vector<8x16xf32> -> vector<16x8xf32>
      %cst_75 = arith.constant dense<0.000000e+00> : vector<16x128xf32>
      %128 = tpu.matmul %127, %113, %cst_75 {dimension_numbers = #tpu.dot_dimension_numbers<[1], [0], [0], [1], [0, 0, 1, 1], [], []>} : vector<16x8xf32>, vector<8x128xf32>, vector<16x128xf32> -> vector<16x128xf32>
      %129 = vector.broadcast %114 : vector<1x128xf32> to vector<16x128xf32>
      %130 = arith.addf %128, %129 : vector<16x128xf32>
      %cst_76 = arith.constant 0.000000e+00 : f32
      %131 = vector.broadcast %cst_76 : f32 to vector<16x128xf32>
      %132 = arith.maximumf %130, %131 : vector<16x128xf32>
      %133 = arith.truncf %132 : vector<16x128xf32> to vector<16x128xbf16>
      %c1_77 = arith.constant 1 : index
      %c0_78 = arith.constant 0 : index
      %c0_79 = arith.constant 0 : index
      %134 = vector.load %arg10[%c1_77, %c0_78, %c0_79] : memref<2x16x128xbf16, #tpu.memory_space<vmem>>, vector<1x16x128xbf16>
      %135 = vector.shape_cast %134 : vector<1x16x128xbf16> to vector<16x128xbf16>
      %136 = vector.shape_cast %133 : vector<16x128xbf16> to vector<1x16x128xbf16>
      tpu.vector_store %arg10[%c1_77, %c0_78, %c0_79], %136 {strides = array<i32>} : memref<2x16x128xbf16, #tpu.memory_space<vmem>>, vector<1x16x128xbf16>,
      %c0_80 = arith.constant 0 : index
      %c0_81 = arith.constant 0 : index
      %137 = vector.load %arg6[%c0_80, %c0_81] : memref<1x128xf32, #tpu.memory_space<vmem>>, vector<1x128xf32>
      %138 = vector.shape_cast %137 : vector<1x128xf32> to vector<1x128xf32>
      %139 = vector.broadcast %138 : vector<1x128xf32> to vector<2x128xf32>
      %c0_82 = arith.constant 0 : index
      %c0_83 = arith.constant 0 : index
      %140 = vector.load %arg9[%c0_82, %c0_83] : memref<2x128xf32, #tpu.memory_space<vmem>>, vector<2x128xf32>
      tpu.vector_store %arg9[%c0_82, %c0_83], %139 {strides = array<i32>} : memref<2x128xf32, #tpu.memory_space<vmem>>, vector<2x128xf32>,
    } else {
    }
    %c0 = arith.constant 0 : index
    %c0_1 = arith.constant 0 : index
    %c0_2 = arith.constant 0 : index
    %3 = vector.load %arg10[%c0, %c0_1, %c0_2] : memref<2x16x128xbf16, #tpu.memory_space<vmem>>, vector<2x16x128xbf16>
    %4 = vector.extract_strided_slice %3 {offsets = [0, 0, 0], sizes = [2, 1, 128], strides = [1, 1, 1]} : vector<2x16x128xbf16> to vector<2x1x128xbf16>
    %5 = vector.shape_cast %4 : vector<2x1x128xbf16> to vector<2x128xbf16>
    %c0_3 = arith.constant 0 : index
    %c0_4 = arith.constant 0 : index
    %c0_5 = arith.constant 0 : index
    %6 = vector.load %arg7[%c0_3, %c0_4, %c0_5] : memref<16x128x512xbf16, #tpu.memory_space<vmem>>, vector<1x128x512xbf16>
    %7 = vector.shape_cast %6 : vector<1x128x512xbf16> to vector<128x512xbf16>
    %cst = arith.constant dense<0.000000e+00> : vector<2x512xf32>
    %8 = tpu.matmul %5, %7, %cst {dimension_numbers = #tpu.dot_dimension_numbers<[1], [0], [0], [1], [0, 0, 1, 1], [], []>} : vector<2x128xbf16>, vector<128x512xbf16>, vector<2x512xf32> -> vector<2x512xf32>
    %9 = vector.extract_strided_slice %3 {offsets = [0, 1, 0], sizes = [2, 1, 128], strides = [1, 1, 1]} : vector<2x16x128xbf16> to vector<2x1x128xbf16>
    %10 = vector.shape_cast %9 : vector<2x1x128xbf16> to vector<2x128xbf16>
    %c1 = arith.constant 1 : index
    %c0_6 = arith.constant 0 : index
    %c0_7 = arith.constant 0 : index
    %11 = vector.load %arg7[%c1, %c0_6, %c0_7] : memref<16x128x512xbf16, #tpu.memory_space<vmem>>, vector<1x128x512xbf16>
    %12 = vector.shape_cast %11 : vector<1x128x512xbf16> to vector<128x512xbf16>
    %cst_8 = arith.constant dense<0.000000e+00> : vector<2x512xf32>
    %13 = tpu.matmul %10, %12, %cst_8 {dimension_numbers = #tpu.dot_dimension_numbers<[1], [0], [0], [1], [0, 0, 1, 1], [], []>} : vector<2x128xbf16>, vector<128x512xbf16>, vector<2x512xf32> -> vector<2x512xf32>
    %14 = arith.addf %8, %13 : vector<2x512xf32>
    %15 = vector.extract_strided_slice %3 {offsets = [0, 2, 0], sizes = [2, 1, 128], strides = [1, 1, 1]} : vector<2x16x128xbf16> to vector<2x1x128xbf16>
    %16 = vector.shape_cast %15 : vector<2x1x128xbf16> to vector<2x128xbf16>
    %c2 = arith.constant 2 : index
    %c0_9 = arith.constant 0 : index
    %c0_10 = arith.constant 0 : index
    %17 = vector.load %arg7[%c2, %c0_9, %c0_10] : memref<16x128x512xbf16, #tpu.memory_space<vmem>>, vector<1x128x512xbf16>
    %18 = vector.shape_cast %17 : vector<1x128x512xbf16> to vector<128x512xbf16>
    %cst_11 = arith.constant dense<0.000000e+00> : vector<2x512xf32>
    %19 = tpu.matmul %16, %18, %cst_11 {dimension_numbers = #tpu.dot_dimension_numbers<[1], [0], [0], [1], [0, 0, 1, 1], [], []>} : vector<2x128xbf16>, vector<128x512xbf16>, vector<2x512xf32> -> vector<2x512xf32>
    %20 = arith.addf %14, %19 : vector<2x512xf32>
    %21 = vector.extract_strided_slice %3 {offsets = [0, 3, 0], sizes = [2, 1, 128], strides = [1, 1, 1]} : vector<2x16x128xbf16> to vector<2x1x128xbf16>
    %22 = vector.shape_cast %21 : vector<2x1x128xbf16> to vector<2x128xbf16>
    %c3 = arith.constant 3 : index
    %c0_12 = arith.constant 0 : index
    %c0_13 = arith.constant 0 : index
    %23 = vector.load %arg7[%c3, %c0_12, %c0_13] : memref<16x128x512xbf16, #tpu.memory_space<vmem>>, vector<1x128x512xbf16>
    %24 = vector.shape_cast %23 : vector<1x128x512xbf16> to vector<128x512xbf16>
    %cst_14 = arith.constant dense<0.000000e+00> : vector<2x512xf32>
    %25 = tpu.matmul %22, %24, %cst_14 {dimension_numbers = #tpu.dot_dimension_numbers<[1], [0], [0], [1], [0, 0, 1, 1], [], []>} : vector<2x128xbf16>, vector<128x512xbf16>, vector<2x512xf32> -> vector<2x512xf32>
    %26 = arith.addf %20, %25 : vector<2x512xf32>
    %27 = vector.extract_strided_slice %3 {offsets = [0, 4, 0], sizes = [2, 1, 128], strides = [1, 1, 1]} : vector<2x16x128xbf16> to vector<2x1x128xbf16>
    %28 = vector.shape_cast %27 : vector<2x1x128xbf16> to vector<2x128xbf16>
    %c4 = arith.constant 4 : index
    %c0_15 = arith.constant 0 : index
    %c0_16 = arith.constant 0 : index
    %29 = vector.load %arg7[%c4, %c0_15, %c0_16] : memref<16x128x512xbf16, #tpu.memory_space<vmem>>, vector<1x128x512xbf16>
    %30 = vector.shape_cast %29 : vector<1x128x512xbf16> to vector<128x512xbf16>
    %cst_17 = arith.constant dense<0.000000e+00> : vector<2x512xf32>
    %31 = tpu.matmul %28, %30, %cst_17 {dimension_numbers = #tpu.dot_dimension_numbers<[1], [0], [0], [1], [0, 0, 1, 1], [], []>} : vector<2x128xbf16>, vector<128x512xbf16>, vector<2x512xf32> -> vector<2x512xf32>
    %32 = arith.addf %26, %31 : vector<2x512xf32>
    %33 = vector.extract_strided_slice %3 {offsets = [0, 5, 0], sizes = [2, 1, 128], strides = [1, 1, 1]} : vector<2x16x128xbf16> to vector<2x1x128xbf16>
    %34 = vector.shape_cast %33 : vector<2x1x128xbf16> to vector<2x128xbf16>
    %c5 = arith.constant 5 : index
    %c0_18 = arith.constant 0 : index
    %c0_19 = arith.constant 0 : index
    %35 = vector.load %arg7[%c5, %c0_18, %c0_19] : memref<16x128x512xbf16, #tpu.memory_space<vmem>>, vector<1x128x512xbf16>
    %36 = vector.shape_cast %35 : vector<1x128x512xbf16> to vector<128x512xbf16>
    %cst_20 = arith.constant dense<0.000000e+00> : vector<2x512xf32>
    %37 = tpu.matmul %34, %36, %cst_20 {dimension_numbers = #tpu.dot_dimension_numbers<[1], [0], [0], [1], [0, 0, 1, 1], [], []>} : vector<2x128xbf16>, vector<128x512xbf16>, vector<2x512xf32> -> vector<2x512xf32>
    %38 = arith.addf %32, %37 : vector<2x512xf32>
    %39 = vector.extract_strided_slice %3 {offsets = [0, 6, 0], sizes = [2, 1, 128], strides = [1, 1, 1]} : vector<2x16x128xbf16> to vector<2x1x128xbf16>
    %40 = vector.shape_cast %39 : vector<2x1x128xbf16> to vector<2x128xbf16>
    %c6 = arith.constant 6 : index
    %c0_21 = arith.constant 0 : index
    %c0_22 = arith.constant 0 : index
    %41 = vector.load %arg7[%c6, %c0_21, %c0_22] : memref<16x128x512xbf16, #tpu.memory_space<vmem>>, vector<1x128x512xbf16>
    %42 = vector.shape_cast %41 : vector<1x128x512xbf16> to vector<128x512xbf16>
    %cst_23 = arith.constant dense<0.000000e+00> : vector<2x512xf32>
    %43 = tpu.matmul %40, %42, %cst_23 {dimension_numbers = #tpu.dot_dimension_numbers<[1], [0], [0], [1], [0, 0, 1, 1], [], []>} : vector<2x128xbf16>, vector<128x512xbf16>, vector<2x512xf32> -> vector<2x512xf32>
    %44 = arith.addf %38, %43 : vector<2x512xf32>
    %45 = vector.extract_strided_slice %3 {offsets = [0, 7, 0], sizes = [2, 1, 128], strides = [1, 1, 1]} : vector<2x16x128xbf16> to vector<2x1x128xbf16>
    %46 = vector.shape_cast %45 : vector<2x1x128xbf16> to vector<2x128xbf16>
    %c7 = arith.constant 7 : index
    %c0_24 = arith.constant 0 : index
    %c0_25 = arith.constant 0 : index
    %47 = vector.load %arg7[%c7, %c0_24, %c0_25] : memref<16x128x512xbf16, #tpu.memory_space<vmem>>, vector<1x128x512xbf16>
    %48 = vector.shape_cast %47 : vector<1x128x512xbf16> to vector<128x512xbf16>
    %cst_26 = arith.constant dense<0.000000e+00> : vector<2x512xf32>
    %49 = tpu.matmul %46, %48, %cst_26 {dimension_numbers = #tpu.dot_dimension_numbers<[1], [0], [0], [1], [0, 0, 1, 1], [], []>} : vector<2x128xbf16>, vector<128x512xbf16>, vector<2x512xf32> -> vector<2x512xf32>
    %50 = arith.addf %44, %49 : vector<2x512xf32>
    %51 = vector.extract_strided_slice %3 {offsets = [0, 8, 0], sizes = [2, 1, 128], strides = [1, 1, 1]} : vector<2x16x128xbf16> to vector<2x1x128xbf16>
    %52 = vector.shape_cast %51 : vector<2x1x128xbf16> to vector<2x128xbf16>
    %c8 = arith.constant 8 : index
    %c0_27 = arith.constant 0 : index
    %c0_28 = arith.constant 0 : index
    %53 = vector.load %arg7[%c8, %c0_27, %c0_28] : memref<16x128x512xbf16, #tpu.memory_space<vmem>>, vector<1x128x512xbf16>
    %54 = vector.shape_cast %53 : vector<1x128x512xbf16> to vector<128x512xbf16>
    %cst_29 = arith.constant dense<0.000000e+00> : vector<2x512xf32>
    %55 = tpu.matmul %52, %54, %cst_29 {dimension_numbers = #tpu.dot_dimension_numbers<[1], [0], [0], [1], [0, 0, 1, 1], [], []>} : vector<2x128xbf16>, vector<128x512xbf16>, vector<2x512xf32> -> vector<2x512xf32>
    %56 = arith.addf %50, %55 : vector<2x512xf32>
    %57 = vector.extract_strided_slice %3 {offsets = [0, 9, 0], sizes = [2, 1, 128], strides = [1, 1, 1]} : vector<2x16x128xbf16> to vector<2x1x128xbf16>
    %58 = vector.shape_cast %57 : vector<2x1x128xbf16> to vector<2x128xbf16>
    %c9 = arith.constant 9 : index
    %c0_30 = arith.constant 0 : index
    %c0_31 = arith.constant 0 : index
    %59 = vector.load %arg7[%c9, %c0_30, %c0_31] : memref<16x128x512xbf16, #tpu.memory_space<vmem>>, vector<1x128x512xbf16>
    %60 = vector.shape_cast %59 : vector<1x128x512xbf16> to vector<128x512xbf16>
    %cst_32 = arith.constant dense<0.000000e+00> : vector<2x512xf32>
    %61 = tpu.matmul %58, %60, %cst_32 {dimension_numbers = #tpu.dot_dimension_numbers<[1], [0], [0], [1], [0, 0, 1, 1], [], []>} : vector<2x128xbf16>, vector<128x512xbf16>, vector<2x512xf32> -> vector<2x512xf32>
    %62 = arith.addf %56, %61 : vector<2x512xf32>
    %63 = vector.extract_strided_slice %3 {offsets = [0, 10, 0], sizes = [2, 1, 128], strides = [1, 1, 1]} : vector<2x16x128xbf16> to vector<2x1x128xbf16>
    %64 = vector.shape_cast %63 : vector<2x1x128xbf16> to vector<2x128xbf16>
    %c10 = arith.constant 10 : index
    %c0_33 = arith.constant 0 : index
    %c0_34 = arith.constant 0 : index
    %65 = vector.load %arg7[%c10, %c0_33, %c0_34] : memref<16x128x512xbf16, #tpu.memory_space<vmem>>, vector<1x128x512xbf16>
    %66 = vector.shape_cast %65 : vector<1x128x512xbf16> to vector<128x512xbf16>
    %cst_35 = arith.constant dense<0.000000e+00> : vector<2x512xf32>
    %67 = tpu.matmul %64, %66, %cst_35 {dimension_numbers = #tpu.dot_dimension_numbers<[1], [0], [0], [1], [0, 0, 1, 1], [], []>} : vector<2x128xbf16>, vector<128x512xbf16>, vector<2x512xf32> -> vector<2x512xf32>
    %68 = arith.addf %62, %67 : vector<2x512xf32>
    %69 = vector.extract_strided_slice %3 {offsets = [0, 11, 0], sizes = [2, 1, 128], strides = [1, 1, 1]} : vector<2x16x128xbf16> to vector<2x1x128xbf16>
    %70 = vector.shape_cast %69 : vector<2x1x128xbf16> to vector<2x128xbf16>
    %c11 = arith.constant 11 : index
    %c0_36 = arith.constant 0 : index
    %c0_37 = arith.constant 0 : index
    %71 = vector.load %arg7[%c11, %c0_36, %c0_37] : memref<16x128x512xbf16, #tpu.memory_space<vmem>>, vector<1x128x512xbf16>
    %72 = vector.shape_cast %71 : vector<1x128x512xbf16> to vector<128x512xbf16>
    %cst_38 = arith.constant dense<0.000000e+00> : vector<2x512xf32>
    %73 = tpu.matmul %70, %72, %cst_38 {dimension_numbers = #tpu.dot_dimension_numbers<[1], [0], [0], [1], [0, 0, 1, 1], [], []>} : vector<2x128xbf16>, vector<128x512xbf16>, vector<2x512xf32> -> vector<2x512xf32>
    %74 = arith.addf %68, %73 : vector<2x512xf32>
    %75 = vector.extract_strided_slice %3 {offsets = [0, 12, 0], sizes = [2, 1, 128], strides = [1, 1, 1]} : vector<2x16x128xbf16> to vector<2x1x128xbf16>
    %76 = vector.shape_cast %75 : vector<2x1x128xbf16> to vector<2x128xbf16>
    %c12 = arith.constant 12 : index
    %c0_39 = arith.constant 0 : index
    %c0_40 = arith.constant 0 : index
    %77 = vector.load %arg7[%c12, %c0_39, %c0_40] : memref<16x128x512xbf16, #tpu.memory_space<vmem>>, vector<1x128x512xbf16>
    %78 = vector.shape_cast %77 : vector<1x128x512xbf16> to vector<128x512xbf16>
    %cst_41 = arith.constant dense<0.000000e+00> : vector<2x512xf32>
    %79 = tpu.matmul %76, %78, %cst_41 {dimension_numbers = #tpu.dot_dimension_numbers<[1], [0], [0], [1], [0, 0, 1, 1], [], []>} : vector<2x128xbf16>, vector<128x512xbf16>, vector<2x512xf32> -> vector<2x512xf32>
    %80 = arith.addf %74, %79 : vector<2x512xf32>
    %81 = vector.extract_strided_slice %3 {offsets = [0, 13, 0], sizes = [2, 1, 128], strides = [1, 1, 1]} : vector<2x16x128xbf16> to vector<2x1x128xbf16>
    %82 = vector.shape_cast %81 : vector<2x1x128xbf16> to vector<2x128xbf16>
    %c13 = arith.constant 13 : index
    %c0_42 = arith.constant 0 : index
    %c0_43 = arith.constant 0 : index
    %83 = vector.load %arg7[%c13, %c0_42, %c0_43] : memref<16x128x512xbf16, #tpu.memory_space<vmem>>, vector<1x128x512xbf16>
    %84 = vector.shape_cast %83 : vector<1x128x512xbf16> to vector<128x512xbf16>
    %cst_44 = arith.constant dense<0.000000e+00> : vector<2x512xf32>
    %85 = tpu.matmul %82, %84, %cst_44 {dimension_numbers = #tpu.dot_dimension_numbers<[1], [0], [0], [1], [0, 0, 1, 1], [], []>} : vector<2x128xbf16>, vector<128x512xbf16>, vector<2x512xf32> -> vector<2x512xf32>
    %86 = arith.addf %80, %85 : vector<2x512xf32>
    %87 = vector.extract_strided_slice %3 {offsets = [0, 14, 0], sizes = [2, 1, 128], strides = [1, 1, 1]} : vector<2x16x128xbf16> to vector<2x1x128xbf16>
    %88 = vector.shape_cast %87 : vector<2x1x128xbf16> to vector<2x128xbf16>
    %c14 = arith.constant 14 : index
    %c0_45 = arith.constant 0 : index
    %c0_46 = arith.constant 0 : index
    %89 = vector.load %arg7[%c14, %c0_45, %c0_46] : memref<16x128x512xbf16, #tpu.memory_space<vmem>>, vector<1x128x512xbf16>
    %90 = vector.shape_cast %89 : vector<1x128x512xbf16> to vector<128x512xbf16>
    %cst_47 = arith.constant dense<0.000000e+00> : vector<2x512xf32>
    %91 = tpu.matmul %88, %90, %cst_47 {dimension_numbers = #tpu.dot_dimension_numbers<[1], [0], [0], [1], [0, 0, 1, 1], [], []>} : vector<2x128xbf16>, vector<128x512xbf16>, vector<2x512xf32> -> vector<2x512xf32>
    %92 = arith.addf %86, %91 : vector<2x512xf32>
    %93 = vector.extract_strided_slice %3 {offsets = [0, 15, 0], sizes = [2, 1, 128], strides = [1, 1, 1]} : vector<2x16x128xbf16> to vector<2x1x128xbf16>
    %94 = vector.shape_cast %93 : vector<2x1x128xbf16> to vector<2x128xbf16>
    %c15 = arith.constant 15 : index
    %c0_48 = arith.constant 0 : index
    %c0_49 = arith.constant 0 : index
    %95 = vector.load %arg7[%c15, %c0_48, %c0_49] : memref<16x128x512xbf16, #tpu.memory_space<vmem>>, vector<1x128x512xbf16>
    %96 = vector.shape_cast %95 : vector<1x128x512xbf16> to vector<128x512xbf16>
    %cst_50 = arith.constant dense<0.000000e+00> : vector<2x512xf32>
    %97 = tpu.matmul %94, %96, %cst_50 {dimension_numbers = #tpu.dot_dimension_numbers<[1], [0], [0], [1], [0, 0, 1, 1], [], []>} : vector<2x128xbf16>, vector<128x512xbf16>, vector<2x512xf32> -> vector<2x512xf32>
    %98 = arith.addf %92, %97 : vector<2x512xf32>
    %c0_51 = arith.constant 0 : index
    %c0_52 = arith.constant 0 : index
    %99 = vector.load %arg5[%c0_51, %c0_52] : memref<1x512xf32, #tpu.memory_space<vmem>>, vector<1x512xf32>
    %100 = vector.broadcast %99 : vector<1x512xf32> to vector<2x512xf32>
    %101 = arith.addf %98, %100 : vector<2x512xf32>
    %cst_53 = arith.constant 0.000000e+00 : f32
    %102 = vector.broadcast %cst_53 : f32 to vector<2x512xf32>
    %103 = arith.maximumf %101, %102 : vector<2x512xf32>
    %c0_54 = arith.constant 0 : index
    %c0_55 = arith.constant 0 : index
    %104 = vector.load %arg9[%c0_54, %c0_55] : memref<2x128xf32, #tpu.memory_space<vmem>>, vector<2x128xf32>
    %105 = arith.truncf %103 : vector<2x512xf32> to vector<2x512xbf16>
    %c0_56 = arith.constant 0 : index
    %c0_57 = arith.constant 0 : index
    %106 = vector.load %arg8[%c0_56, %c0_57] : memref<512x128xbf16, #tpu.memory_space<vmem>>, vector<512x128xbf16>
    %cst_58 = arith.constant dense<0.000000e+00> : vector<2x128xf32>
    %107 = tpu.matmul %105, %106, %cst_58 {dimension_numbers = #tpu.dot_dimension_numbers<[1], [0], [0], [1], [0, 0, 1, 1], [], []>} : vector<2x512xbf16>, vector<512x128xbf16>, vector<2x128xf32> -> vector<2x128xf32>
    %108 = arith.addf %104, %107 : vector<2x128xf32>
    %c0_59 = arith.constant 0 : index
    %c0_60 = arith.constant 0 : index
    %109 = vector.load %arg9[%c0_59, %c0_60] : memref<2x128xf32, #tpu.memory_space<vmem>>, vector<2x128xf32>
    tpu.vector_store %arg9[%c0_59, %c0_60], %108 {strides = array<i32>} : memref<2x128xf32, #tpu.memory_space<vmem>>, vector<2x128xf32>,
    return
  }
  func.func @transform_0(%arg0: i32) -> (i32, i32) {
    %c0_i32 = arith.constant 0 : i32
    %c0_i32_0 = arith.constant 0 : i32
    %c0_i32_1 = arith.constant 0 : i32
    return %c0_i32, %c0_i32_0 : i32, i32
  }
  func.func @transform_1(%arg0: i32) -> (i32, i32) {
    %c0_i32 = arith.constant 0 : i32
    %c0_i32_0 = arith.constant 0 : i32
    %c0_i32_1 = arith.constant 0 : i32
    return %c0_i32, %c0_i32_0 : i32, i32
  }
  func.func @transform_2(%arg0: i32) -> (i32, i32) {
    %c0_i32 = arith.constant 0 : i32
    %c0_i32_0 = arith.constant 0 : i32
    %c0_i32_1 = arith.constant 0 : i32
    return %c0_i32, %c0_i32_0 : i32, i32
  }
  func.func @transform_3(%arg0: i32) -> (i32, i32) {
    %c0_i32 = arith.constant 0 : i32
    %c0_i32_0 = arith.constant 0 : i32
    %c0_i32_1 = arith.constant 0 : i32
    return %c0_i32, %c0_i32_0 : i32, i32
  }
  func.func @transform_4(%arg0: i32) -> (i32, i32) {
    %c0_i32 = arith.constant 0 : i32
    %c0_i32_0 = arith.constant 0 : i32
    return %c0_i32, %arg0 : i32, i32
  }
  func.func @transform_5(%arg0: i32) -> (i32, i32) {
    %c0_i32 = arith.constant 0 : i32
    %c0_i32_0 = arith.constant 0 : i32
    %c0_i32_1 = arith.constant 0 : i32
    return %c0_i32, %c0_i32_0 : i32, i32
  }
  func.func @transform_6(%arg0: i32) -> (i32, i32, i32) {
    %c0_i32 = arith.constant 0 : i32
    %c0_i32_0 = arith.constant 0 : i32
    %c0_i32_1 = arith.constant 0 : i32
    return %c0_i32, %c0_i32_0, %arg0 : i32, i32, i32
  }
  func.func @transform_7(%arg0: i32) -> (i32, i32) {
    %c0_i32 = arith.constant 0 : i32
    %c0_i32_0 = arith.constant 0 : i32
    return %arg0, %c0_i32 : i32, i32
  }
  func.func @transform_8(%arg0: i32) -> (i32, i32) {
    %c0_i32 = arith.constant 0 : i32
    %c0_i32_0 = arith.constant 0 : i32
    %c0_i32_1 = arith.constant 0 : i32
    return %c0_i32, %c0_i32_0 : i32, i32
  }
}

</mosaic_0001>

<llo_original>
// kernel: aux_block_forward.1
$region0: #{aux_block_forward.1}
  #allocation0 [shape = 'u32[]', space=smem, size = 0x4, offset = 0x4, fixed_abs, tag = 'smem constant byte address 0x4 - core index']
  #allocation1 [shape = 'u32[144,128]{1,0:T(1,128)}', space=vmem, size = 0x12000, scoped, tag = 'internal scratch']
  #allocation2 [shape = 'bf16[2,16,128]{2,1,0:T(16,128)(2,1)}', space=vmem, size = 0x2000, scoped, tag = 'scratch operand']
  %s0 = inlined_call_operand.vmem [shape: f32[16,196], index: 0, kind: input, shape index: {}]
  %s1 = inlined_call_operand.vmem [shape: f32[196,16], index: 1, kind: input, shape index: {}]
  %s2 = inlined_call_operand.hbm [shape: f32[8,128], index: 2, kind: input, shape index: {}]
  %s3 = inlined_call_operand.hbm [shape: f32[1,128], index: 3, kind: input, shape index: {}]
  %s4 = inlined_call_operand.hbm [shape: f32[1,1024], index: 4, kind: input, shape index: {}]
  %s5 = inlined_call_operand.hbm [shape: f32[1,128], index: 5, kind: input, shape index: {}]
  %s6 = inlined_call_operand.hbm [shape: bf16[16,128,1024], index: 6, kind: input, shape index: {}]
  %s7 = inlined_call_operand.hbm [shape: bf16[1024,128], index: 7, kind: input, shape index: {}]
  %s8 = inlined_call_operand.hbm [shape: f32[2,128], index: 8, kind: output, shape index: {}]
  %s9 = sld [smem:[#allocation0]]
  $region93: #{aux_block_forward.1} parent=0
    _
  %s11 = ssub.s32 1, %s9
  %s12 = scalar_select 0, %s11, %s9
  $region1: #{aux_block_forward.1} parent=0
    #allocation3 [shape = 'u8[4096]{0}', space=vmem, size = 0x1000, scoped, tag = 'input window, operand 2, single buffered']
    #allocation4 [shape = 's32[2]{0}', space=sflag, size = 0x8, scoped, tag = 'scoped memory for aux_block_forward.1']
    #allocation5 [shape = 's32[2]{0}', space=sflag, size = 0x8, scoped, tag = 'scoped memory for aux_block_forward.1']
    #allocation6 [shape = 'u8[512]{0}', space=vmem, size = 0x400, scoped, tag = 'input window, operand 3, single buffered']
    #allocation7 [shape = 's32[1]{0}', space=sflag, size = 0x4, scoped, tag = 'scoped memory for aux_block_forward.1']
    #allocation8 [shape = 'u8[4096]{0}', space=vmem, size = 0x1000, scoped, tag = 'input window, operand 4']
    #allocation9 [shape = 'u8[512]{0}', space=vmem, size = 0x400, scoped, tag = 'input window, operand 5, single buffered']
    #allocation10 [shape = 'u8[4194304]{0}', space=vmem, size = 0x400000, scoped, tag = 'input window, operand 6']
    #allocation11 [shape = 's32[2]{0}', space=sflag, size = 0x8, scoped, tag = 'scoped memory for aux_block_forward.1']
    #allocation12 [shape = 'u8[262144]{0}', space=vmem, size = 0x40000, scoped, tag = 'input window, operand 7']
    #allocation13 [shape = 'u8[1024]{0}', space=vmem, size = 0x400, scoped, tag = 'output window, operand 0, single buffered']
    %13 = vsyncpa [#allocation4], 0
    %14 = vsyncpa [#allocation7], 0
    %15 = vsyncpa [#allocation11], 0
    %s16 = scalar_lea.sflag [#allocation11], 1
    %17 = vsyncpa %s16, 0
    %18 = vsyncpa [#allocation5], 0
    loop: start=0, step=1, limit=4
    $region2: #{aux_block_forward.1} parent=1 // loop_pre_header
      _
    $region3: #{aux_block_forward.1} parent=1 // loop_header
      %s20 = sphi 0, %s24
      %p21 = scmp.ge.s32.totalorder %s20, 4
      %s28 = sphi 0, %s28
      %s30 = sphi 0, %s28
      %s31 = sphi 0, %s30
      %s45 = sphi 0, %s31
      %s49 = sphi 0, %s49
      %s51 = sphi 0, %s49
      %s52 = sphi 0, %s51
      %s66 = sphi 0, %s52
      %s70 = sphi 0, %s70
      %s72 = sphi 0, %s70
      %s73 = sphi 0, %s72
      %s87 = sphi 0, %s73
      %s91 = sphi 0, %s91
      %s93 = sphi 0, %s91
      %s94 = sphi 0, %s93
      %s108 = sphi 0, %s94
      %s114 = sphi 0, %s116
      %s117 = sphi 0, %s114
      %s118 = sphi 0, %s117
      %s134 = sphi 0, %s118
      %s138 = sphi 0, %s138
      %s140 = sphi 0, %s138
      %s141 = sphi 0, %s140
      %s155 = sphi 0, %s141
      %s161 = sphi 0, %s163
      %s164 = sphi 0, %s161
      %s165 = sphi 0, %s164
      %s181 = sphi 0, %s165
      %s187 = sphi 0, %s189
      %s190 = sphi 0, %s187
      %s191 = sphi 0, %s190
      %s207 = sphi 0, %s191
      %s211 = sphi 0, %s211
      %s213 = sphi 0, %s211
      %s214 = sphi 0, %s213
      %s228 = sphi 0, %s214
    $region4: #{aux_block_forward.1} parent=1 // loop_header_branch
      %23 = sbr.rel (%p21) target = $region8
    $region5: #{aux_block_forward.1} parent=1 // loop_body
      %s25 = ssub.s32 %s20, 1
      %s26 = ssub.s32 %s20, 2
      %s27 = sadd.s32 %s20, 1
      %s29 = sadd.s32 %s28, 1
      %p32 = scmp.eq.s32.totalorder %s20, 1
      %p33 = scmp.ne.s32.totalorder %s28, %s30
      %p34 = scmp.eq.s32.totalorder %s20, 0
      %p35 = por %p33, %p34
      %p36 = scmp.ne.s32.totalorder %s28, %s30
      %p37 = scmp.eq.s32.totalorder %s25, 1
      %p38 = por %p36, %p37
      %p39 = scmp.ne.s32.totalorder %s30, %s31
      %p40 = scmp.eq.s32.totalorder %s25, 0
      %p41 = por %p39, %p40
      %p42 = scmp.ne.s32.totalorder %s30, %s31
      %p43 = scmp.eq.s32.totalorder %s26, 1
      %p44 = por %p42, %p43
      %p46 = scmp.ne.s32.totalorder %s31, %s45
      %p47 = scmp.eq.s32.totalorder %s26, 0
      %p48 = por %p46, %p47
      %s50 = sadd.s32 %s49, 1
      %p53 = scmp.eq.s32.totalorder %s20, 1
      %p54 = scmp.ne.s32.totalorder %s49, %s51
      %p55 = scmp.eq.s32.totalorder %s20, 0
      %p56 = por %p54, %p55
      %p57 = scmp.ne.s32.totalorder %s49, %s51
      %p58 = scmp.eq.s32.totalorder %s25, 1
      %p59 = por %p57, %p58
      %p60 = scmp.ne.s32.totalorder %s51, %s52
      %p61 = scmp.eq.s32.totalorder %s25, 0
      %p62 = por %p60, %p61
      %p63 = scmp.ne.s32.totalorder %s51, %s52
      %p64 = scmp.eq.s32.totalorder %s26, 1
      %p65 = por %p63, %p64
      %p67 = scmp.ne.s32.totalorder %s52, %s66
      %p68 = scmp.eq.s32.totalorder %s26, 0
      %p69 = por %p67, %p68
      %s71 = sadd.s32 %s70, 1
      %p74 = scmp.eq.s32.totalorder %s20, 1
      %p75 = scmp.ne.s32.totalorder %s70, %s72
      %p76 = scmp.eq.s32.totalorder %s20, 0
      %p77 = por %p75, %p76
      %p78 = scmp.ne.s32.totalorder %s70, %s72
      %p79 = scmp.eq.s32.totalorder %s25, 1
      %p80 = por %p78, %p79
      %p81 = scmp.ne.s32.totalorder %s72, %s73
      %p82 = scmp.eq.s32.totalorder %s25, 0
      %p83 = por %p81, %p82
      %p84 = scmp.ne.s32.totalorder %s72, %s73
      %p85 = scmp.eq.s32.totalorder %s26, 1
      %p86 = por %p84, %p85
      %p88 = scmp.ne.s32.totalorder %s73, %s87
      %p89 = scmp.eq.s32.totalorder %s26, 0
      %p90 = por %p88, %p89
      %s92 = sadd.s32 %s91, 1
      %p95 = scmp.eq.s32.totalorder %s20, 1
      %p96 = scmp.ne.s32.totalorder %s91, %s93
      %p97 = scmp.eq.s32.totalorder %s20, 0
      %p98 = por %p96, %p97
      %p99 = scmp.ne.s32.totalorder %s91, %s93
      %p100 = scmp.eq.s32.totalorder %s25, 1
      %p101 = por %p99, %p100
      %p102 = scmp.ne.s32.totalorder %s93, %s94
      %p103 = scmp.eq.s32.totalorder %s25, 0
      %p104 = por %p102, %p103
      %p105 = scmp.ne.s32.totalorder %s93, %s94
      %p106 = scmp.eq.s32.totalorder %s26, 1
      %p107 = por %p105, %p106
      %p109 = scmp.ne.s32.totalorder %s94, %s108
      %p110 = scmp.eq.s32.totalorder %s26, 0
      %p111 = por %p109, %p110
      %s112 = ssub.s32 %s20, %s27
      %p113 = scmp.eq.s32.totalorder %s112, 0
      %s115 = sadd.s32 %s114, 1
      %s116 = scalar_select %p113, %s114, %s115
      %p119 = pneg %p113
      %p120 = scmp.eq.s32.totalorder %s20, 1
      %p121 = por %p119, %p120
      %p122 = scmp.ne.s32.totalorder %s114, %s117
      %p123 = scmp.eq.s32.totalorder %s20, 0
      %p124 = por %p122, %p123
      %p125 = scmp.ne.s32.totalorder %s114, %s117
      %p126 = scmp.eq.s32.totalorder %s25, 1
      %p127 = por %p125, %p126
      %p128 = scmp.ne.s32.totalorder %s117, %s118
      %p129 = scmp.eq.s32.totalorder %s25, 0
      %p130 = por %p128, %p129
      %p131 = scmp.ne.s32.totalorder %s117, %s118
      %p132 = scmp.eq.s32.totalorder %s26, 1
      %p133 = por %p131, %p132
      %p135 = scmp.ne.s32.totalorder %s118, %s134
      %p136 = scmp.eq.s32.totalorder %s26, 0
      %p137 = por %p135, %p136
      %s139 = sadd.s32 %s138, 1
      %p142 = scmp.eq.s32.totalorder %s20, 1
      %p143 = scmp.ne.s32.totalorder %s138, %s140
      %p144 = scmp.eq.s32.totalorder %s20, 0
      %p145 = por %p143, %p144
      %p146 = scmp.ne.s32.totalorder %s138, %s140
      %p147 = scmp.eq.s32.totalorder %s25, 1
      %p148 = por %p146, %p147
      %p149 = scmp.ne.s32.totalorder %s140, %s141
      %p150 = scmp.eq.s32.totalorder %s25, 0
      %p151 = por %p149, %p150
      %p152 = scmp.ne.s32.totalorder %s140, %s141
      %p153 = scmp.eq.s32.totalorder %s26, 1
      %p154 = por %p152, %p153
      %p156 = scmp.ne.s32.totalorder %s141, %s155
      %p157 = scmp.eq.s32.totalorder %s26, 0
      %p158 = por %p156, %p157
      %s159 = ssub.s32 %s20, %s27
      %p160 = scmp.eq.s32.totalorder %s159, 0
      %s162 = sadd.s32 %s161, 1
      %s163 = scalar_select %p160, %s161, %s162
      %p166 = pneg %p160
      %p167 = scmp.eq.s32.totalorder %s20, 1
      %p168 = por %p166, %p167
      %p169 = scmp.ne.s32.totalorder %s161, %s164
      %p170 = scmp.eq.s32.totalorder %s20, 0
      %p171 = por %p169, %p170
      %p172 = scmp.ne.s32.totalorder %s161, %s164
      %p173 = scmp.eq.s32.totalorder %s25, 1
      %p174 = por %p172, %p173
      %p175 = scmp.ne.s32.totalorder %s164, %s165
      %p176 = scmp.eq.s32.totalorder %s25, 0
      %p177 = por %p175, %p176
      %p178 = scmp.ne.s32.totalorder %s164, %s165
      %p179 = scmp.eq.s32.totalorder %s26, 1
      %p180 = por %p178, %p179
      %p182 = scmp.ne.s32.totalorder %s165, %s181
      %p183 = scmp.eq.s32.totalorder %s26, 0
      %p184 = por %p182, %p183
      %s185 = ssub.s32 %s20, %s27
      %p186 = scmp.eq.s32.totalorder %s185, 0
      %s188 = sadd.s32 %s187, 1
      %s189 = scalar_select %p186, %s187, %s188
      %p192 = pneg %p186
      %p193 = scmp.eq.s32.totalorder %s20, 1
      %p194 = por %p192, %p193
      %p195 = scmp.ne.s32.totalorder %s187, %s190
      %p196 = scmp.eq.s32.totalorder %s20, 0
      %p197 = por %p195, %p196
      %p198 = scmp.ne.s32.totalorder %s187, %s190
      %p199 = scmp.eq.s32.totalorder %s25, 1
      %p200 = por %p198, %p199
      %p201 = scmp.ne.s32.totalorder %s190, %s191
      %p202 = scmp.eq.s32.totalorder %s25, 0
      %p203 = por %p201, %p202
      %p204 = scmp.ne.s32.totalorder %s190, %s191
      %p205 = scmp.eq.s32.totalorder %s26, 1
      %p206 = por %p204, %p205
      %p208 = scmp.ne.s32.totalorder %s191, %s207
      %p209 = scmp.eq.s32.totalorder %s26, 0
      %p210 = por %p208, %p209
      %s212 = sadd.s32 %s211, 1
      %p215 = scmp.eq.s32.totalorder %s20, 1
      %p216 = scmp.ne.s32.totalorder %s211, %s213
      %p217 = scmp.eq.s32.totalorder %s20, 0
      %p218 = por %p216, %p217
      %p219 = scmp.ne.s32.totalorder %s211, %s213
      %p220 = scmp.eq.s32.totalorder %s25, 1
      %p221 = por %p219, %p220
      %p222 = scmp.ne.s32.totalorder %s213, %s214
      %p223 = scmp.eq.s32.totalorder %s25, 0
      %p224 = por %p222, %p223
      %p225 = scmp.ne.s32.totalorder %s213, %s214
      %p226 = scmp.eq.s32.totalorder %s26, 1
      %p227 = por %p225, %p226
      %p229 = scmp.ne.s32.totalorder %s214, %s228
      %p230 = scmp.eq.s32.totalorder %s26, 0
      %p231 = por %p229, %p230
      %p232 = scmp.le.s32.totalorder 1, %s20
      %p233 = scmp.lt.s32.totalorder %s20, 3
      %p234 = pnand %p232, %p233
      %p235 = pneg %p234
      // Predicated region
      $region9: #{aux_block_forward.1} parent=5 // pred_check
        _
      $region10: #{aux_block_forward.1} parent=5 // pred_check_branch
        %237 = sbr.rel (%p234) target = $region12
      $region11: #{aux_block_forward.1} parent=5 // pred_region
        %s238 = ssub.s32 %s20, 1
        // Predicated region
        $region13: #{aux_block_forward.1} parent=11 // pred_check
          %p239 = pneg %p41
        $region14: #{aux_block_forward.1} parent=11 // pred_check_branch
          %241 = sbr.rel (%p239) target = $region16
        $region15: #{aux_block_forward.1} parent=11 // pred_region
          _
        $region16: #{aux_block_forward.1} parent=11 // pred_fallthru
          _
        // Predicated region
        $region17: #{aux_block_forward.1} parent=11 // pred_check
          %p242 = pneg %p62
        $region18: #{aux_block_forward.1} parent=11 // pred_check_branch
          %244 = sbr.rel (%p242) target = $region20
        $region19: #{aux_block_forward.1} parent=11 // pred_region
          _
        $region20: #{aux_block_forward.1} parent=11 // pred_fallthru
          _
        // Predicated region
        $region21: #{aux_block_forward.1} parent=11 // pred_check
          %p245 = pneg %p83
        $region22: #{aux_block_forward.1} parent=11 // pred_check_branch
          %247 = sbr.rel (%p245) target = $region24
        $region23: #{aux_block_forward.1} parent=11 // pred_region
          %s249 = ssub.s32 128, 128
          %250 = vsyncadd [#allocation4], %s249
          %s252 = sshll.u32 [#allocation3], 4
          %s253 = int_to_ptr.vmem [resolvable:$true] %s252
          %255 = dma.hbm_to_vmem [thread:$0]  %s2, 128, %s253, [#allocation4]
        $region24: #{aux_block_forward.1} parent=11 // pred_fallthru
          _
        // Predicated region
        $region25: #{aux_block_forward.1} parent=11 // pred_check
          %p256 = pneg %p104
        $region26: #{aux_block_forward.1} parent=11 // pred_check_branch
          %258 = sbr.rel (%p256) target = $region28
        $region27: #{aux_block_forward.1} parent=11 // pred_region
          %s260 = ssub.s32 16, 16
          %261 = vsyncadd [#allocation7], %s260
          %s263 = sshll.u32 [#allocation6], 4
          %s264 = int_to_ptr.vmem [resolvable:$true] %s263
          %266 = dma.hbm_to_vmem [thread:$0]  %s3, 16, %s264, [#allocation7]
        $region28: #{aux_block_forward.1} parent=11 // pred_fallthru
          _
        // Predicated region
        $region29: #{aux_block_forward.1} parent=11 // pred_check
          %p267 = pneg %p151
        $region30: #{aux_block_forward.1} parent=11 // pred_check_branch
          %269 = sbr.rel (%p267) target = $region32
        $region31: #{aux_block_forward.1} parent=11 // pred_region
          %s271 = ssub.s32 16, 16
          %272 = vsyncadd [#allocation7], %s271
          %s274 = sshll.u32 [#allocation9], 4
          %s275 = int_to_ptr.vmem [resolvable:$true] %s274
          %277 = dma.hbm_to_vmem [thread:$0]  %s5, 16, %s275, [#allocation7]
        $region32: #{aux_block_forward.1} parent=11 // pred_fallthru
          _
      $region12: #{aux_block_forward.1} parent=5 // pred_fallthru
        _
      %p278 = scmp.lt.s32.totalorder %s20, 2
      // Predicated region
      $region33: #{aux_block_forward.1} parent=5 // pred_check
        %p279 = pneg %p278
      $region34: #{aux_block_forward.1} parent=5 // pred_check_branch
        %281 = sbr.rel (%p279) target = $region36
      $region35: #{aux_block_forward.1} parent=5 // pred_region
        // Predicated region
        $region37: #{aux_block_forward.1} parent=35 // pred_check
          %p282 = pneg %p124
        $region38: #{aux_block_forward.1} parent=35 // pred_check_branch
          %284 = sbr.rel (%p282) target = $region40
        $region39: #{aux_block_forward.1} parent=35 // pred_region
          %s285 = sand.u32 %s20, 1
          %s286 = scalar_lea.sflag [#allocation4], %s285
          %s287 = sand.u32 %s114, 1
          %s288 = smul.addr %s287, 4
          %s289 = scalar_lea.vmem [#allocation8], %s288
          %s290 = smul.u32 4, %s20
          %s292 = ssub.s32 64, 64
          %293 = vsyncadd %s286, %s292
          %s294 = smul.addr %s290, 16
          %s295 = scalar_lea.hbm %s4, %s294
          %s297 = sshll.u32 %s289, 4
          %s298 = int_to_ptr.vmem [resolvable:$true] %s297
          %300 = dma.hbm_to_vmem [thread:$0]  %s295, 64, %s298, %s286
        $region40: #{aux_block_forward.1} parent=35 // pred_fallthru
          _
        // Predicated region
        $region41: #{aux_block_forward.1} parent=35 // pred_check
          %p301 = pneg %p171
        $region42: #{aux_block_forward.1} parent=35 // pred_check_branch
          %303 = sbr.rel (%p301) target = $region44
        $region43: #{aux_block_forward.1} parent=35 // pred_region
          %s304 = sand.u32 %s20, 1
          %s305 = scalar_lea.sflag [#allocation11], %s304
          %s306 = sand.u32 %s161, 1
          %s307 = smul.addr %s306, 4096
          %s308 = scalar_lea.vmem [#allocation10], %s307
          %s309 = smul.u32 4, %s20
          %s311 = ssub.s32 65536, 65536
          %312 = vsyncadd %s305, %s311
          %s313 = smul.addr %s309, 64
          %s314 = scalar_lea.hbm %s6, %s313
          %s315 = sshll.u32 %s308, 4
          %s316 = int_to_ptr.vmem [resolvable:$true] %s315
          %321 = dma.hbm_to_vmem [thread:$0]  %s314, 65536, %s316, %s305, 512, 256, 16
        $region44: #{aux_block_forward.1} parent=35 // pred_fallthru
          _
        // Predicated region
        $region45: #{aux_block_forward.1} parent=35 // pred_check
          %p322 = pneg %p197
        $region46: #{aux_block_forward.1} parent=35 // pred_check_branch
          %324 = sbr.rel (%p322) target = $region48
        $region47: #{aux_block_forward.1} parent=35 // pred_region
          %s325 = sand.u32 %s20, 1
          %s326 = scalar_lea.sflag [#allocation11], %s325
          %s327 = sand.u32 %s187, 1
          %s328 = smul.addr %s327, 256
          %s329 = scalar_lea.vmem [#allocation12], %s328
          %s330 = smul.u32 64, %s20
          %s332 = ssub.s32 4096, 4096
          %333 = vsyncadd %s326, %s332
          %s334 = smul.addr %s330, 64
          %s335 = scalar_lea.hbm %s7, %s334
          %s336 = sshll.u32 %s329, 4
          %s337 = int_to_ptr.vmem [resolvable:$true] %s336
          %342 = dma.hbm_to_vmem [thread:$0]  %s335, 4096, %s337, %s326, 64, 64, 4
        $region48: #{aux_block_forward.1} parent=35 // pred_fallthru
          _
      $region36: #{aux_block_forward.1} parent=5 // pred_fallthru
        _
      %p343 = scmp.le.s32.totalorder 1, %s20
      %p344 = scmp.lt.s32.totalorder %s20, 3
      %p345 = pnand %p343, %p344
      %p346 = pneg %p345
      // Predicated region
      $region49: #{aux_block_forward.1} parent=5 // pred_check
        _
      $region50: #{aux_block_forward.1} parent=5 // pred_check_branch
        %348 = sbr.rel (%p345) target = $region52
      $region51: #{aux_block_forward.1} parent=5 // pred_region
        %s349 = ssub.s32 %s20, 1
        // Predicated region
        $region53: #{aux_block_forward.1} parent=51 // pred_check
          %p350 = pneg %p83
        $region54: #{aux_block_forward.1} parent=51 // pred_check_branch
          %352 = sbr.rel (%p350) target = $region56
        $region55: #{aux_block_forward.1} parent=51 // pred_region
          %353 = dma.done [#allocation4], 128
        $region56: #{aux_block_forward.1} parent=51 // pred_fallthru
          _
        // Predicated region
        $region57: #{aux_block_forward.1} parent=51 // pred_check
          %p354 = pneg %p104
        $region58: #{aux_block_forward.1} parent=51 // pred_check_branch
          %356 = sbr.rel (%p354) target = $region60
        $region59: #{aux_block_forward.1} parent=51 // pred_region
          %357 = dma.done [#allocation7], 16
        $region60: #{aux_block_forward.1} parent=51 // pred_fallthru
          _
        %s358 = sand.u32 %s25, 1
        %s359 = scalar_lea.sflag [#allocation4], %s358
        %s360 = sand.u32 %s117, 1
        %s361 = smul.addr %s360, 4
        %s362 = scalar_lea.vmem [#allocation8], %s361
        // Predicated region
        $region61: #{aux_block_forward.1} parent=51 // pred_check
          %p363 = pneg %p130
        $region62: #{aux_block_forward.1} parent=51 // pred_check_branch
          %365 = sbr.rel (%p363) target = $region64
        $region63: #{aux_block_forward.1} parent=51 // pred_region
          %366 = dma.done %s359, 64
        $region64: #{aux_block_forward.1} parent=51 // pred_fallthru
          _
        // Predicated region
        $region65: #{aux_block_forward.1} parent=51 // pred_check
          %p367 = pneg %p151
        $region66: #{aux_block_forward.1} parent=51 // pred_check_branch
          %369 = sbr.rel (%p367) target = $region68
        $region67: #{aux_block_forward.1} parent=51 // pred_region
          %370 = dma.done [#allocation7], 16
        $region68: #{aux_block_forward.1} parent=51 // pred_fallthru
          _
        %s371 = sand.u32 %s25, 1
        %s372 = scalar_lea.sflag [#allocation11], %s371
        %s373 = sand.u32 %s164, 1
        %s374 = smul.addr %s373, 4096
        %s375 = scalar_lea.vmem [#allocation10], %s374
        // Predicated region
        $region69: #{aux_block_forward.1} parent=51 // pred_check
          %p376 = pneg %p177
        $region70: #{aux_block_forward.1} parent=51 // pred_check_branch
          %378 = sbr.rel (%p376) target = $region72
        $region71: #{aux_block_forward.1} parent=51 // pred_region
          %379 = dma.done %s372, 65536
        $region72: #{aux_block_forward.1} parent=51 // pred_fallthru
          _
        %s380 = sand.u32 %s25, 1
        %s381 = scalar_lea.sflag [#allocation11], %s380
        %s382 = sand.u32 %s190, 1
        %s383 = smul.addr %s382, 256
        %s384 = scalar_lea.vmem [#allocation12], %s383
        // Predicated region
        $region73: #{aux_block_forward.1} parent=51 // pred_check
          %p385 = pneg %p203
        $region74: #{aux_block_forward.1} parent=51 // pred_check_branch
          %387 = sbr.rel (%p385) target = $region76
        $region75: #{aux_block_forward.1} parent=51 // pred_region
          %388 = dma.done %s381, 4096
        $region76: #{aux_block_forward.1} parent=51 // pred_fallthru
          _
        %p389 = pneg %p41
        %p390 = pneg %p38
        %p391 = pneg %p62
        %p392 = pneg %p59
        %p393 = pneg %p83
        %p394 = pneg %p80
        %p395 = pneg %p104
        %p396 = pneg %p101
        %s397 = sand.u32 %s25, 1
        %s398 = scalar_lea.sflag [#allocation4], %s397
        %s399 = sand.u32 %s117, 1
        %s400 = smul.addr %s399, 4
        %s401 = scalar_lea.vmem [#allocation8], %s400
        %p402 = pneg %p130
        %p403 = pneg %p127
        %p404 = pneg %p151
        %p405 = pneg %p148
        %s406 = sand.u32 %s25, 1
        %s407 = scalar_lea.sflag [#allocation11], %s406
        %s408 = sand.u32 %s164, 1
        %s409 = smul.addr %s408, 4096
        %s410 = scalar_lea.vmem [#allocation10], %s409
        %p411 = pneg %p177
        %p412 = pneg %p174
        %s413 = sand.u32 %s25, 1
        %s414 = scalar_lea.sflag [#allocation11], %s413
        %s415 = sand.u32 %s190, 1
        %s416 = smul.addr %s415, 256
        %s417 = scalar_lea.vmem [#allocation12], %s416
        %p418 = pneg %p203
        %p419 = pneg %p200
        %p420 = pneg %p224
        %p421 = pneg %p221
        %s422 = smul.u32 4, %s25
        %s423 = smul.u32 4, %s25
        %s424 = smul.u32 64, %s25
        %p426 = scmp.eq.s32.totalorder %s25, 0
        // Predicated region
        $region77: #{aux_block_forward.1} parent=51 // pred_check
          %p427 = pneg %p426
        $region78: #{aux_block_forward.1} parent=51 // pred_check_branch
          %429 = sbr.rel (%p427) target = $region80
        $region79: #{aux_block_forward.1} parent=51 // pred_region
          %v430 = vld [vmem:[%s0] sm:$0xff]
          %v431 = vld [vmem:[%s0 + $0x8] sm:$0xff]
          %v432 = vld [vmem:[%s0 + $0x10] sm:$0xff]
          %v433 = vld [vmem:[%s0 + $0x18] sm:$0xff]
          %v434 = vld [vmem:[%s1] sm:$0xff]
          %v435 = vld [vmem:[%s1 + $0x8] sm:$0xff]
          %v436 = vld [vmem:[%s1 + $0x10] sm:$0xff]
          %v437 = vld [vmem:[%s1 + $0x18] sm:$0xff]
          %v438 = vld [vmem:[%s1 + $0x20] sm:$0xff]
          %v439 = vld [vmem:[%s1 + $0x28] sm:$0xff]
          %v440 = vld [vmem:[%s1 + $0x30] sm:$0xff]
          %v441 = vld [vmem:[%s1 + $0x38] sm:$0xff]
          %v442 = vld [vmem:[%s1 + $0x40] sm:$0xff]
          %v443 = vld [vmem:[%s1 + $0x48] sm:$0xff]
          %v444 = vld [vmem:[%s1 + $0x50] sm:$0xff]
          %v445 = vld [vmem:[%s1 + $0x58] sm:$0xff]
          %v446 = vld [vmem:[%s1 + $0x60] sm:$0xff]
          %v447 = vld [vmem:[%s1 + $0x68] sm:$0xff]
          %v448 = vld [vmem:[%s1 + $0x70] sm:$0xff]
          %v449 = vld [vmem:[%s1 + $0x78] sm:$0xff]
          %v450 = vld [vmem:[%s1 + $0x80] sm:$0xff]
          %v451 = vld [vmem:[%s1 + $0x88] sm:$0xff]
          %v452 = vld [vmem:[%s1 + $0x90] sm:$0xff]
          %v453 = vld [vmem:[%s1 + $0x98] sm:$0xff]
          %v454 = vld [vmem:[%s1 + $0xa0] sm:$0xff]
          %v455 = vld [vmem:[%s1 + $0xa8] sm:$0xff]
          %v456 = vld [vmem:[%s1 + $0xb0] sm:$0xff]
          %v457 = vld [vmem:[%s1 + $0xb8] sm:$0xff]
          %v458 = vld [vmem:[%s1 + $0xc0] sm:$0xf]
          %vm459 = vcmask 556032
          %v461 = vsel %vm459, %v431, 0
          %v464 = vsel %vm459, %v433, 0
          %vm466 = vcmask 1043456
          %v468 = vsel %vm466, %v458, 0
          %470 = vmatprep.subr.mxu0 0.0
          %471 = vmatpush1.msra.mxu0 %v434
          %472 = vmatprep.subr.mxu0 0.0
          %473 = vmatpush1.msra.mxu0 %v435
          %474 = vmatprep.subr.mxu0 0.0
          %475 = vmatpush1.msra.mxu0 %v436
          %476 = vmatprep.subr.mxu0 0.0
          %477 = vmatpush1.msra.mxu0 %v437
          %478 = vmatprep.subr.mxu0 0.0
          %479 = vmatpush1.msra.mxu0 %v438
          %480 = vmatprep.subr.mxu0 0.0
          %481 = vmatpush1.msra.mxu0 %v439
          %482 = vmatprep.subr.mxu0 0.0
          %483 = vmatpush1.msra.mxu0 %v440
          %484 = vmatprep.subr.mxu0 0.0
          %485 = vmatpush1.msra.mxu0 %v441
          %486 = vmatprep.subr.mxu0 0.0
          %487 = vmatpush1.msra.mxu0 %v442
          %488 = vmatprep.subr.mxu0 0.0
          %489 = vmatpush1.msra.mxu0 %v443
          %490 = vmatprep.subr.mxu0 0.0
          %491 = vmatpush1.msra.mxu0 %v444
          %492 = vmatprep.subr.mxu0 0.0
          %493 = vmatpush1.msra.mxu0 %v445
          %494 = vmatprep.subr.mxu0 0.0
          %495 = vmatpush1.msra.mxu0 %v446
          %496 = vmatprep.subr.mxu0 0.0
          %497 = vmatpush1.msra.mxu0 %v447
          %498 = vmatprep.subr.mxu0 0.0
          %499 = vmatpush1.msra.mxu0 %v448
          %500 = vmatprep.subr.mxu0 0.0
          %501 = vmatpush1.msra.mxu0 %v449
          %502 = vmatprep.subr.mxu0 0.0
          %503 = vmatpush1.msra.mxu0 %v450
          %504 = vmatprep.subr.mxu0 0.0
          %505 = vmatpush1.msra.mxu0 %v451
          %506 = vmatprep.subr.mxu0 0.0
          %507 = vmatpush1.msra.mxu0 %v452
          %508 = vmatprep.subr.mxu0 0.0
          %509 = vmatpush1.msra.mxu0 %v453
          %510 = vmatprep.subr.mxu0 0.0
          %511 = vmatpush1.msra.mxu0 %v454
          %512 = vmatprep.subr.mxu0 0.0
          %513 = vmatpush1.msra.mxu0 %v455
          %514 = vmatprep.subr.mxu0 0.0
          %515 = vmatpush1.msra.mxu0 %v456
          %516 = vmatprep.subr.mxu0 0.0
          %517 = vmatpush1.msra.mxu0 %v457
          %518 = vmatprep.subr.mxu0 0.0
          %519 = vmatpush1.msra.mxu0 %v468
          %520 = vmatprep.subr.mxu0 0.0
          %521 = vmatpush1.msra.mxu0 0.0
          %522 = vmatprep.subr.mxu0 0.0
          %523 = vmatpush1.msra.mxu0 0.0
          %524 = vmatprep.subr.mxu0 0.0
          %525 = vmatpush1.msra.mxu0 0.0
          %526 = vmatprep.subr.mxu0 0.0
          %527 = vmatpush1.msra.mxu0 0.0
          %528 = vmatprep.subr.mxu0 0.0
          %529 = vmatpush1.msra.mxu0 0.0
          %530 = vmatprep.subr.mxu0 0.0
          %531 = vmatpush1.msra.mxu0 0.0
          %532 = vmatprep.subr.mxu0 0.0
          %533 = vmatpush1.msra.mxu0 0.0
          %534 = vmatprep.mubr.f32.mxu0 %v461
          %535 = vmatmul.mubr.f32.gmra.mrb[0].mxu0 %v430
          %v536 = vpop.f32.mrb[0].mxu0
          %v537 = vadd.f32 0.0, %v536
          %v538 = vpop.f32.mrb[0].mxu0
          %539 = vmatprep.mubr.f32.mxu0 %v464
          %540 = vmatmul.mubr.f32.gmra.mrb[0].mxu0 %v432
          %v541 = vpop.f32.mrb[0].mxu0
          %v542 = vadd.f32 0.0, %v541
          %v543 = vpop.f32.mrb[0].mxu0
          %544 = vdwg.mxu0
          %v545 = vld [vmem:[#allocation3] sm:$0xff]
          %v546 = vld [vmem:[#allocation6] sm:$0x1]
          %547 = vxpose.xlu0.b32.start [1/16] %v537, 128
          %548 = vxpose.xlu0.b32.cont [2/16] 0.0, 128
          %549 = vxpose.xlu0.b32.cont [3/16] 0.0, 128
          %550 = vxpose.xlu0.b32.cont [4/16] 0.0, 128
          %551 = vxpose.xlu0.b32.cont [5/16] 0.0, 128
          %552 = vxpose.xlu0.b32.cont [6/16] 0.0, 128
          %553 = vxpose.xlu0.b32.cont [7/16] 0.0, 128
          %554 = vxpose.xlu0.b32.cont [8/16] 0.0, 128
          %555 = vxpose.xlu0.b32.cont [9/16] 0.0, 128
          %556 = vxpose.xlu0.b32.cont [10/16] 0.0, 128
          %557 = vxpose.xlu0.b32.cont [11/16] 0.0, 128
          %558 = vxpose.xlu0.b32.cont [12/16] 0.0, 128
          %559 = vxpose.xlu0.b32.cont [13/16] 0.0, 128
          %560 = vxpose.xlu0.b32.cont [14/16] 0.0, 128
          %561 = vxpose.xlu0.b32.cont [15/16] 0.0, 128
          %562 = vxpose.xlu0.b32.end [16/16] 0.0, 128
          %v563 = vpop.trf.xlu0
          %v564 = vpop.trf.xlu0
          %v565 = vpop.trf.xlu0
          %v566 = vpop.trf.xlu0
          %v567 = vpop.trf.xlu0
          %v568 = vpop.trf.xlu0
          %v569 = vpop.trf.xlu0
          %v570 = vpop.trf.xlu0
          %v571 = vpop.trf.xlu0
          %v572 = vpop.trf.xlu0
          %v573 = vpop.trf.xlu0
          %v574 = vpop.trf.xlu0
          %v575 = vpop.trf.xlu0
          %v576 = vpop.trf.xlu0
          %v577 = vpop.trf.xlu0
          %v578 = vpop.trf.xlu0
          %v580 = vlaneseq
          %v581 = vshrl.u32 %v580, 7
          %v582 = vsub.s32 0, %v581
          %v583 = vrot.slane %v546, %v582
          %vm585 = vcmask 64512
          %v587 = vsel %vm585, %v563, 0
          %v590 = vsel %vm585, %v564, 0
          %592 = vmatprep.subr.mxu0 0.0
          %593 = vmatpush1.msra.mxu0 %v545
          %594 = vmatprep.subr.mxu0 0.0
          %595 = vmatpush1.msra.mxu0 0.0
          %596 = vmatprep.subr.mxu0 0.0
          %597 = vmatpush1.msra.mxu0 0.0
          %598 = vmatprep.subr.mxu0 0.0
          %599 = vmatpush1.msra.mxu0 0.0
          %600 = vmatprep.subr.mxu0 0.0
          %601 = vmatpush1.msra.mxu0 0.0
          %602 = vmatprep.subr.mxu0 0.0
          %603 = vmatpush1.msra.mxu0 0.0
          %604 = vmatprep.subr.mxu0 0.0
          %605 = vmatpush1.msra.mxu0 0.0
          %606 = vmatprep.subr.mxu0 0.0
          %607 = vmatpush1.msra.mxu0 0.0
          %608 = vmatprep.subr.mxu0 0.0
          %609 = vmatpush1.msra.mxu0 0.0
          %610 = vmatprep.subr.mxu0 0.0
          %611 = vmatpush1.msra.mxu0 0.0
          %612 = vmatprep.subr.mxu0 0.0
          %613 = vmatpush1.msra.mxu0 0.0
          %614 = vmatprep.subr.mxu0 0.0
          %615 = vmatpush1.msra.mxu0 0.0
          %616 = vmatprep.subr.mxu0 0.0
          %617 = vmatpush1.msra.mxu0 0.0
          %618 = vmatprep.subr.mxu0 0.0
          %619 = vmatpush1.msra.mxu0 0.0
          %620 = vmatprep.subr.mxu0 0.0
          %621 = vmatpush1.msra.mxu0 0.0
          %622 = vmatprep.subr.mxu0 0.0
          %623 = vmatpush1.msra.mxu0 0.0
          %624 = vmatprep.subr.mxu0 0.0
          %625 = vmatpush1.msra.mxu0 0.0
          %626 = vmatprep.subr.mxu0 0.0
          %627 = vmatpush1.msra.mxu0 0.0
          %628 = vmatprep.subr.mxu0 0.0
          %629 = vmatpush1.msra.mxu0 0.0
          %630 = vmatprep.subr.mxu0 0.0
          %631 = vmatpush1.msra.mxu0 0.0
          %632 = vmatprep.subr.mxu0 0.0
          %633 = vmatpush1.msra.mxu0 0.0
          %634 = vmatprep.subr.mxu0 0.0
          %635 = vmatpush1.msra.mxu0 0.0
          %636 = vmatprep.subr.mxu0 0.0
          %637 = vmatpush1.msra.mxu0 0.0
          %638 = vmatprep.subr.mxu0 0.0
          %639 = vmatpush1.msra.mxu0 0.0
          %640 = vmatprep.subr.mxu0 0.0
          %641 = vmatpush1.msra.mxu0 0.0
          %642 = vmatprep.subr.mxu0 0.0
          %643 = vmatpush1.msra.mxu0 0.0
          %644 = vmatprep.subr.mxu0 0.0
          %645 = vmatpush1.msra.mxu0 0.0
          %646 = vmatprep.subr.mxu0 0.0
          %647 = vmatpush1.msra.mxu0 0.0
          %648 = vmatprep.subr.mxu0 0.0
          %649 = vmatpush1.msra.mxu0 0.0
          %650 = vmatprep.subr.mxu0 0.0
          %651 = vmatpush1.msra.mxu0 0.0
          %652 = vmatprep.subr.mxu0 0.0
          %653 = vmatpush1.msra.mxu0 0.0
          %654 = vmatprep.subr.mxu0 0.0
          %655 = vmatpush1.msra.mxu0 0.0
          %656 = vmatprep.mubr.f32.mxu0 0.0
          %657 = vmatmul.mubr.f32.gmra.mrb[0].mxu0 %v587
          %v658 = vpop.f32.mrb[0].mxu0
          %v659 = vadd.f32 %v583, %v658
          %v660 = vpop.f32.mrb[0].mxu0
          %661 = vmatprep.mubr.f32.mxu0 0.0
          %662 = vmatmul.mubr.f32.gmra.mrb[0].mxu0 %v590
          %v663 = vpop.f32.mrb[0].mxu0
          %v664 = vadd.f32 %v583, %v663
          %v665 = vpop.f32.mrb[0].mxu0
          %666 = vdwg.mxu0
          %v667 = vmax.f32 %v659, 0.0
          %v668 = vmax.f32 %v664, 0.0
          %v669 = vpack.c.bf16 %v668, %v667
          %670 = vst [vmem:[#allocation2] sm:$0xff] %v669
          %671 = vxpose.xlu0.b32.start [1/16] %v542, 128
          %672 = vxpose.xlu0.b32.cont [2/16] 0.0, 128
          %673 = vxpose.xlu0.b32.cont [3/16] 0.0, 128
          %674 = vxpose.xlu0.b32.cont [4/16] 0.0, 128
          %675 = vxpose.xlu0.b32.cont [5/16] 0.0, 128
          %676 = vxpose.xlu0.b32.cont [6/16] 0.0, 128
          %677 = vxpose.xlu0.b32.cont [7/16] 0.0, 128
          %678 = vxpose.xlu0.b32.cont [8/16] 0.0, 128
          %679 = vxpose.xlu0.b32.cont [9/16] 0.0, 128
          %680 = vxpose.xlu0.b32.cont [10/16] 0.0, 128
          %681 = vxpose.xlu0.b32.cont [11/16] 0.0, 128
          %682 = vxpose.xlu0.b32.cont [12/16] 0.0, 128
          %683 = vxpose.xlu0.b32.cont [13/16] 0.0, 128
          %684 = vxpose.xlu0.b32.cont [14/16] 0.0, 128
          %685 = vxpose.xlu0.b32.cont [15/16] 0.0, 128
          %686 = vxpose.xlu0.b32.end [16/16] 0.0, 128
          %v687 = vpop.trf.xlu0
          %v688 = vpop.trf.xlu0
          %v689 = vpop.trf.xlu0
          %v690 = vpop.trf.xlu0
          %v691 = vpop.trf.xlu0
          %v692 = vpop.trf.xlu0
          %v693 = vpop.trf.xlu0
          %v694 = vpop.trf.xlu0
          %v695 = vpop.trf.xlu0
          %v696 = vpop.trf.xlu0
          %v697 = vpop.trf.xlu0
          %v698 = vpop.trf.xlu0
          %v699 = vpop.trf.xlu0
          %v700 = vpop.trf.xlu0
          %v701 = vpop.trf.xlu0
          %v702 = vpop.trf.xlu0
          %v704 = vsel %vm585, %v687, 0
          %v707 = vsel %vm585, %v688, 0
          %709 = vmatprep.subr.mxu0 0.0
          %710 = vmatpush1.msra.mxu0 %v545
          %711 = vmatprep.subr.mxu0 0.0
          %712 = vmatpush1.msra.mxu0 0.0
          %713 = vmatprep.subr.mxu0 0.0
          %714 = vmatpush1.msra.mxu0 0.0
          %715 = vmatprep.subr.mxu0 0.0
          %716 = vmatpush1.msra.mxu0 0.0
          %717 = vmatprep.subr.mxu0 0.0
          %718 = vmatpush1.msra.mxu0 0.0
          %719 = vmatprep.subr.mxu0 0.0
          %720 = vmatpush1.msra.mxu0 0.0
          %721 = vmatprep.subr.mxu0 0.0
          %722 = vmatpush1.msra.mxu0 0.0
          %723 = vmatprep.subr.mxu0 0.0
          %724 = vmatpush1.msra.mxu0 0.0
          %725 = vmatprep.subr.mxu0 0.0
          %726 = vmatpush1.msra.mxu0 0.0
          %727 = vmatprep.subr.mxu0 0.0
          %728 = vmatpush1.msra.mxu0 0.0
          %729 = vmatprep.subr.mxu0 0.0
          %730 = vmatpush1.msra.mxu0 0.0
          %731 = vmatprep.subr.mxu0 0.0
          %732 = vmatpush1.msra.mxu0 0.0
          %733 = vmatprep.subr.mxu0 0.0
          %734 = vmatpush1.msra.mxu0 0.0
          %735 = vmatprep.subr.mxu0 0.0
          %736 = vmatpush1.msra.mxu0 0.0
          %737 = vmatprep.subr.mxu0 0.0
          %738 = vmatpush1.msra.mxu0 0.0
          %739 = vmatprep.subr.mxu0 0.0
          %740 = vmatpush1.msra.mxu0 0.0
          %741 = vmatprep.subr.mxu0 0.0
          %742 = vmatpush1.msra.mxu0 0.0
          %743 = vmatprep.subr.mxu0 0.0
          %744 = vmatpush1.msra.mxu0 0.0
          %745 = vmatprep.subr.mxu0 0.0
          %746 = vmatpush1.msra.mxu0 0.0
          %747 = vmatprep.subr.mxu0 0.0
          %748 = vmatpush1.msra.mxu0 0.0
          %749 = vmatprep.subr.mxu0 0.0
          %750 = vmatpush1.msra.mxu0 0.0
          %751 = vmatprep.subr.mxu0 0.0
          %752 = vmatpush1.msra.mxu0 0.0
          %753 = vmatprep.subr.mxu0 0.0
          %754 = vmatpush1.msra.mxu0 0.0
          %755 = vmatprep.subr.mxu0 0.0
          %756 = vmatpush1.msra.mxu0 0.0
          %757 = vmatprep.subr.mxu0 0.0
          %758 = vmatpush1.msra.mxu0 0.0
          %759 = vmatprep.subr.mxu0 0.0
          %760 = vmatpush1.msra.mxu0 0.0
          %761 = vmatprep.subr.mxu0 0.0
          %762 = vmatpush1.msra.mxu0 0.0
          %763 = vmatprep.subr.mxu0 0.0
          %764 = vmatpush1.msra.mxu0 0.0
          %765 = vmatprep.subr.mxu0 0.0
          %766 = vmatpush1.msra.mxu0 0.0
          %767 = vmatprep.subr.mxu0 0.0
          %768 = vmatpush1.msra.mxu0 0.0
          %769 = vmatprep.subr.mxu0 0.0
          %770 = vmatpush1.msra.mxu0 0.0
          %771 = vmatprep.subr.mxu0 0.0
          %772 = vmatpush1.msra.mxu0 0.0
          %773 = vmatprep.mubr.f32.mxu0 0.0
          %774 = vmatmul.mubr.f32.gmra.mrb[0].mxu0 %v704
          %v775 = vpop.f32.mrb[0].mxu0
          %v776 = vadd.f32 %v583, %v775
          %v777 = vpop.f32.mrb[0].mxu0
          %778 = vmatprep.mubr.f32.mxu0 0.0
          %779 = vmatmul.mubr.f32.gmra.mrb[0].mxu0 %v707
          %v780 = vpop.f32.mrb[0].mxu0
          %v781 = vadd.f32 %v583, %v780
          %v782 = vpop.f32.mrb[0].mxu0
          %783 = vdwg.mxu0
          %v784 = vmax.f32 %v776, 0.0
          %v785 = vmax.f32 %v781, 0.0
          %v786 = vpack.c.bf16 %v785, %v784
          %s787 = scalar_lea.vmem [#allocation2], 8
          %788 = vst [vmem:[%s787] sm:$0xff] %v786
          %v789 = vld [vmem:[#allocation9] sm:$0x1]
          %v791 = vlaneseq
          %v792 = vshrl.u32 %v791, 7
          %v793 = vsub.s32 0, %v792
          %v794 = vrot.slane %v789, %v793
          %796 = vst [vmem:[#allocation13] sm:$0x3] %v794
        $region80: #{aux_block_forward.1} parent=51 // pred_fallthru
          _
        %v797 = vld [vmem:[#allocation2] sm:$0xff]
        %v798 = vld [vmem:[#allocation2 + $0x8] sm:$0xff]
        %v799 = vld [vmem:[%s375] sm:$0xff]
        %v800 = vld [vmem:[%s375 + $0x8] sm:$0xff]
        %v801 = vld [vmem:[%s375 + $0x10] sm:$0xff]
        %v802 = vld [vmem:[%s375 + $0x18] sm:$0xff]
        %v803 = vld [vmem:[%s375 + $0x20] sm:$0xff]
        %v804 = vld [vmem:[%s375 + $0x28] sm:$0xff]
        %v805 = vld [vmem:[%s375 + $0x30] sm:$0xff]
        %v806 = vld [vmem:[%s375 + $0x38] sm:$0xff]
        %v807 = vld [vmem:[%s375 + $0x40] sm:$0xff]
        %v808 = vld [vmem:[%s375 + $0x48] sm:$0xff]
        %v809 = vld [vmem:[%s375 + $0x50] sm:$0xff]
        %v810 = vld [vmem:[%s375 + $0x58] sm:$0xff]
        %v811 = vld [vmem:[%s375 + $0x60] sm:$0xff]
        %v812 = vld [vmem:[%s375 + $0x68] sm:$0xff]
        %v813 = vld [vmem:[%s375 + $0x70] sm:$0xff]
        %v814 = vld [vmem:[%s375 + $0x78] sm:$0xff]
        %v815 = vld [vmem:[%s375 + $0x80] sm:$0xff]
        %v816 = vld [vmem:[%s375 + $0x88] sm:$0xff]
        %v817 = vld [vmem:[%s375 + $0x90] sm:$0xff]
        %v818 = vld [vmem:[%s375 + $0x98] sm:$0xff]
        %v819 = vld [vmem:[%s375 + $0xa0] sm:$0xff]
        %v820 = vld [vmem:[%s375 + $0xa8] sm:$0xff]
        %v821 = vld [vmem:[%s375 + $0xb0] sm:$0xff]
        %v822 = vld [vmem:[%s375 + $0xb8] sm:$0xff]
        %v823 = vld [vmem:[%s375 + $0xc0] sm:$0xff]
        %v824 = vld [vmem:[%s375 + $0xc8] sm:$0xff]
        %v825 = vld [vmem:[%s375 + $0xd0] sm:$0xff]
        %v826 = vld [vmem:[%s375 + $0xd8] sm:$0xff]
        %v827 = vld [vmem:[%s375 + $0xe0] sm:$0xff]
        %v828 = vld [vmem:[%s375 + $0xe8] sm:$0xff]
        %v829 = vld [vmem:[%s375 + $0xf0] sm:$0xff]
        %v830 = vld [vmem:[%s375 + $0xf8] sm:$0xff]
        %s831 = scalar_lea.vmem %s375, 256 [#allocation10]
        %v832 = vld [vmem:[%s831] sm:$0xff]
        %v833 = vld [vmem:[%s831 + $0x8] sm:$0xff]
        %v834 = vld [vmem:[%s831 + $0x10] sm:$0xff]
        %v835 = vld [vmem:[%s831 + $0x18] sm:$0xff]
        %v836 = vld [vmem:[%s831 + $0x20] sm:$0xff]
        %v837 = vld [vmem:[%s831 + $0x28] sm:$0xff]
        %v838 = vld [vmem:[%s831 + $0x30] sm:$0xff]
        %v839 = vld [vmem:[%s831 + $0x38] sm:$0xff]
        %v840 = vld [vmem:[%s831 + $0x40] sm:$0xff]
        %v841 = vld [vmem:[%s831 + $0x48] sm:$0xff]
        %v842 = vld [vmem:[%s831 + $0x50] sm:$0xff]
        %v843 = vld [vmem:[%s831 + $0x58] sm:$0xff]
        %v844 = vld [vmem:[%s831 + $0x60] sm:$0xff]
        %v845 = vld [vmem:[%s831 + $0x68] sm:$0xff]
        %v846 = vld [vmem:[%s831 + $0x70] sm:$0xff]
        %v847 = vld [vmem:[%s831 + $0x78] sm:$0xff]
        %v848 = vld [vmem:[%s831 + $0x80] sm:$0xff]
        %v849 = vld [vmem:[%s831 + $0x88] sm:$0xff]
        %v850 = vld [vmem:[%s831 + $0x90] sm:$0xff]
        %v851 = vld [vmem:[%s831 + $0x98] sm:$0xff]
        %v852 = vld [vmem:[%s831 + $0xa0] sm:$0xff]
        %v853 = vld [vmem:[%s831 + $0xa8] sm:$0xff]
        %v854 = vld [vmem:[%s831 + $0xb0] sm:$0xff]
        %v855 = vld [vmem:[%s831 + $0xb8] sm:$0xff]
        %v856 = vld [vmem:[%s831 + $0xc0] sm:$0xff]
        %v857 = vld [vmem:[%s831 + $0xc8] sm:$0xff]
        %v858 = vld [vmem:[%s831 + $0xd0] sm:$0xff]
        %v859 = vld [vmem:[%s831 + $0xd8] sm:$0xff]
        %v860 = vld [vmem:[%s831 + $0xe0] sm:$0xff]
        %v861 = vld [vmem:[%s831 + $0xe8] sm:$0xff]
        %v862 = vld [vmem:[%s831 + $0xf0] sm:$0xff]
        %v863 = vld [vmem:[%s831 + $0xf8] sm:$0xff]
        %v866 = vunpack.c.l.b16 %v797
        %v867 = vunpack.c.l.b16 %v798
        %v868 = vrot.slane %v866, 1
        %vm869 = vcmask 1041409
        %v870 = vsel %vm869, %v867, %v868
        %v871 = vpack.c.b16 %v870, %v870
        %v905 = vunpack.c.l.b16 %v832
        %v906 = vunpack.c.h.b16 %v832
        %v907 = vunpack.c.l.b16 %v833
        %v908 = vunpack.c.h.b16 %v833
        %v909 = vunpack.c.l.b16 %v834
        %v910 = vunpack.c.h.b16 %v834
        %v911 = vunpack.c.l.b16 %v835
        %v912 = vunpack.c.h.b16 %v835
        %v913 = vunpack.c.l.b16 %v836
        %v914 = vunpack.c.h.b16 %v836
        %v915 = vunpack.c.l.b16 %v837
        %v916 = vunpack.c.h.b16 %v837
        %v917 = vunpack.c.l.b16 %v838
        %v918 = vunpack.c.h.b16 %v838
        %v919 = vunpack.c.l.b16 %v839
        %v920 = vunpack.c.h.b16 %v839
        %v921 = vunpack.c.l.b16 %v840
        %v922 = vunpack.c.h.b16 %v840
        %v923 = vunpack.c.l.b16 %v841
        %v924 = vunpack.c.h.b16 %v841
        %v925 = vunpack.c.l.b16 %v842
        %v926 = vunpack.c.h.b16 %v842
        %v927 = vunpack.c.l.b16 %v843
        %v928 = vunpack.c.h.b16 %v843
        %v929 = vunpack.c.l.b16 %v844
        %v930 = vunpack.c.h.b16 %v844
        %v931 = vunpack.c.l.b16 %v845
        %v932 = vunpack.c.h.b16 %v845
        %v933 = vunpack.c.l.b16 %v846
        %v934 = vunpack.c.h.b16 %v846
        %v935 = vunpack.c.l.b16 %v847
        %v936 = vunpack.c.h.b16 %v847
        %v937 = vunpack.c.l.b16 %v848
        %v938 = vunpack.c.h.b16 %v848
        %v939 = vunpack.c.l.b16 %v849
        %v940 = vunpack.c.h.b16 %v849
        %v941 = vunpack.c.l.b16 %v850
        %v942 = vunpack.c.h.b16 %v850
        %v943 = vunpack.c.l.b16 %v851
        %v944 = vunpack.c.h.b16 %v851
        %v945 = vunpack.c.l.b16 %v852
        %v946 = vunpack.c.h.b16 %v852
        %v947 = vunpack.c.l.b16 %v853
        %v948 = vunpack.c.h.b16 %v853
        %v949 = vunpack.c.l.b16 %v854
        %v950 = vunpack.c.h.b16 %v854
        %v951 = vunpack.c.l.b16 %v855
        %v952 = vunpack.c.h.b16 %v855
        %v953 = vunpack.c.l.b16 %v856
        %v954 = vunpack.c.h.b16 %v856
        %v955 = vunpack.c.l.b16 %v857
        %v956 = vunpack.c.h.b16 %v857
        %v957 = vunpack.c.l.b16 %v858
        %v958 = vunpack.c.h.b16 %v858
        %v959 = vunpack.c.l.b16 %v859
        %v960 = vunpack.c.h.b16 %v859
        %v961 = vunpack.c.l.b16 %v860
        %v962 = vunpack.c.h.b16 %v860
        %v963 = vunpack.c.l.b16 %v861
        %v964 = vunpack.c.h.b16 %v861
        %v965 = vunpack.c.l.b16 %v862
        %v966 = vunpack.c.h.b16 %v862
        %v967 = vunpack.c.l.b16 %v863
        %v968 = vunpack.c.h.b16 %v863
        %v969 = vpack.c.b16 %v909, %v905
        %v970 = vpack.c.b16 %v910, %v906
        %v971 = vpack.c.b16 %v911, %v907
        %v972 = vpack.c.b16 %v912, %v908
        %v973 = vpack.c.b16 %v917, %v913
        %v974 = vpack.c.b16 %v918, %v914
        %v975 = vpack.c.b16 %v919, %v915
        %v976 = vpack.c.b16 %v920, %v916
        %v977 = vpack.c.b16 %v925, %v921
        %v978 = vpack.c.b16 %v926, %v922
        %v979 = vpack.c.b16 %v927, %v923
        %v980 = vpack.c.b16 %v928, %v924
        %v981 = vpack.c.b16 %v933, %v929
        %v982 = vpack.c.b16 %v934, %v930
        %v983 = vpack.c.b16 %v935, %v931
        %v984 = vpack.c.b16 %v936, %v932
        %v985 = vpack.c.b16 %v941, %v937
        %v986 = vpack.c.b16 %v942, %v938
        %v987 = vpack.c.b16 %v943, %v939
        %v988 = vpack.c.b16 %v944, %v940
        %v989 = vpack.c.b16 %v949, %v945
        %v990 = vpack.c.b16 %v950, %v946
        %v991 = vpack.c.b16 %v951, %v947
        %v992 = vpack.c.b16 %v952, %v948
        %v993 = vpack.c.b16 %v957, %v953
        %v994 = vpack.c.b16 %v958, %v954
        %v995 = vpack.c.b16 %v959, %v955
        %v996 = vpack.c.b16 %v960, %v956
        %v997 = vpack.c.b16 %v965, %v961
        %v998 = vpack.c.b16 %v966, %v962
        %v999 = vpack.c.b16 %v967, %v963
        %v1000 = vpack.c.b16 %v968, %v964
        %1033 = vmatprep.subr.bf16.mxu0 %v970
        %1034 = vmatpush1.bf16.msra.mxu0 %v969
        %1035 = vmatprep.subr.bf16.mxu0 %v974
        %1036 = vmatpush1.bf16.msra.mxu0 %v973
        %1037 = vmatprep.subr.bf16.mxu0 %v978
        %1038 = vmatpush1.bf16.msra.mxu0 %v977
        %1039 = vmatprep.subr.bf16.mxu0 %v982
        %1040 = vmatpush1.bf16.msra.mxu0 %v981
        %1041 = vmatprep.subr.bf16.mxu0 %v986
        %1042 = vmatpush1.bf16.msra.mxu0 %v985
        %1043 = vmatprep.subr.bf16.mxu0 %v990
        %1044 = vmatpush1.bf16.msra.mxu0 %v989
        %1045 = vmatprep.subr.bf16.mxu0 %v994
        %1046 = vmatpush1.bf16.msra.mxu0 %v993
        %1047 = vmatprep.subr.bf16.mxu0 %v998
        %1048 = vmatpush1.bf16.msra.mxu0 %v997
        %1049 = vmatprep.subr.bf16.mxu0 0
        %1050 = vmatpush1.bf16.msra.mxu0 0
        %1051 = vmatprep.subr.bf16.mxu0 0
        %1052 = vmatpush1.bf16.msra.mxu0 0
        %1053 = vmatprep.subr.bf16.mxu0 0
        %1054 = vmatpush1.bf16.msra.mxu0 0
        %1055 = vmatprep.subr.bf16.mxu0 0
        %1056 = vmatpush1.bf16.msra.mxu0 0
        %1057 = vmatprep.subr.bf16.mxu0 0
        %1058 = vmatpush1.bf16.msra.mxu0 0
        %1059 = vmatprep.subr.bf16.mxu0 0
        %1060 = vmatpush1.bf16.msra.mxu0 0
        %1061 = vmatprep.subr.bf16.mxu0 0
        %1062 = vmatpush1.bf16.msra.mxu0 0
        %1063 = vmatprep.subr.bf16.mxu0 0
        %1064 = vmatpush1.bf16.msra.mxu0 0
        %1065 = vmatprep.mubr.bf16.mxu0 0
        %1066 = vmatmul.mubr.bf16.gmra.mrb[0].mxu0 %v871
        %v1067 = vpop.f32.mrb[0].mxu0
        %v1068 = vadd.f32 0.0, %v1067
        %v1069 = vpop.f32.mrb[0].mxu0
        %v1070 = vadd.f32 0.0, %v1069
        %v1071 = vpop.f32.mrb[0].mxu0
        %v1072 = vpop.f32.mrb[0].mxu0
        %1073 = vdwg.mxu0
        %1074 = vmatprep.subr.bf16.mxu0 %v972
        %1075 = vmatpush1.bf16.msra.mxu0 %v971
        %1076 = vmatprep.subr.bf16.mxu0 %v976
        %1077 = vmatpush1.bf16.msra.mxu0 %v975
        %1078 = vmatprep.subr.bf16.mxu0 %v980
        %1079 = vmatpush1.bf16.msra.mxu0 %v979
        %1080 = vmatprep.subr.bf16.mxu0 %v984
        %1081 = vmatpush1.bf16.msra.mxu0 %v983
        %1082 = vmatprep.subr.bf16.mxu0 %v988
        %1083 = vmatpush1.bf16.msra.mxu0 %v987
        %1084 = vmatprep.subr.bf16.mxu0 %v992
        %1085 = vmatpush1.bf16.msra.mxu0 %v991
        %1086 = vmatprep.subr.bf16.mxu0 %v996
        %1087 = vmatpush1.bf16.msra.mxu0 %v995
        %1088 = vmatprep.subr.bf16.mxu0 %v1000
        %1089 = vmatpush1.bf16.msra.mxu0 %v999
        %1090 = vmatprep.subr.bf16.mxu0 0
        %1091 = vmatpush1.bf16.msra.mxu0 0
        %1092 = vmatprep.subr.bf16.mxu0 0
        %1093 = vmatpush1.bf16.msra.mxu0 0
        %1094 = vmatprep.subr.bf16.mxu0 0
        %1095 = vmatpush1.bf16.msra.mxu0 0
        %1096 = vmatprep.subr.bf16.mxu0 0
        %1097 = vmatpush1.bf16.msra.mxu0 0
        %1098 = vmatprep.subr.bf16.mxu0 0
        %1099 = vmatpush1.bf16.msra.mxu0 0
        %1100 = vmatprep.subr.bf16.mxu0 0
        %1101 = vmatpush1.bf16.msra.mxu0 0
        %1102 = vmatprep.subr.bf16.mxu0 0
        %1103 = vmatpush1.bf16.msra.mxu0 0
        %1104 = vmatprep.subr.bf16.mxu0 0
        %1105 = vmatpush1.bf16.msra.mxu0 0
        %1106 = vmatprep.mubr.bf16.mxu0 0
        %1107 = vmatmul.mubr.bf16.gmra.mrb[0].mxu0 %v871
        %v1108 = vpop.f32.mrb[0].mxu0
        %v1109 = vadd.f32 0.0, %v1108
        %v1110 = vpop.f32.mrb[0].mxu0
        %v1111 = vadd.f32 0.0, %v1110
        %v1112 = vpop.f32.mrb[0].mxu0
        %v1113 = vpop.f32.mrb[0].mxu0
        %1114 = vdwg.mxu0
        %v1115 = vrot.slane %v867, 7
        %v1116 = vsel %vm869, %v1115, %v866
        %v1117 = vpack.c.b16 %v1116, %v1116
        %v1151 = vunpack.c.l.b16 %v799
        %v1152 = vunpack.c.h.b16 %v799
        %v1153 = vunpack.c.l.b16 %v800
        %v1154 = vunpack.c.h.b16 %v800
        %v1155 = vunpack.c.l.b16 %v801
        %v1156 = vunpack.c.h.b16 %v801
        %v1157 = vunpack.c.l.b16 %v802
        %v1158 = vunpack.c.h.b16 %v802
        %v1159 = vunpack.c.l.b16 %v803
        %v1160 = vunpack.c.h.b16 %v803
        %v1161 = vunpack.c.l.b16 %v804
        %v1162 = vunpack.c.h.b16 %v804
        %v1163 = vunpack.c.l.b16 %v805
        %v1164 = vunpack.c.h.b16 %v805
        %v1165 = vunpack.c.l.b16 %v806
        %v1166 = vunpack.c.h.b16 %v806
        %v1167 = vunpack.c.l.b16 %v807
        %v1168 = vunpack.c.h.b16 %v807
        %v1169 = vunpack.c.l.b16 %v808
        %v1170 = vunpack.c.h.b16 %v808
        %v1171 = vunpack.c.l.b16 %v809
        %v1172 = vunpack.c.h.b16 %v809
        %v1173 = vunpack.c.l.b16 %v810
        %v1174 = vunpack.c.h.b16 %v810
        %v1175 = vunpack.c.l.b16 %v811
        %v1176 = vunpack.c.h.b16 %v811
        %v1177 = vunpack.c.l.b16 %v812
        %v1178 = vunpack.c.h.b16 %v812
        %v1179 = vunpack.c.l.b16 %v813
        %v1180 = vunpack.c.h.b16 %v813
        %v1181 = vunpack.c.l.b16 %v814
        %v1182 = vunpack.c.h.b16 %v814
        %v1183 = vunpack.c.l.b16 %v815
        %v1184 = vunpack.c.h.b16 %v815
        %v1185 = vunpack.c.l.b16 %v816
        %v1186 = vunpack.c.h.b16 %v816
        %v1187 = vunpack.c.l.b16 %v817
        %v1188 = vunpack.c.h.b16 %v817
        %v1189 = vunpack.c.l.b16 %v818
        %v1190 = vunpack.c.h.b16 %v818
        %v1191 = vunpack.c.l.b16 %v819
        %v1192 = vunpack.c.h.b16 %v819
        %v1193 = vunpack.c.l.b16 %v820
        %v1194 = vunpack.c.h.b16 %v820
        %v1195 = vunpack.c.l.b16 %v821
        %v1196 = vunpack.c.h.b16 %v821
        %v1197 = vunpack.c.l.b16 %v822
        %v1198 = vunpack.c.h.b16 %v822
        %v1199 = vunpack.c.l.b16 %v823
        %v1200 = vunpack.c.h.b16 %v823
        %v1201 = vunpack.c.l.b16 %v824
        %v1202 = vunpack.c.h.b16 %v824
        %v1203 = vunpack.c.l.b16 %v825
        %v1204 = vunpack.c.h.b16 %v825
        %v1205 = vunpack.c.l.b16 %v826
        %v1206 = vunpack.c.h.b16 %v826
        %v1207 = vunpack.c.l.b16 %v827
        %v1208 = vunpack.c.h.b16 %v827
        %v1209 = vunpack.c.l.b16 %v828
        %v1210 = vunpack.c.h.b16 %v828
        %v1211 = vunpack.c.l.b16 %v829
        %v1212 = vunpack.c.h.b16 %v829
        %v1213 = vunpack.c.l.b16 %v830
        %v1214 = vunpack.c.h.b16 %v830
        %v1215 = vpack.c.b16 %v1155, %v1151
        %v1216 = vpack.c.b16 %v1156, %v1152
        %v1217 = vpack.c.b16 %v1157, %v1153
        %v1218 = vpack.c.b16 %v1158, %v1154
        %v1219 = vpack.c.b16 %v1163, %v1159
        %v1220 = vpack.c.b16 %v1164, %v1160
        %v1221 = vpack.c.b16 %v1165, %v1161
        %v1222 = vpack.c.b16 %v1166, %v1162
        %v1223 = vpack.c.b16 %v1171, %v1167
        %v1224 = vpack.c.b16 %v1172, %v1168
        %v1225 = vpack.c.b16 %v1173, %v1169
        %v1226 = vpack.c.b16 %v1174, %v1170
        %v1227 = vpack.c.b16 %v1179, %v1175
        %v1228 = vpack.c.b16 %v1180, %v1176
        %v1229 = vpack.c.b16 %v1181, %v1177
        %v1230 = vpack.c.b16 %v1182, %v1178
        %v1231 = vpack.c.b16 %v1187, %v1183
        %v1232 = vpack.c.b16 %v1188, %v1184
        %v1233 = vpack.c.b16 %v1189, %v1185
        %v1234 = vpack.c.b16 %v1190, %v1186
        %v1235 = vpack.c.b16 %v1195, %v1191
        %v1236 = vpack.c.b16 %v1196, %v1192
        %v1237 = vpack.c.b16 %v1197, %v1193
        %v1238 = vpack.c.b16 %v1198, %v1194
        %v1239 = vpack.c.b16 %v1203, %v1199
        %v1240 = vpack.c.b16 %v1204, %v1200
        %v1241 = vpack.c.b16 %v1205, %v1201
        %v1242 = vpack.c.b16 %v1206, %v1202
        %v1243 = vpack.c.b16 %v1211, %v1207
        %v1244 = vpack.c.b16 %v1212, %v1208
        %v1245 = vpack.c.b16 %v1213, %v1209
        %v1246 = vpack.c.b16 %v1214, %v1210
        %1279 = vmatprep.subr.bf16.mxu0 %v1216
        %1280 = vmatpush1.bf16.msra.mxu0 %v1215
        %1281 = vmatprep.subr.bf16.mxu0 %v1220
        %1282 = vmatpush1.bf16.msra.mxu0 %v1219
        %1283 = vmatprep.subr.bf16.mxu0 %v1224
        %1284 = vmatpush1.bf16.msra.mxu0 %v1223
        %1285 = vmatprep.subr.bf16.mxu0 %v1228
        %1286 = vmatpush1.bf16.msra.mxu0 %v1227
        %1287 = vmatprep.subr.bf16.mxu0 %v1232
        %1288 = vmatpush1.bf16.msra.mxu0 %v1231
        %1289 = vmatprep.subr.bf16.mxu0 %v1236
        %1290 = vmatpush1.bf16.msra.mxu0 %v1235
        %1291 = vmatprep.subr.bf16.mxu0 %v1240
        %1292 = vmatpush1.bf16.msra.mxu0 %v1239
        %1293 = vmatprep.subr.bf16.mxu0 %v1244
        %1294 = vmatpush1.bf16.msra.mxu0 %v1243
        %1295 = vmatprep.subr.bf16.mxu0 0
        %1296 = vmatpush1.bf16.msra.mxu0 0
        %1297 = vmatprep.subr.bf16.mxu0 0
        %1298 = vmatpush1.bf16.msra.mxu0 0
        %1299 = vmatprep.subr.bf16.mxu0 0
        %1300 = vmatpush1.bf16.msra.mxu0 0
        %1301 = vmatprep.subr.bf16.mxu0 0
        %1302 = vmatpush1.bf16.msra.mxu0 0
        %1303 = vmatprep.subr.bf16.mxu0 0
        %1304 = vmatpush1.bf16.msra.mxu0 0
        %1305 = vmatprep.subr.bf16.mxu0 0
        %1306 = vmatpush1.bf16.msra.mxu0 0
        %1307 = vmatprep.subr.bf16.mxu0 0
        %1308 = vmatpush1.bf16.msra.mxu0 0
        %1309 = vmatprep.subr.bf16.mxu0 0
        %1310 = vmatpush1.bf16.msra.mxu0 0
        %1311 = vmatprep.mubr.bf16.mxu0 0
        %1312 = vmatmul.mubr.bf16.gmra.mrb[0].mxu0 %v1117
        %v1313 = vpop.f32.mrb[0].mxu0
        %v1314 = vadd.f32 %v1068, %v1313
        %v1315 = vpop.f32.mrb[0].mxu0
        %v1316 = vadd.f32 %v1070, %v1315
        %v1317 = vpop.f32.mrb[0].mxu0
        %v1318 = vpop.f32.mrb[0].mxu0
        %1319 = vdwg.mxu0
        %1320 = vmatprep.subr.bf16.mxu0 %v1218
        %1321 = vmatpush1.bf16.msra.mxu0 %v1217
        %1322 = vmatprep.subr.bf16.mxu0 %v1222
        %1323 = vmatpush1.bf16.msra.mxu0 %v1221
        %1324 = vmatprep.subr.bf16.mxu0 %v1226
        %1325 = vmatpush1.bf16.msra.mxu0 %v1225
        %1326 = vmatprep.subr.bf16.mxu0 %v1230
        %1327 = vmatpush1.bf16.msra.mxu0 %v1229
        %1328 = vmatprep.subr.bf16.mxu0 %v1234
        %1329 = vmatpush1.bf16.msra.mxu0 %v1233
        %1330 = vmatprep.subr.bf16.mxu0 %v1238
        %1331 = vmatpush1.bf16.msra.mxu0 %v1237
        %1332 = vmatprep.subr.bf16.mxu0 %v1242
        %1333 = vmatpush1.bf16.msra.mxu0 %v1241
        %1334 = vmatprep.subr.bf16.mxu0 %v1246
        %1335 = vmatpush1.bf16.msra.mxu0 %v1245
        %1336 = vmatprep.subr.bf16.mxu0 0
        %1337 = vmatpush1.bf16.msra.mxu0 0
        %1338 = vmatprep.subr.bf16.mxu0 0
        %1339 = vmatpush1.bf16.msra.mxu0 0
        %1340 = vmatprep.subr.bf16.mxu0 0
        %1341 = vmatpush1.bf16.msra.mxu0 0
        %1342 = vmatprep.subr.bf16.mxu0 0
        %1343 = vmatpush1.bf16.msra.mxu0 0
        %1344 = vmatprep.subr.bf16.mxu0 0
        %1345 = vmatpush1.bf16.msra.mxu0 0
        %1346 = vmatprep.subr.bf16.mxu0 0
        %1347 = vmatpush1.bf16.msra.mxu0 0
        %1348 = vmatprep.subr.bf16.mxu0 0
        %1349 = vmatpush1.bf16.msra.mxu0 0
        %1350 = vmatprep.subr.bf16.mxu0 0
        %1351 = vmatpush1.bf16.msra.mxu0 0
        %1352 = vmatprep.mubr.bf16.mxu0 0
        %1353 = vmatmul.mubr.bf16.gmra.mrb[0].mxu0 %v1117
        %v1354 = vpop.f32.mrb[0].mxu0
        %v1355 = vadd.f32 %v1109, %v1354
        %v1356 = vpop.f32.mrb[0].mxu0
        %v1357 = vadd.f32 %v1111, %v1356
        %v1358 = vpop.f32.mrb[0].mxu0
        %v1359 = vpop.f32.mrb[0].mxu0
        %1360 = vdwg.mxu0
        %s1361 = scalar_lea.vmem %s375, 512 [#allocation10]
        %v1362 = vld [vmem:[%s1361] sm:$0xff]
        %v1363 = vld [vmem:[%s1361 + $0x8] sm:$0xff]
        %v1364 = vld [vmem:[%s1361 + $0x10] sm:$0xff]
        %v1365 = vld [vmem:[%s1361 + $0x18] sm:$0xff]
        %v1366 = vld [vmem:[%s1361 + $0x20] sm:$0xff]
        %v1367 = vld [vmem:[%s1361 + $0x28] sm:$0xff]
        %v1368 = vld [vmem:[%s1361 + $0x30] sm:$0xff]
        %v1369 = vld [vmem:[%s1361 + $0x38] sm:$0xff]
        %v1370 = vld [vmem:[%s1361 + $0x40] sm:$0xff]
        %v1371 = vld [vmem:[%s1361 + $0x48] sm:$0xff]
        %v1372 = vld [vmem:[%s1361 + $0x50] sm:$0xff]
        %v1373 = vld [vmem:[%s1361 + $0x58] sm:$0xff]
        %v1374 = vld [vmem:[%s1361 + $0x60] sm:$0xff]
        %v1375 = vld [vmem:[%s1361 + $0x68] sm:$0xff]
        %v1376 = vld [vmem:[%s1361 + $0x70] sm:$0xff]
        %v1377 = vld [vmem:[%s1361 + $0x78] sm:$0xff]
        %v1378 = vld [vmem:[%s1361 + $0x80] sm:$0xff]
        %v1379 = vld [vmem:[%s1361 + $0x88] sm:$0xff]
        %v1380 = vld [vmem:[%s1361 + $0x90] sm:$0xff]
        %v1381 = vld [vmem:[%s1361 + $0x98] sm:$0xff]
        %v1382 = vld [vmem:[%s1361 + $0xa0] sm:$0xff]
        %v1383 = vld [vmem:[%s1361 + $0xa8] sm:$0xff]
        %v1384 = vld [vmem:[%s1361 + $0xb0] sm:$0xff]
        %v1385 = vld [vmem:[%s1361 + $0xb8] sm:$0xff]
        %v1386 = vld [vmem:[%s1361 + $0xc0] sm:$0xff]
        %v1387 = vld [vmem:[%s1361 + $0xc8] sm:$0xff]
        %v1388 = vld [vmem:[%s1361 + $0xd0] sm:$0xff]
        %v1389 = vld [vmem:[%s1361 + $0xd8] sm:$0xff]
        %v1390 = vld [vmem:[%s1361 + $0xe0] sm:$0xff]
        %v1391 = vld [vmem:[%s1361 + $0xe8] sm:$0xff]
        %v1392 = vld [vmem:[%s1361 + $0xf0] sm:$0xff]
        %v1393 = vld [vmem:[%s1361 + $0xf8] sm:$0xff]
        %v1394 = vrot.slane %v866, 2
        %v1395 = vrot.slane %v867, 1
        %v1396 = vsel %vm869, %v1395, %v1394
        %v1397 = vpack.c.b16 %v1396, %v1396
        %v1431 = vunpack.c.l.b16 %v1362
        %v1432 = vunpack.c.h.b16 %v1362
        %v1433 = vunpack.c.l.b16 %v1363
        %v1434 = vunpack.c.h.b16 %v1363
        %v1435 = vunpack.c.l.b16 %v1364
        %v1436 = vunpack.c.h.b16 %v1364
        %v1437 = vunpack.c.l.b16 %v1365
        %v1438 = vunpack.c.h.b16 %v1365
        %v1439 = vunpack.c.l.b16 %v1366
        %v1440 = vunpack.c.h.b16 %v1366
        %v1441 = vunpack.c.l.b16 %v1367
        %v1442 = vunpack.c.h.b16 %v1367
        %v1443 = vunpack.c.l.b16 %v1368
        %v1444 = vunpack.c.h.b16 %v1368
        %v1445 = vunpack.c.l.b16 %v1369
        %v1446 = vunpack.c.h.b16 %v1369
        %v1447 = vunpack.c.l.b16 %v1370
        %v1448 = vunpack.c.h.b16 %v1370
        %v1449 = vunpack.c.l.b16 %v1371
        %v1450 = vunpack.c.h.b16 %v1371
        %v1451 = vunpack.c.l.b16 %v1372
        %v1452 = vunpack.c.h.b16 %v1372
        %v1453 = vunpack.c.l.b16 %v1373
        %v1454 = vunpack.c.h.b16 %v1373
        %v1455 = vunpack.c.l.b16 %v1374
        %v1456 = vunpack.c.h.b16 %v1374
        %v1457 = vunpack.c.l.b16 %v1375
        %v1458 = vunpack.c.h.b16 %v1375
        %v1459 = vunpack.c.l.b16 %v1376
        %v1460 = vunpack.c.h.b16 %v1376
        %v1461 = vunpack.c.l.b16 %v1377
        %v1462 = vunpack.c.h.b16 %v1377
        %v1463 = vunpack.c.l.b16 %v1378
        %v1464 = vunpack.c.h.b16 %v1378
        %v1465 = vunpack.c.l.b16 %v1379
        %v1466 = vunpack.c.h.b16 %v1379
        %v1467 = vunpack.c.l.b16 %v1380
        %v1468 = vunpack.c.h.b16 %v1380
        %v1469 = vunpack.c.l.b16 %v1381
        %v1470 = vunpack.c.h.b16 %v1381
        %v1471 = vunpack.c.l.b16 %v1382
        %v1472 = vunpack.c.h.b16 %v1382
        %v1473 = vunpack.c.l.b16 %v1383
        %v1474 = vunpack.c.h.b16 %v1383
        %v1475 = vunpack.c.l.b16 %v1384
        %v1476 = vunpack.c.h.b16 %v1384
        %v1477 = vunpack.c.l.b16 %v1385
        %v1478 = vunpack.c.h.b16 %v1385
        %v1479 = vunpack.c.l.b16 %v1386
        %v1480 = vunpack.c.h.b16 %v1386
        %v1481 = vunpack.c.l.b16 %v1387
        %v1482 = vunpack.c.h.b16 %v1387
        %v1483 = vunpack.c.l.b16 %v1388
        %v1484 = vunpack.c.h.b16 %v1388
        %v1485 = vunpack.c.l.b16 %v1389
        %v1486 = vunpack.c.h.b16 %v1389
        %v1487 = vunpack.c.l.b16 %v1390
        %v1488 = vunpack.c.h.b16 %v1390
        %v1489 = vunpack.c.l.b16 %v1391
        %v1490 = vunpack.c.h.b16 %v1391
        %v1491 = vunpack.c.l.b16 %v1392
        %v1492 = vunpack.c.h.b16 %v1392
        %v1493 = vunpack.c.l.b16 %v1393
        %v1494 = vunpack.c.h.b16 %v1393
        %v1495 = vpack.c.b16 %v1435, %v1431
        %v1496 = vpack.c.b16 %v1436, %v1432
        %v1497 = vpack.c.b16 %v1437, %v1433
        %v1498 = vpack.c.b16 %v1438, %v1434
        %v1499 = vpack.c.b16 %v1443, %v1439
        %v1500 = vpack.c.b16 %v1444, %v1440
        %v1501 = vpack.c.b16 %v1445, %v1441
        %v1502 = vpack.c.b16 %v1446, %v1442
        %v1503 = vpack.c.b16 %v1451, %v1447
        %v1504 = vpack.c.b16 %v1452, %v1448
        %v1505 = vpack.c.b16 %v1453, %v1449
        %v1506 = vpack.c.b16 %v1454, %v1450
        %v1507 = vpack.c.b16 %v1459, %v1455
        %v1508 = vpack.c.b16 %v1460, %v1456
        %v1509 = vpack.c.b16 %v1461, %v1457
        %v1510 = vpack.c.b16 %v1462, %v1458
        %v1511 = vpack.c.b16 %v1467, %v1463
        %v1512 = vpack.c.b16 %v1468, %v1464
        %v1513 = vpack.c.b16 %v1469, %v1465
        %v1514 = vpack.c.b16 %v1470, %v1466
        %v1515 = vpack.c.b16 %v1475, %v1471
        %v1516 = vpack.c.b16 %v1476, %v1472
        %v1517 = vpack.c.b16 %v1477, %v1473
        %v1518 = vpack.c.b16 %v1478, %v1474
        %v1519 = vpack.c.b16 %v1483, %v1479
        %v1520 = vpack.c.b16 %v1484, %v1480
        %v1521 = vpack.c.b16 %v1485, %v1481
        %v1522 = vpack.c.b16 %v1486, %v1482
        %v1523 = vpack.c.b16 %v1491, %v1487
        %v1524 = vpack.c.b16 %v1492, %v1488
        %v1525 = vpack.c.b16 %v1493, %v1489
        %v1526 = vpack.c.b16 %v1494, %v1490
        %1559 = vmatprep.subr.bf16.mxu0 %v1496
        %1560 = vmatpush1.bf16.msra.mxu0 %v1495
        %1561 = vmatprep.subr.bf16.mxu0 %v1500
        %1562 = vmatpush1.bf16.msra.mxu0 %v1499
        %1563 = vmatprep.subr.bf16.mxu0 %v1504
        %1564 = vmatpush1.bf16.msra.mxu0 %v1503
        %1565 = vmatprep.subr.bf16.mxu0 %v1508
        %1566 = vmatpush1.bf16.msra.mxu0 %v1507
        %1567 = vmatprep.subr.bf16.mxu0 %v1512
        %1568 = vmatpush1.bf16.msra.mxu0 %v1511
        %1569 = vmatprep.subr.bf16.mxu0 %v1516
        %1570 = vmatpush1.bf16.msra.mxu0 %v1515
        %1571 = vmatprep.subr.bf16.mxu0 %v1520
        %1572 = vmatpush1.bf16.msra.mxu0 %v1519
        %1573 = vmatprep.subr.bf16.mxu0 %v1524
        %1574 = vmatpush1.bf16.msra.mxu0 %v1523
        %1575 = vmatprep.subr.bf16.mxu0 0
        %1576 = vmatpush1.bf16.msra.mxu0 0
        %1577 = vmatprep.subr.bf16.mxu0 0
        %1578 = vmatpush1.bf16.msra.mxu0 0
        %1579 = vmatprep.subr.bf16.mxu0 0
        %1580 = vmatpush1.bf16.msra.mxu0 0
        %1581 = vmatprep.subr.bf16.mxu0 0
        %1582 = vmatpush1.bf16.msra.mxu0 0
        %1583 = vmatprep.subr.bf16.mxu0 0
        %1584 = vmatpush1.bf16.msra.mxu0 0
        %1585 = vmatprep.subr.bf16.mxu0 0
        %1586 = vmatpush1.bf16.msra.mxu0 0
        %1587 = vmatprep.subr.bf16.mxu0 0
        %1588 = vmatpush1.bf16.msra.mxu0 0
        %1589 = vmatprep.subr.bf16.mxu0 0
        %1590 = vmatpush1.bf16.msra.mxu0 0
        %1591 = vmatprep.mubr.bf16.mxu0 0
        %1592 = vmatmul.mubr.bf16.gmra.mrb[0].mxu0 %v1397
        %v1593 = vpop.f32.mrb[0].mxu0
        %v1594 = vadd.f32 0.0, %v1593
        %v1595 = vpop.f32.mrb[0].mxu0
        %v1596 = vadd.f32 0.0, %v1595
        %v1597 = vpop.f32.mrb[0].mxu0
        %v1598 = vpop.f32.mrb[0].mxu0
        %1599 = vdwg.mxu0
        %1600 = vmatprep.subr.bf16.mxu0 %v1498
        %1601 = vmatpush1.bf16.msra.mxu0 %v1497
        %1602 = vmatprep.subr.bf16.mxu0 %v1502
        %1603 = vmatpush1.bf16.msra.mxu0 %v1501
        %1604 = vmatprep.subr.bf16.mxu0 %v1506
        %1605 = vmatpush1.bf16.msra.mxu0 %v1505
        %1606 = vmatprep.subr.bf16.mxu0 %v1510
        %1607 = vmatpush1.bf16.msra.mxu0 %v1509
        %1608 = vmatprep.subr.bf16.mxu0 %v1514
        %1609 = vmatpush1.bf16.msra.mxu0 %v1513
        %1610 = vmatprep.subr.bf16.mxu0 %v1518
        %1611 = vmatpush1.bf16.msra.mxu0 %v1517
        %1612 = vmatprep.subr.bf16.mxu0 %v1522
        %1613 = vmatpush1.bf16.msra.mxu0 %v1521
        %1614 = vmatprep.subr.bf16.mxu0 %v1526
        %1615 = vmatpush1.bf16.msra.mxu0 %v1525
        %1616 = vmatprep.subr.bf16.mxu0 0
        %1617 = vmatpush1.bf16.msra.mxu0 0
        %1618 = vmatprep.subr.bf16.mxu0 0
        %1619 = vmatpush1.bf16.msra.mxu0 0
        %1620 = vmatprep.subr.bf16.mxu0 0
        %1621 = vmatpush1.bf16.msra.mxu0 0
        %1622 = vmatprep.subr.bf16.mxu0 0
        %1623 = vmatpush1.bf16.msra.mxu0 0
        %1624 = vmatprep.subr.bf16.mxu0 0
        %1625 = vmatpush1.bf16.msra.mxu0 0
        %1626 = vmatprep.subr.bf16.mxu0 0
        %1627 = vmatpush1.bf16.msra.mxu0 0
        %1628 = vmatprep.subr.bf16.mxu0 0
        %1629 = vmatpush1.bf16.msra.mxu0 0
        %1630 = vmatprep.subr.bf16.mxu0 0
        %1631 = vmatpush1.bf16.msra.mxu0 0
        %1632 = vmatprep.mubr.bf16.mxu0 0
        %1633 = vmatmul.mubr.bf16.gmra.mrb[0].mxu0 %v1397
        %v1634 = vpop.f32.mrb[0].mxu0
        %v1635 = vadd.f32 0.0, %v1634
        %v1636 = vpop.f32.mrb[0].mxu0
        %v1637 = vadd.f32 0.0, %v1636
        %v1638 = vpop.f32.mrb[0].mxu0
        %v1639 = vpop.f32.mrb[0].mxu0
        %1640 = vdwg.mxu0
        %v1641 = vadd.f32 %v1314, %v1594
        %v1642 = vadd.f32 %v1316, %v1596
        %v1643 = vadd.f32 %v1355, %v1635
        %v1644 = vadd.f32 %v1357, %v1637
        %s1645 = scalar_lea.vmem %s375, 768 [#allocation10]
        %v1646 = vld [vmem:[%s1645] sm:$0xff]
        %v1647 = vld [vmem:[%s1645 + $0x8] sm:$0xff]
        %v1648 = vld [vmem:[%s1645 + $0x10] sm:$0xff]
        %v1649 = vld [vmem:[%s1645 + $0x18] sm:$0xff]
        %v1650 = vld [vmem:[%s1645 + $0x20] sm:$0xff]
        %v1651 = vld [vmem:[%s1645 + $0x28] sm:$0xff]
        %v1652 = vld [vmem:[%s1645 + $0x30] sm:$0xff]
        %v1653 = vld [vmem:[%s1645 + $0x38] sm:$0xff]
        %v1654 = vld [vmem:[%s1645 + $0x40] sm:$0xff]
        %v1655 = vld [vmem:[%s1645 + $0x48] sm:$0xff]
        %v1656 = vld [vmem:[%s1645 + $0x50] sm:$0xff]
        %v1657 = vld [vmem:[%s1645 + $0x58] sm:$0xff]
        %v1658 = vld [vmem:[%s1645 + $0x60] sm:$0xff]
        %v1659 = vld [vmem:[%s1645 + $0x68] sm:$0xff]
        %v1660 = vld [vmem:[%s1645 + $0x70] sm:$0xff]
        %v1661 = vld [vmem:[%s1645 + $0x78] sm:$0xff]
        %v1662 = vld [vmem:[%s1645 + $0x80] sm:$0xff]
        %v1663 = vld [vmem:[%s1645 + $0x88] sm:$0xff]
        %v1664 = vld [vmem:[%s1645 + $0x90] sm:$0xff]
        %v1665 = vld [vmem:[%s1645 + $0x98] sm:$0xff]
        %v1666 = vld [vmem:[%s1645 + $0xa0] sm:$0xff]
        %v1667 = vld [vmem:[%s1645 + $0xa8] sm:$0xff]
        %v1668 = vld [vmem:[%s1645 + $0xb0] sm:$0xff]
        %v1669 = vld [vmem:[%s1645 + $0xb8] sm:$0xff]
        %v1670 = vld [vmem:[%s1645 + $0xc0] sm:$0xff]
        %v1671 = vld [vmem:[%s1645 + $0xc8] sm:$0xff]
        %v1672 = vld [vmem:[%s1645 + $0xd0] sm:$0xff]
        %v1673 = vld [vmem:[%s1645 + $0xd8] sm:$0xff]
        %v1674 = vld [vmem:[%s1645 + $0xe0] sm:$0xff]
        %v1675 = vld [vmem:[%s1645 + $0xe8] sm:$0xff]
        %v1676 = vld [vmem:[%s1645 + $0xf0] sm:$0xff]
        %v1677 = vld [vmem:[%s1645 + $0xf8] sm:$0xff]
        %v1678 = vrot.slane %v866, 3
        %v1679 = vrot.slane %v867, 2
        %v1680 = vsel %vm869, %v1679, %v1678
        %v1681 = vpack.c.b16 %v1680, %v1680
        %v1715 = vunpack.c.l.b16 %v1646
        %v1716 = vunpack.c.h.b16 %v1646
        %v1717 = vunpack.c.l.b16 %v1647
        %v1718 = vunpack.c.h.b16 %v1647
        %v1719 = vunpack.c.l.b16 %v1648
        %v1720 = vunpack.c.h.b16 %v1648
        %v1721 = vunpack.c.l.b16 %v1649
        %v1722 = vunpack.c.h.b16 %v1649
        %v1723 = vunpack.c.l.b16 %v1650
        %v1724 = vunpack.c.h.b16 %v1650
        %v1725 = vunpack.c.l.b16 %v1651
        %v1726 = vunpack.c.h.b16 %v1651
        %v1727 = vunpack.c.l.b16 %v1652
        %v1728 = vunpack.c.h.b16 %v1652
        %v1729 = vunpack.c.l.b16 %v1653
        %v1730 = vunpack.c.h.b16 %v1653
        %v1731 = vunpack.c.l.b16 %v1654
        %v1732 = vunpack.c.h.b16 %v1654
        %v1733 = vunpack.c.l.b16 %v1655
        %v1734 = vunpack.c.h.b16 %v1655
        %v1735 = vunpack.c.l.b16 %v1656
        %v1736 = vunpack.c.h.b16 %v1656
        %v1737 = vunpack.c.l.b16 %v1657
        %v1738 = vunpack.c.h.b16 %v1657
        %v1739 = vunpack.c.l.b16 %v1658
        %v1740 = vunpack.c.h.b16 %v1658
        %v1741 = vunpack.c.l.b16 %v1659
        %v1742 = vunpack.c.h.b16 %v1659
        %v1743 = vunpack.c.l.b16 %v1660
        %v1744 = vunpack.c.h.b16 %v1660
        %v1745 = vunpack.c.l.b16 %v1661
        %v1746 = vunpack.c.h.b16 %v1661
        %v1747 = vunpack.c.l.b16 %v1662
        %v1748 = vunpack.c.h.b16 %v1662
        %v1749 = vunpack.c.l.b16 %v1663
        %v1750 = vunpack.c.h.b16 %v1663
        %v1751 = vunpack.c.l.b16 %v1664
        %v1752 = vunpack.c.h.b16 %v1664
        %v1753 = vunpack.c.l.b16 %v1665
        %v1754 = vunpack.c.h.b16 %v1665
        %v1755 = vunpack.c.l.b16 %v1666
        %v1756 = vunpack.c.h.b16 %v1666
        %v1757 = vunpack.c.l.b16 %v1667
        %v1758 = vunpack.c.h.b16 %v1667
        %v1759 = vunpack.c.l.b16 %v1668
        %v1760 = vunpack.c.h.b16 %v1668
        %v1761 = vunpack.c.l.b16 %v1669
        %v1762 = vunpack.c.h.b16 %v1669
        %v1763 = vunpack.c.l.b16 %v1670
        %v1764 = vunpack.c.h.b16 %v1670
        %v1765 = vunpack.c.l.b16 %v1671
        %v1766 = vunpack.c.h.b16 %v1671
        %v1767 = vunpack.c.l.b16 %v1672
        %v1768 = vunpack.c.h.b16 %v1672
        %v1769 = vunpack.c.l.b16 %v1673
        %v1770 = vunpack.c.h.b16 %v1673
        %v1771 = vunpack.c.l.b16 %v1674
        %v1772 = vunpack.c.h.b16 %v1674
        %v1773 = vunpack.c.l.b16 %v1675
        %v1774 = vunpack.c.h.b16 %v1675
        %v1775 = vunpack.c.l.b16 %v1676
        %v1776 = vunpack.c.h.b16 %v1676
        %v1777 = vunpack.c.l.b16 %v1677
        %v1778 = vunpack.c.h.b16 %v1677
        %v1779 = vpack.c.b16 %v1719, %v1715
        %v1780 = vpack.c.b16 %v1720, %v1716
        %v1781 = vpack.c.b16 %v1721, %v1717
        %v1782 = vpack.c.b16 %v1722, %v1718
        %v1783 = vpack.c.b16 %v1727, %v1723
        %v1784 = vpack.c.b16 %v1728, %v1724
        %v1785 = vpack.c.b16 %v1729, %v1725
        %v1786 = vpack.c.b16 %v1730, %v1726
        %v1787 = vpack.c.b16 %v1735, %v1731
        %v1788 = vpack.c.b16 %v1736, %v1732
        %v1789 = vpack.c.b16 %v1737, %v1733
        %v1790 = vpack.c.b16 %v1738, %v1734
        %v1791 = vpack.c.b16 %v1743, %v1739
        %v1792 = vpack.c.b16 %v1744, %v1740
        %v1793 = vpack.c.b16 %v1745, %v1741
        %v1794 = vpack.c.b16 %v1746, %v1742
        %v1795 = vpack.c.b16 %v1751, %v1747
        %v1796 = vpack.c.b16 %v1752, %v1748
        %v1797 = vpack.c.b16 %v1753, %v1749
        %v1798 = vpack.c.b16 %v1754, %v1750
        %v1799 = vpack.c.b16 %v1759, %v1755
        %v1800 = vpack.c.b16 %v1760, %v1756
        %v1801 = vpack.c.b16 %v1761, %v1757
        %v1802 = vpack.c.b16 %v1762, %v1758
        %v1803 = vpack.c.b16 %v1767, %v1763
        %v1804 = vpack.c.b16 %v1768, %v1764
        %v1805 = vpack.c.b16 %v1769, %v1765
        %v1806 = vpack.c.b16 %v1770, %v1766
        %v1807 = vpack.c.b16 %v1775, %v1771
        %v1808 = vpack.c.b16 %v1776, %v1772
        %v1809 = vpack.c.b16 %v1777, %v1773
        %v1810 = vpack.c.b16 %v1778, %v1774
        %1843 = vmatprep.subr.bf16.mxu0 %v1780
        %1844 = vmatpush1.bf16.msra.mxu0 %v1779
        %1845 = vmatprep.subr.bf16.mxu0 %v1784
        %1846 = vmatpush1.bf16.msra.mxu0 %v1783
        %1847 = vmatprep.subr.bf16.mxu0 %v1788
        %1848 = vmatpush1.bf16.msra.mxu0 %v1787
        %1849 = vmatprep.subr.bf16.mxu0 %v1792
        %1850 = vmatpush1.bf16.msra.mxu0 %v1791
        %1851 = vmatprep.subr.bf16.mxu0 %v1796
        %1852 = vmatpush1.bf16.msra.mxu0 %v1795
        %1853 = vmatprep.subr.bf16.mxu0 %v1800
        %1854 = vmatpush1.bf16.msra.mxu0 %v1799
        %1855 = vmatprep.subr.bf16.mxu0 %v1804
        %1856 = vmatpush1.bf16.msra.mxu0 %v1803
        %1857 = vmatprep.subr.bf16.mxu0 %v1808
        %1858 = vmatpush1.bf16.msra.mxu0 %v1807
        %1859 = vmatprep.subr.bf16.mxu0 0
        %1860 = vmatpush1.bf16.msra.mxu0 0
        %1861 = vmatprep.subr.bf16.mxu0 0
        %1862 = vmatpush1.bf16.msra.mxu0 0
        %1863 = vmatprep.subr.bf16.mxu0 0
        %1864 = vmatpush1.bf16.msra.mxu0 0
        %1865 = vmatprep.subr.bf16.mxu0 0
        %1866 = vmatpush1.bf16.msra.mxu0 0
        %1867 = vmatprep.subr.bf16.mxu0 0
        %1868 = vmatpush1.bf16.msra.mxu0 0
        %1869 = vmatprep.subr.bf16.mxu0 0
        %1870 = vmatpush1.bf16.msra.mxu0 0
        %1871 = vmatprep.subr.bf16.mxu0 0
        %1872 = vmatpush1.bf16.msra.mxu0 0
        %1873 = vmatprep.subr.bf16.mxu0 0
        %1874 = vmatpush1.bf16.msra.mxu0 0
        %1875 = vmatprep.mubr.bf16.mxu0 0
        %1876 = vmatmul.mubr.bf16.gmra.mrb[0].mxu0 %v1681
        %v1877 = vpop.f32.mrb[0].mxu0
        %v1878 = vadd.f32 0.0, %v1877
        %v1879 = vpop.f32.mrb[0].mxu0
        %v1880 = vadd.f32 0.0, %v1879
        %v1881 = vpop.f32.mrb[0].mxu0
        %v1882 = vpop.f32.mrb[0].mxu0
        %1883 = vdwg.mxu0
        %1884 = vmatprep.subr.bf16.mxu0 %v1782
        %1885 = vmatpush1.bf16.msra.mxu0 %v1781
        %1886 = vmatprep.subr.bf16.mxu0 %v1786
        %1887 = vmatpush1.bf16.msra.mxu0 %v1785
        %1888 = vmatprep.subr.bf16.mxu0 %v1790
        %1889 = vmatpush1.bf16.msra.mxu0 %v1789
        %1890 = vmatprep.subr.bf16.mxu0 %v1794
        %1891 = vmatpush1.bf16.msra.mxu0 %v1793
        %1892 = vmatprep.subr.bf16.mxu0 %v1798
        %1893 = vmatpush1.bf16.msra.mxu0 %v1797
        %1894 = vmatprep.subr.bf16.mxu0 %v1802
        %1895 = vmatpush1.bf16.msra.mxu0 %v1801
        %1896 = vmatprep.subr.bf16.mxu0 %v1806
        %1897 = vmatpush1.bf16.msra.mxu0 %v1805
        %1898 = vmatprep.subr.bf16.mxu0 %v1810
        %1899 = vmatpush1.bf16.msra.mxu0 %v1809
        %1900 = vmatprep.subr.bf16.mxu0 0
        %1901 = vmatpush1.bf16.msra.mxu0 0
        %1902 = vmatprep.subr.bf16.mxu0 0
        %1903 = vmatpush1.bf16.msra.mxu0 0
        %1904 = vmatprep.subr.bf16.mxu0 0
        %1905 = vmatpush1.bf16.msra.mxu0 0
        %1906 = vmatprep.subr.bf16.mxu0 0
        %1907 = vmatpush1.bf16.msra.mxu0 0
        %1908 = vmatprep.subr.bf16.mxu0 0
        %1909 = vmatpush1.bf16.msra.mxu0 0
        %1910 = vmatprep.subr.bf16.mxu0 0
        %1911 = vmatpush1.bf16.msra.mxu0 0
        %1912 = vmatprep.subr.bf16.mxu0 0
        %1913 = vmatpush1.bf16.msra.mxu0 0
        %1914 = vmatprep.subr.bf16.mxu0 0
        %1915 = vmatpush1.bf16.msra.mxu0 0
        %1916 = vmatprep.mubr.bf16.mxu0 0
        %1917 = vmatmul.mubr.bf16.gmra.mrb[0].mxu0 %v1681
        %v1918 = vpop.f32.mrb[0].mxu0
        %v1919 = vadd.f32 0.0, %v1918
        %v1920 = vpop.f32.mrb[0].mxu0
        %v1921 = vadd.f32 0.0, %v1920
        %v1922 = vpop.f32.mrb[0].mxu0
        %v1923 = vpop.f32.mrb[0].mxu0
        %1924 = vdwg.mxu0
        %v1925 = vadd.f32 %v1641, %v1878
        %v1926 = vadd.f32 %v1642, %v1880
        %v1927 = vadd.f32 %v1643, %v1919
        %v1928 = vadd.f32 %v1644, %v1921
        %s1929 = scalar_lea.vmem %s375, 1024 [#allocation10]
        %v1930 = vld [vmem:[%s1929] sm:$0xff]
        %v1931 = vld [vmem:[%s1929 + $0x8] sm:$0xff]
        %v1932 = vld [vmem:[%s1929 + $0x10] sm:$0xff]
        %v1933 = vld [vmem:[%s1929 + $0x18] sm:$0xff]
        %v1934 = vld [vmem:[%s1929 + $0x20] sm:$0xff]
        %v1935 = vld [vmem:[%s1929 + $0x28] sm:$0xff]
        %v1936 = vld [vmem:[%s1929 + $0x30] sm:$0xff]
        %v1937 = vld [vmem:[%s1929 + $0x38] sm:$0xff]
        %v1938 = vld [vmem:[%s1929 + $0x40] sm:$0xff]
        %v1939 = vld [vmem:[%s1929 + $0x48] sm:$0xff]
        %v1940 = vld [vmem:[%s1929 + $0x50] sm:$0xff]
        %v1941 = vld [vmem:[%s1929 + $0x58] sm:$0xff]
        %v1942 = vld [vmem:[%s1929 + $0x60] sm:$0xff]
        %v1943 = vld [vmem:[%s1929 + $0x68] sm:$0xff]
        %v1944 = vld [vmem:[%s1929 + $0x70] sm:$0xff]
        %v1945 = vld [vmem:[%s1929 + $0x78] sm:$0xff]
        %v1946 = vld [vmem:[%s1929 + $0x80] sm:$0xff]
        %v1947 = vld [vmem:[%s1929 + $0x88] sm:$0xff]
        %v1948 = vld [vmem:[%s1929 + $0x90] sm:$0xff]
        %v1949 = vld [vmem:[%s1929 + $0x98] sm:$0xff]
        %v1950 = vld [vmem:[%s1929 + $0xa0] sm:$0xff]
        %v1951 = vld [vmem:[%s1929 + $0xa8] sm:$0xff]
        %v1952 = vld [vmem:[%s1929 + $0xb0] sm:$0xff]
        %v1953 = vld [vmem:[%s1929 + $0xb8] sm:$0xff]
        %v1954 = vld [vmem:[%s1929 + $0xc0] sm:$0xff]
        %v1955 = vld [vmem:[%s1929 + $0xc8] sm:$0xff]
        %v1956 = vld [vmem:[%s1929 + $0xd0] sm:$0xff]
        %v1957 = vld [vmem:[%s1929 + $0xd8] sm:$0xff]
        %v1958 = vld [vmem:[%s1929 + $0xe0] sm:$0xff]
        %v1959 = vld [vmem:[%s1929 + $0xe8] sm:$0xff]
        %v1960 = vld [vmem:[%s1929 + $0xf0] sm:$0xff]
        %v1961 = vld [vmem:[%s1929 + $0xf8] sm:$0xff]
        %v1962 = vrot.slane %v866, 4
        %v1963 = vrot.slane %v867, 3
        %v1964 = vsel %vm869, %v1963, %v1962
        %v1965 = vpack.c.b16 %v1964, %v1964
        %v1999 = vunpack.c.l.b16 %v1930
        %v2000 = vunpack.c.h.b16 %v1930
        %v2001 = vunpack.c.l.b16 %v1931
        %v2002 = vunpack.c.h.b16 %v1931
        %v2003 = vunpack.c.l.b16 %v1932
        %v2004 = vunpack.c.h.b16 %v1932
        %v2005 = vunpack.c.l.b16 %v1933
        %v2006 = vunpack.c.h.b16 %v1933
        %v2007 = vunpack.c.l.b16 %v1934
        %v2008 = vunpack.c.h.b16 %v1934
        %v2009 = vunpack.c.l.b16 %v1935
        %v2010 = vunpack.c.h.b16 %v1935
        %v2011 = vunpack.c.l.b16 %v1936
        %v2012 = vunpack.c.h.b16 %v1936
        %v2013 = vunpack.c.l.b16 %v1937
        %v2014 = vunpack.c.h.b16 %v1937
        %v2015 = vunpack.c.l.b16 %v1938
        %v2016 = vunpack.c.h.b16 %v1938
        %v2017 = vunpack.c.l.b16 %v1939
        %v2018 = vunpack.c.h.b16 %v1939
        %v2019 = vunpack.c.l.b16 %v1940
        %v2020 = vunpack.c.h.b16 %v1940
        %v2021 = vunpack.c.l.b16 %v1941
        %v2022 = vunpack.c.h.b16 %v1941
        %v2023 = vunpack.c.l.b16 %v1942
        %v2024 = vunpack.c.h.b16 %v1942
        %v2025 = vunpack.c.l.b16 %v1943
        %v2026 = vunpack.c.h.b16 %v1943
        %v2027 = vunpack.c.l.b16 %v1944
        %v2028 = vunpack.c.h.b16 %v1944
        %v2029 = vunpack.c.l.b16 %v1945
        %v2030 = vunpack.c.h.b16 %v1945
        %v2031 = vunpack.c.l.b16 %v1946
        %v2032 = vunpack.c.h.b16 %v1946
        %v2033 = vunpack.c.l.b16 %v1947
        %v2034 = vunpack.c.h.b16 %v1947
        %v2035 = vunpack.c.l.b16 %v1948
        %v2036 = vunpack.c.h.b16 %v1948
        %v2037 = vunpack.c.l.b16 %v1949
        %v2038 = vunpack.c.h.b16 %v1949
        %v2039 = vunpack.c.l.b16 %v1950
        %v2040 = vunpack.c.h.b16 %v1950
        %v2041 = vunpack.c.l.b16 %v1951
        %v2042 = vunpack.c.h.b16 %v1951
        %v2043 = vunpack.c.l.b16 %v1952
        %v2044 = vunpack.c.h.b16 %v1952
        %v2045 = vunpack.c.l.b16 %v1953
        %v2046 = vunpack.c.h.b16 %v1953
        %v2047 = vunpack.c.l.b16 %v1954
        %v2048 = vunpack.c.h.b16 %v1954
        %v2049 = vunpack.c.l.b16 %v1955
        %v2050 = vunpack.c.h.b16 %v1955
        %v2051 = vunpack.c.l.b16 %v1956
        %v2052 = vunpack.c.h.b16 %v1956
        %v2053 = vunpack.c.l.b16 %v1957
        %v2054 = vunpack.c.h.b16 %v1957
        %v2055 = vunpack.c.l.b16 %v1958
        %v2056 = vunpack.c.h.b16 %v1958
        %v2057 = vunpack.c.l.b16 %v1959
        %v2058 = vunpack.c.h.b16 %v1959
        %v2059 = vunpack.c.l.b16 %v1960
        %v2060 = vunpack.c.h.b16 %v1960
        %v2061 = vunpack.c.l.b16 %v1961
        %v2062 = vunpack.c.h.b16 %v1961
        %v2063 = vpack.c.b16 %v2003, %v1999
        %v2064 = vpack.c.b16 %v2004, %v2000
        %v2065 = vpack.c.b16 %v2005, %v2001
        %v2066 = vpack.c.b16 %v2006, %v2002
        %v2067 = vpack.c.b16 %v2011, %v2007
        %v2068 = vpack.c.b16 %v2012, %v2008
        %v2069 = vpack.c.b16 %v2013, %v2009
        %v2070 = vpack.c.b16 %v2014, %v2010
        %v2071 = vpack.c.b16 %v2019, %v2015
        %v2072 = vpack.c.b16 %v2020, %v2016
        %v2073 = vpack.c.b16 %v2021, %v2017
        %v2074 = vpack.c.b16 %v2022, %v2018
        %v2075 = vpack.c.b16 %v2027, %v2023
        %v2076 = vpack.c.b16 %v2028, %v2024
        %v2077 = vpack.c.b16 %v2029, %v2025
        %v2078 = vpack.c.b16 %v2030, %v2026
        %v2079 = vpack.c.b16 %v2035, %v2031
        %v2080 = vpack.c.b16 %v2036, %v2032
        %v2081 = vpack.c.b16 %v2037, %v2033
        %v2082 = vpack.c.b16 %v2038, %v2034
        %v2083 = vpack.c.b16 %v2043, %v2039
        %v2084 = vpack.c.b16 %v2044, %v2040
        %v2085 = vpack.c.b16 %v2045, %v2041
        %v2086 = vpack.c.b16 %v2046, %v2042
        %v2087 = vpack.c.b16 %v2051, %v2047
        %v2088 = vpack.c.b16 %v2052, %v2048
        %v2089 = vpack.c.b16 %v2053, %v2049
        %v2090 = vpack.c.b16 %v2054, %v2050
        %v2091 = vpack.c.b16 %v2059, %v2055
        %v2092 = vpack.c.b16 %v2060, %v2056
        %v2093 = vpack.c.b16 %v2061, %v2057
        %v2094 = vpack.c.b16 %v2062, %v2058
        %2127 = vmatprep.subr.bf16.mxu0 %v2064
        %2128 = vmatpush1.bf16.msra.mxu0 %v2063
        %2129 = vmatprep.subr.bf16.mxu0 %v2068
        %2130 = vmatpush1.bf16.msra.mxu0 %v2067
        %2131 = vmatprep.subr.bf16.mxu0 %v2072
        %2132 = vmatpush1.bf16.msra.mxu0 %v2071
        %2133 = vmatprep.subr.bf16.mxu0 %v2076
        %2134 = vmatpush1.bf16.msra.mxu0 %v2075
        %2135 = vmatprep.subr.bf16.mxu0 %v2080
        %2136 = vmatpush1.bf16.msra.mxu0 %v2079
        %2137 = vmatprep.subr.bf16.mxu0 %v2084
        %2138 = vmatpush1.bf16.msra.mxu0 %v2083
        %2139 = vmatprep.subr.bf16.mxu0 %v2088
        %2140 = vmatpush1.bf16.msra.mxu0 %v2087
        %2141 = vmatprep.subr.bf16.mxu0 %v2092
        %2142 = vmatpush1.bf16.msra.mxu0 %v2091
        %2143 = vmatprep.subr.bf16.mxu0 0
        %2144 = vmatpush1.bf16.msra.mxu0 0
        %2145 = vmatprep.subr.bf16.mxu0 0
        %2146 = vmatpush1.bf16.msra.mxu0 0
        %2147 = vmatprep.subr.bf16.mxu0 0
        %2148 = vmatpush1.bf16.msra.mxu0 0
        %2149 = vmatprep.subr.bf16.mxu0 0
        %2150 = vmatpush1.bf16.msra.mxu0 0
        %2151 = vmatprep.subr.bf16.mxu0 0
        %2152 = vmatpush1.bf16.msra.mxu0 0
        %2153 = vmatprep.subr.bf16.mxu0 0
        %2154 = vmatpush1.bf16.msra.mxu0 0
        %2155 = vmatprep.subr.bf16.mxu0 0
        %2156 = vmatpush1.bf16.msra.mxu0 0
        %2157 = vmatprep.subr.bf16.mxu0 0
        %2158 = vmatpush1.bf16.msra.mxu0 0
        %2159 = vmatprep.mubr.bf16.mxu0 0
        %2160 = vmatmul.mubr.bf16.gmra.mrb[0].mxu0 %v1965
        %v2161 = vpop.f32.mrb[0].mxu0
        %v2162 = vadd.f32 0.0, %v2161
        %v2163 = vpop.f32.mrb[0].mxu0
        %v2164 = vadd.f32 0.0, %v2163
        %v2165 = vpop.f32.mrb[0].mxu0
        %v2166 = vpop.f32.mrb[0].mxu0
        %2167 = vdwg.mxu0
        %2168 = vmatprep.subr.bf16.mxu0 %v2066
        %2169 = vmatpush1.bf16.msra.mxu0 %v2065
        %2170 = vmatprep.subr.bf16.mxu0 %v2070
        %2171 = vmatpush1.bf16.msra.mxu0 %v2069
        %2172 = vmatprep.subr.bf16.mxu0 %v2074
        %2173 = vmatpush1.bf16.msra.mxu0 %v2073
        %2174 = vmatprep.subr.bf16.mxu0 %v2078
        %2175 = vmatpush1.bf16.msra.mxu0 %v2077
        %2176 = vmatprep.subr.bf16.mxu0 %v2082
        %2177 = vmatpush1.bf16.msra.mxu0 %v2081
        %2178 = vmatprep.subr.bf16.mxu0 %v2086
        %2179 = vmatpush1.bf16.msra.mxu0 %v2085
        %2180 = vmatprep.subr.bf16.mxu0 %v2090
        %2181 = vmatpush1.bf16.msra.mxu0 %v2089
        %2182 = vmatprep.subr.bf16.mxu0 %v2094
        %2183 = vmatpush1.bf16.msra.mxu0 %v2093
        %2184 = vmatprep.subr.bf16.mxu0 0
        %2185 = vmatpush1.bf16.msra.mxu0 0
        %2186 = vmatprep.subr.bf16.mxu0 0
        %2187 = vmatpush1.bf16.msra.mxu0 0
        %2188 = vmatprep.subr.bf16.mxu0 0
        %2189 = vmatpush1.bf16.msra.mxu0 0
        %2190 = vmatprep.subr.bf16.mxu0 0
        %2191 = vmatpush1.bf16.msra.mxu0 0
        %2192 = vmatprep.subr.bf16.mxu0 0
        %2193 = vmatpush1.bf16.msra.mxu0 0
        %2194 = vmatprep.subr.bf16.mxu0 0
        %2195 = vmatpush1.bf16.msra.mxu0 0
        %2196 = vmatprep.subr.bf16.mxu0 0
        %2197 = vmatpush1.bf16.msra.mxu0 0
        %2198 = vmatprep.subr.bf16.mxu0 0
        %2199 = vmatpush1.bf16.msra.mxu0 0
        %2200 = vmatprep.mubr.bf16.mxu0 0
        %2201 = vmatmul.mubr.bf16.gmra.mrb[0].mxu0 %v1965
        %v2202 = vpop.f32.mrb[0].mxu0
        %v2203 = vadd.f32 0.0, %v2202
        %v2204 = vpop.f32.mrb[0].mxu0
        %v2205 = vadd.f32 0.0, %v2204
        %v2206 = vpop.f32.mrb[0].mxu0
        %v2207 = vpop.f32.mrb[0].mxu0
        %2208 = vdwg.mxu0
        %v2209 = vadd.f32 %v1925, %v2162
        %v2210 = vadd.f32 %v1926, %v2164
        %v2211 = vadd.f32 %v1927, %v2203
        %v2212 = vadd.f32 %v1928, %v2205
        %s2213 = scalar_lea.vmem %s375, 1280 [#allocation10]
        %v2214 = vld [vmem:[%s2213] sm:$0xff]
        %v2215 = vld [vmem:[%s2213 + $0x8] sm:$0xff]
        %v2216 = vld [vmem:[%s2213 + $0x10] sm:$0xff]
        %v2217 = vld [vmem:[%s2213 + $0x18] sm:$0xff]
        %v2218 = vld [vmem:[%s2213 + $0x20] sm:$0xff]
        %v2219 = vld [vmem:[%s2213 + $0x28] sm:$0xff]
        %v2220 = vld [vmem:[%s2213 + $0x30] sm:$0xff]
        %v2221 = vld [vmem:[%s2213 + $0x38] sm:$0xff]
        %v2222 = vld [vmem:[%s2213 + $0x40] sm:$0xff]
        %v2223 = vld [vmem:[%s2213 + $0x48] sm:$0xff]
        %v2224 = vld [vmem:[%s2213 + $0x50] sm:$0xff]
        %v2225 = vld [vmem:[%s2213 + $0x58] sm:$0xff]
        %v2226 = vld [vmem:[%s2213 + $0x60] sm:$0xff]
        %v2227 = vld [vmem:[%s2213 + $0x68] sm:$0xff]
        %v2228 = vld [vmem:[%s2213 + $0x70] sm:$0xff]
        %v2229 = vld [vmem:[%s2213 + $0x78] sm:$0xff]
        %v2230 = vld [vmem:[%s2213 + $0x80] sm:$0xff]
        %v2231 = vld [vmem:[%s2213 + $0x88] sm:$0xff]
        %v2232 = vld [vmem:[%s2213 + $0x90] sm:$0xff]
        %v2233 = vld [vmem:[%s2213 + $0x98] sm:$0xff]
        %v2234 = vld [vmem:[%s2213 + $0xa0] sm:$0xff]
        %v2235 = vld [vmem:[%s2213 + $0xa8] sm:$0xff]
        %v2236 = vld [vmem:[%s2213 + $0xb0] sm:$0xff]
        %v2237 = vld [vmem:[%s2213 + $0xb8] sm:$0xff]
        %v2238 = vld [vmem:[%s2213 + $0xc0] sm:$0xff]
        %v2239 = vld [vmem:[%s2213 + $0xc8] sm:$0xff]
        %v2240 = vld [vmem:[%s2213 + $0xd0] sm:$0xff]
        %v2241 = vld [vmem:[%s2213 + $0xd8] sm:$0xff]
        %v2242 = vld [vmem:[%s2213 + $0xe0] sm:$0xff]
        %v2243 = vld [vmem:[%s2213 + $0xe8] sm:$0xff]
        %v2244 = vld [vmem:[%s2213 + $0xf0] sm:$0xff]
        %v2245 = vld [vmem:[%s2213 + $0xf8] sm:$0xff]
        %v2246 = vrot.slane %v866, 5
        %v2247 = vrot.slane %v867, 4
        %v2248 = vsel %vm869, %v2247, %v2246
        %v2249 = vpack.c.b16 %v2248, %v2248
        %v2283 = vunpack.c.l.b16 %v2214
        %v2284 = vunpack.c.h.b16 %v2214
        %v2285 = vunpack.c.l.b16 %v2215
        %v2286 = vunpack.c.h.b16 %v2215
        %v2287 = vunpack.c.l.b16 %v2216
        %v2288 = vunpack.c.h.b16 %v2216
        %v2289 = vunpack.c.l.b16 %v2217
        %v2290 = vunpack.c.h.b16 %v2217
        %v2291 = vunpack.c.l.b16 %v2218
        %v2292 = vunpack.c.h.b16 %v2218
        %v2293 = vunpack.c.l.b16 %v2219
        %v2294 = vunpack.c.h.b16 %v2219
        %v2295 = vunpack.c.l.b16 %v2220
        %v2296 = vunpack.c.h.b16 %v2220
        %v2297 = vunpack.c.l.b16 %v2221
        %v2298 = vunpack.c.h.b16 %v2221
        %v2299 = vunpack.c.l.b16 %v2222
        %v2300 = vunpack.c.h.b16 %v2222
        %v2301 = vunpack.c.l.b16 %v2223
        %v2302 = vunpack.c.h.b16 %v2223
        %v2303 = vunpack.c.l.b16 %v2224
        %v2304 = vunpack.c.h.b16 %v2224
        %v2305 = vunpack.c.l.b16 %v2225
        %v2306 = vunpack.c.h.b16 %v2225
        %v2307 = vunpack.c.l.b16 %v2226
        %v2308 = vunpack.c.h.b16 %v2226
        %v2309 = vunpack.c.l.b16 %v2227
        %v2310 = vunpack.c.h.b16 %v2227
        %v2311 = vunpack.c.l.b16 %v2228
        %v2312 = vunpack.c.h.b16 %v2228
        %v2313 = vunpack.c.l.b16 %v2229
        %v2314 = vunpack.c.h.b16 %v2229
        %v2315 = vunpack.c.l.b16 %v2230
        %v2316 = vunpack.c.h.b16 %v2230
        %v2317 = vunpack.c.l.b16 %v2231
        %v2318 = vunpack.c.h.b16 %v2231
        %v2319 = vunpack.c.l.b16 %v2232
        %v2320 = vunpack.c.h.b16 %v2232
        %v2321 = vunpack.c.l.b16 %v2233
        %v2322 = vunpack.c.h.b16 %v2233
        %v2323 = vunpack.c.l.b16 %v2234
        %v2324 = vunpack.c.h.b16 %v2234
        %v2325 = vunpack.c.l.b16 %v2235
        %v2326 = vunpack.c.h.b16 %v2235
        %v2327 = vunpack.c.l.b16 %v2236
        %v2328 = vunpack.c.h.b16 %v2236
        %v2329 = vunpack.c.l.b16 %v2237
        %v2330 = vunpack.c.h.b16 %v2237
        %v2331 = vunpack.c.l.b16 %v2238
        %v2332 = vunpack.c.h.b16 %v2238
        %v2333 = vunpack.c.l.b16 %v2239
        %v2334 = vunpack.c.h.b16 %v2239
        %v2335 = vunpack.c.l.b16 %v2240
        %v2336 = vunpack.c.h.b16 %v2240
        %v2337 = vunpack.c.l.b16 %v2241
        %v2338 = vunpack.c.h.b16 %v2241
        %v2339 = vunpack.c.l.b16 %v2242
        %v2340 = vunpack.c.h.b16 %v2242
        %v2341 = vunpack.c.l.b16 %v2243
        %v2342 = vunpack.c.h.b16 %v2243
        %v2343 = vunpack.c.l.b16 %v2244
        %v2344 = vunpack.c.h.b16 %v2244
        %v2345 = vunpack.c.l.b16 %v2245
        %v2346 = vunpack.c.h.b16 %v2245
        %v2347 = vpack.c.b16 %v2287, %v2283
        %v2348 = vpack.c.b16 %v2288, %v2284
        %v2349 = vpack.c.b16 %v2289, %v2285
        %v2350 = vpack.c.b16 %v2290, %v2286
        %v2351 = vpack.c.b16 %v2295, %v2291
        %v2352 = vpack.c.b16 %v2296, %v2292
        %v2353 = vpack.c.b16 %v2297, %v2293
        %v2354 = vpack.c.b16 %v2298, %v2294
        %v2355 = vpack.c.b16 %v2303, %v2299
        %v2356 = vpack.c.b16 %v2304, %v2300
        %v2357 = vpack.c.b16 %v2305, %v2301
        %v2358 = vpack.c.b16 %v2306, %v2302
        %v2359 = vpack.c.b16 %v2311, %v2307
        %v2360 = vpack.c.b16 %v2312, %v2308
        %v2361 = vpack.c.b16 %v2313, %v2309
        %v2362 = vpack.c.b16 %v2314, %v2310
        %v2363 = vpack.c.b16 %v2319, %v2315
        %v2364 = vpack.c.b16 %v2320, %v2316
        %v2365 = vpack.c.b16 %v2321, %v2317
        %v2366 = vpack.c.b16 %v2322, %v2318
        %v2367 = vpack.c.b16 %v2327, %v2323
        %v2368 = vpack.c.b16 %v2328, %v2324
        %v2369 = vpack.c.b16 %v2329, %v2325
        %v2370 = vpack.c.b16 %v2330, %v2326
        %v2371 = vpack.c.b16 %v2335, %v2331
        %v2372 = vpack.c.b16 %v2336, %v2332
        %v2373 = vpack.c.b16 %v2337, %v2333
        %v2374 = vpack.c.b16 %v2338, %v2334
        %v2375 = vpack.c.b16 %v2343, %v2339
        %v2376 = vpack.c.b16 %v2344, %v2340
        %v2377 = vpack.c.b16 %v2345, %v2341
        %v2378 = vpack.c.b16 %v2346, %v2342
        %2411 = vmatprep.subr.bf16.mxu0 %v2348
        %2412 = vmatpush1.bf16.msra.mxu0 %v2347
        %2413 = vmatprep.subr.bf16.mxu0 %v2352
        %2414 = vmatpush1.bf16.msra.mxu0 %v2351
        %2415 = vmatprep.subr.bf16.mxu0 %v2356
        %2416 = vmatpush1.bf16.msra.mxu0 %v2355
        %2417 = vmatprep.subr.bf16.mxu0 %v2360
        %2418 = vmatpush1.bf16.msra.mxu0 %v2359
        %2419 = vmatprep.subr.bf16.mxu0 %v2364
        %2420 = vmatpush1.bf16.msra.mxu0 %v2363
        %2421 = vmatprep.subr.bf16.mxu0 %v2368
        %2422 = vmatpush1.bf16.msra.mxu0 %v2367
        %2423 = vmatprep.subr.bf16.mxu0 %v2372
        %2424 = vmatpush1.bf16.msra.mxu0 %v2371
        %2425 = vmatprep.subr.bf16.mxu0 %v2376
        %2426 = vmatpush1.bf16.msra.mxu0 %v2375
        %2427 = vmatprep.subr.bf16.mxu0 0
        %2428 = vmatpush1.bf16.msra.mxu0 0
        %2429 = vmatprep.subr.bf16.mxu0 0
        %2430 = vmatpush1.bf16.msra.mxu0 0
        %2431 = vmatprep.subr.bf16.mxu0 0
        %2432 = vmatpush1.bf16.msra.mxu0 0
        %2433 = vmatprep.subr.bf16.mxu0 0
        %2434 = vmatpush1.bf16.msra.mxu0 0
        %2435 = vmatprep.subr.bf16.mxu0 0
        %2436 = vmatpush1.bf16.msra.mxu0 0
        %2437 = vmatprep.subr.bf16.mxu0 0
        %2438 = vmatpush1.bf16.msra.mxu0 0
        %2439 = vmatprep.subr.bf16.mxu0 0
        %2440 = vmatpush1.bf16.msra.mxu0 0
        %2441 = vmatprep.subr.bf16.mxu0 0
        %2442 = vmatpush1.bf16.msra.mxu0 0
        %2443 = vmatprep.mubr.bf16.mxu0 0
        %2444 = vmatmul.mubr.bf16.gmra.mrb[0].mxu0 %v2249
        %v2445 = vpop.f32.mrb[0].mxu0
        %v2446 = vadd.f32 0.0, %v2445
        %v2447 = vpop.f32.mrb[0].mxu0
        %v2448 = vadd.f32 0.0, %v2447
        %v2449 = vpop.f32.mrb[0].mxu0
        %v2450 = vpop.f32.mrb[0].mxu0
        %2451 = vdwg.mxu0
        %2452 = vmatprep.subr.bf16.mxu0 %v2350
        %2453 = vmatpush1.bf16.msra.mxu0 %v2349
        %2454 = vmatprep.subr.bf16.mxu0 %v2354
        %2455 = vmatpush1.bf16.msra.mxu0 %v2353
        %2456 = vmatprep.subr.bf16.mxu0 %v2358
        %2457 = vmatpush1.bf16.msra.mxu0 %v2357
        %2458 = vmatprep.subr.bf16.mxu0 %v2362
        %2459 = vmatpush1.bf16.msra.mxu0 %v2361
        %2460 = vmatprep.subr.bf16.mxu0 %v2366
        %2461 = vmatpush1.bf16.msra.mxu0 %v2365
        %2462 = vmatprep.subr.bf16.mxu0 %v2370
        %2463 = vmatpush1.bf16.msra.mxu0 %v2369
        %2464 = vmatprep.subr.bf16.mxu0 %v2374
        %2465 = vmatpush1.bf16.msra.mxu0 %v2373
        %2466 = vmatprep.subr.bf16.mxu0 %v2378
        %2467 = vmatpush1.bf16.msra.mxu0 %v2377
        %2468 = vmatprep.subr.bf16.mxu0 0
        %2469 = vmatpush1.bf16.msra.mxu0 0
        %2470 = vmatprep.subr.bf16.mxu0 0
        %2471 = vmatpush1.bf16.msra.mxu0 0
        %2472 = vmatprep.subr.bf16.mxu0 0
        %2473 = vmatpush1.bf16.msra.mxu0 0
        %2474 = vmatprep.subr.bf16.mxu0 0
        %2475 = vmatpush1.bf16.msra.mxu0 0
        %2476 = vmatprep.subr.bf16.mxu0 0
        %2477 = vmatpush1.bf16.msra.mxu0 0
        %2478 = vmatprep.subr.bf16.mxu0 0
        %2479 = vmatpush1.bf16.msra.mxu0 0
        %2480 = vmatprep.subr.bf16.mxu0 0
        %2481 = vmatpush1.bf16.msra.mxu0 0
        %2482 = vmatprep.subr.bf16.mxu0 0
        %2483 = vmatpush1.bf16.msra.mxu0 0
        %2484 = vmatprep.mubr.bf16.mxu0 0
        %2485 = vmatmul.mubr.bf16.gmra.mrb[0].mxu0 %v2249
        %v2486 = vpop.f32.mrb[0].mxu0
        %v2487 = vadd.f32 0.0, %v2486
        %v2488 = vpop.f32.mrb[0].mxu0
        %v2489 = vadd.f32 0.0, %v2488
        %v2490 = vpop.f32.mrb[0].mxu0
        %v2491 = vpop.f32.mrb[0].mxu0
        %2492 = vdwg.mxu0
        %v2493 = vadd.f32 %v2209, %v2446
        %v2494 = vadd.f32 %v2210, %v2448
        %v2495 = vadd.f32 %v2211, %v2487
        %v2496 = vadd.f32 %v2212, %v2489
        %s2497 = scalar_lea.vmem %s375, 1536 [#allocation10]
        %v2498 = vld [vmem:[%s2497] sm:$0xff]
        %v2499 = vld [vmem:[%s2497 + $0x8] sm:$0xff]
        %v2500 = vld [vmem:[%s2497 + $0x10] sm:$0xff]
        %v2501 = vld [vmem:[%s2497 + $0x18] sm:$0xff]
        %v2502 = vld [vmem:[%s2497 + $0x20] sm:$0xff]
        %v2503 = vld [vmem:[%s2497 + $0x28] sm:$0xff]
        %v2504 = vld [vmem:[%s2497 + $0x30] sm:$0xff]
        %v2505 = vld [vmem:[%s2497 + $0x38] sm:$0xff]
        %v2506 = vld [vmem:[%s2497 + $0x40] sm:$0xff]
        %v2507 = vld [vmem:[%s2497 + $0x48] sm:$0xff]
        %v2508 = vld [vmem:[%s2497 + $0x50] sm:$0xff]
        %v2509 = vld [vmem:[%s2497 + $0x58] sm:$0xff]
        %v2510 = vld [vmem:[%s2497 + $0x60] sm:$0xff]
        %v2511 = vld [vmem:[%s2497 + $0x68] sm:$0xff]
        %v2512 = vld [vmem:[%s2497 + $0x70] sm:$0xff]
        %v2513 = vld [vmem:[%s2497 + $0x78] sm:$0xff]
        %v2514 = vld [vmem:[%s2497 + $0x80] sm:$0xff]
        %v2515 = vld [vmem:[%s2497 + $0x88] sm:$0xff]
        %v2516 = vld [vmem:[%s2497 + $0x90] sm:$0xff]
        %v2517 = vld [vmem:[%s2497 + $0x98] sm:$0xff]
        %v2518 = vld [vmem:[%s2497 + $0xa0] sm:$0xff]
        %v2519 = vld [vmem:[%s2497 + $0xa8] sm:$0xff]
        %v2520 = vld [vmem:[%s2497 + $0xb0] sm:$0xff]
        %v2521 = vld [vmem:[%s2497 + $0xb8] sm:$0xff]
        %v2522 = vld [vmem:[%s2497 + $0xc0] sm:$0xff]
        %v2523 = vld [vmem:[%s2497 + $0xc8] sm:$0xff]
        %v2524 = vld [vmem:[%s2497 + $0xd0] sm:$0xff]
        %v2525 = vld [vmem:[%s2497 + $0xd8] sm:$0xff]
        %v2526 = vld [vmem:[%s2497 + $0xe0] sm:$0xff]
        %v2527 = vld [vmem:[%s2497 + $0xe8] sm:$0xff]
        %v2528 = vld [vmem:[%s2497 + $0xf0] sm:$0xff]
        %v2529 = vld [vmem:[%s2497 + $0xf8] sm:$0xff]
        %v2530 = vrot.slane %v866, 6
        %v2531 = vrot.slane %v867, 5
        %v2532 = vsel %vm869, %v2531, %v2530
        %v2533 = vpack.c.b16 %v2532, %v2532
        %v2567 = vunpack.c.l.b16 %v2498
        %v2568 = vunpack.c.h.b16 %v2498
        %v2569 = vunpack.c.l.b16 %v2499
        %v2570 = vunpack.c.h.b16 %v2499
        %v2571 = vunpack.c.l.b16 %v2500
        %v2572 = vunpack.c.h.b16 %v2500
        %v2573 = vunpack.c.l.b16 %v2501
        %v2574 = vunpack.c.h.b16 %v2501
        %v2575 = vunpack.c.l.b16 %v2502
        %v2576 = vunpack.c.h.b16 %v2502
        %v2577 = vunpack.c.l.b16 %v2503
        %v2578 = vunpack.c.h.b16 %v2503
        %v2579 = vunpack.c.l.b16 %v2504
        %v2580 = vunpack.c.h.b16 %v2504
        %v2581 = vunpack.c.l.b16 %v2505
        %v2582 = vunpack.c.h.b16 %v2505
        %v2583 = vunpack.c.l.b16 %v2506
        %v2584 = vunpack.c.h.b16 %v2506
        %v2585 = vunpack.c.l.b16 %v2507
        %v2586 = vunpack.c.h.b16 %v2507
        %v2587 = vunpack.c.l.b16 %v2508
        %v2588 = vunpack.c.h.b16 %v2508
        %v2589 = vunpack.c.l.b16 %v2509
        %v2590 = vunpack.c.h.b16 %v2509
        %v2591 = vunpack.c.l.b16 %v2510
        %v2592 = vunpack.c.h.b16 %v2510
        %v2593 = vunpack.c.l.b16 %v2511
        %v2594 = vunpack.c.h.b16 %v2511
        %v2595 = vunpack.c.l.b16 %v2512
        %v2596 = vunpack.c.h.b16 %v2512
        %v2597 = vunpack.c.l.b16 %v2513
        %v2598 = vunpack.c.h.b16 %v2513
        %v2599 = vunpack.c.l.b16 %v2514
        %v2600 = vunpack.c.h.b16 %v2514
        %v2601 = vunpack.c.l.b16 %v2515
        %v2602 = vunpack.c.h.b16 %v2515
        %v2603 = vunpack.c.l.b16 %v2516
        %v2604 = vunpack.c.h.b16 %v2516
        %v2605 = vunpack.c.l.b16 %v2517
        %v2606 = vunpack.c.h.b16 %v2517
        %v2607 = vunpack.c.l.b16 %v2518
        %v2608 = vunpack.c.h.b16 %v2518
        %v2609 = vunpack.c.l.b16 %v2519
        %v2610 = vunpack.c.h.b16 %v2519
        %v2611 = vunpack.c.l.b16 %v2520
        %v2612 = vunpack.c.h.b16 %v2520
        %v2613 = vunpack.c.l.b16 %v2521
        %v2614 = vunpack.c.h.b16 %v2521
        %v2615 = vunpack.c.l.b16 %v2522
        %v2616 = vunpack.c.h.b16 %v2522
        %v2617 = vunpack.c.l.b16 %v2523
        %v2618 = vunpack.c.h.b16 %v2523
        %v2619 = vunpack.c.l.b16 %v2524
        %v2620 = vunpack.c.h.b16 %v2524
        %v2621 = vunpack.c.l.b16 %v2525
        %v2622 = vunpack.c.h.b16 %v2525
        %v2623 = vunpack.c.l.b16 %v2526
        %v2624 = vunpack.c.h.b16 %v2526
        %v2625 = vunpack.c.l.b16 %v2527
        %v2626 = vunpack.c.h.b16 %v2527
        %v2627 = vunpack.c.l.b16 %v2528
        %v2628 = vunpack.c.h.b16 %v2528
        %v2629 = vunpack.c.l.b16 %v2529
        %v2630 = vunpack.c.h.b16 %v2529
        %v2631 = vpack.c.b16 %v2571, %v2567
        %v2632 = vpack.c.b16 %v2572, %v2568
        %v2633 = vpack.c.b16 %v2573, %v2569
        %v2634 = vpack.c.b16 %v2574, %v2570
        %v2635 = vpack.c.b16 %v2579, %v2575
        %v2636 = vpack.c.b16 %v2580, %v2576
        %v2637 = vpack.c.b16 %v2581, %v2577
        %v2638 = vpack.c.b16 %v2582, %v2578
        %v2639 = vpack.c.b16 %v2587, %v2583
        %v2640 = vpack.c.b16 %v2588, %v2584
        %v2641 = vpack.c.b16 %v2589, %v2585
        %v2642 = vpack.c.b16 %v2590, %v2586
        %v2643 = vpack.c.b16 %v2595, %v2591
        %v2644 = vpack.c.b16 %v2596, %v2592
        %v2645 = vpack.c.b16 %v2597, %v2593
        %v2646 = vpack.c.b16 %v2598, %v2594
        %v2647 = vpack.c.b16 %v2603, %v2599
        %v2648 = vpack.c.b16 %v2604, %v2600
        %v2649 = vpack.c.b16 %v2605, %v2601
        %v2650 = vpack.c.b16 %v2606, %v2602
        %v2651 = vpack.c.b16 %v2611, %v2607
        %v2652 = vpack.c.b16 %v2612, %v2608
        %v2653 = vpack.c.b16 %v2613, %v2609
        %v2654 = vpack.c.b16 %v2614, %v2610
        %v2655 = vpack.c.b16 %v2619, %v2615
        %v2656 = vpack.c.b16 %v2620, %v2616
        %v2657 = vpack.c.b16 %v2621, %v2617
        %v2658 = vpack.c.b16 %v2622, %v2618
        %v2659 = vpack.c.b16 %v2627, %v2623
        %v2660 = vpack.c.b16 %v2628, %v2624
        %v2661 = vpack.c.b16 %v2629, %v2625
        %v2662 = vpack.c.b16 %v2630, %v2626
        %2695 = vmatprep.subr.bf16.mxu0 %v2632
        %2696 = vmatpush1.bf16.msra.mxu0 %v2631
        %2697 = vmatprep.subr.bf16.mxu0 %v2636
        %2698 = vmatpush1.bf16.msra.mxu0 %v2635
        %2699 = vmatprep.subr.bf16.mxu0 %v2640
        %2700 = vmatpush1.bf16.msra.mxu0 %v2639
        %2701 = vmatprep.subr.bf16.mxu0 %v2644
        %2702 = vmatpush1.bf16.msra.mxu0 %v2643
        %2703 = vmatprep.subr.bf16.mxu0 %v2648
        %2704 = vmatpush1.bf16.msra.mxu0 %v2647
        %2705 = vmatprep.subr.bf16.mxu0 %v2652
        %2706 = vmatpush1.bf16.msra.mxu0 %v2651
        %2707 = vmatprep.subr.bf16.mxu0 %v2656
        %2708 = vmatpush1.bf16.msra.mxu0 %v2655
        %2709 = vmatprep.subr.bf16.mxu0 %v2660
        %2710 = vmatpush1.bf16.msra.mxu0 %v2659
        %2711 = vmatprep.subr.bf16.mxu0 0
        %2712 = vmatpush1.bf16.msra.mxu0 0
        %2713 = vmatprep.subr.bf16.mxu0 0
        %2714 = vmatpush1.bf16.msra.mxu0 0
        %2715 = vmatprep.subr.bf16.mxu0 0
        %2716 = vmatpush1.bf16.msra.mxu0 0
        %2717 = vmatprep.subr.bf16.mxu0 0
        %2718 = vmatpush1.bf16.msra.mxu0 0
        %2719 = vmatprep.subr.bf16.mxu0 0
        %2720 = vmatpush1.bf16.msra.mxu0 0
        %2721 = vmatprep.subr.bf16.mxu0 0
        %2722 = vmatpush1.bf16.msra.mxu0 0
        %2723 = vmatprep.subr.bf16.mxu0 0
        %2724 = vmatpush1.bf16.msra.mxu0 0
        %2725 = vmatprep.subr.bf16.mxu0 0
        %2726 = vmatpush1.bf16.msra.mxu0 0
        %2727 = vmatprep.mubr.bf16.mxu0 0
        %2728 = vmatmul.mubr.bf16.gmra.mrb[0].mxu0 %v2533
        %v2729 = vpop.f32.mrb[0].mxu0
        %v2730 = vadd.f32 0.0, %v2729
        %v2731 = vpop.f32.mrb[0].mxu0
        %v2732 = vadd.f32 0.0, %v2731
        %v2733 = vpop.f32.mrb[0].mxu0
        %v2734 = vpop.f32.mrb[0].mxu0
        %2735 = vdwg.mxu0
        %2736 = vmatprep.subr.bf16.mxu0 %v2634
        %2737 = vmatpush1.bf16.msra.mxu0 %v2633
        %2738 = vmatprep.subr.bf16.mxu0 %v2638
        %2739 = vmatpush1.bf16.msra.mxu0 %v2637
        %2740 = vmatprep.subr.bf16.mxu0 %v2642
        %2741 = vmatpush1.bf16.msra.mxu0 %v2641
        %2742 = vmatprep.subr.bf16.mxu0 %v2646
        %2743 = vmatpush1.bf16.msra.mxu0 %v2645
        %2744 = vmatprep.subr.bf16.mxu0 %v2650
        %2745 = vmatpush1.bf16.msra.mxu0 %v2649
        %2746 = vmatprep.subr.bf16.mxu0 %v2654
        %2747 = vmatpush1.bf16.msra.mxu0 %v2653
        %2748 = vmatprep.subr.bf16.mxu0 %v2658
        %2749 = vmatpush1.bf16.msra.mxu0 %v2657
        %2750 = vmatprep.subr.bf16.mxu0 %v2662
        %2751 = vmatpush1.bf16.msra.mxu0 %v2661
        %2752 = vmatprep.subr.bf16.mxu0 0
        %2753 = vmatpush1.bf16.msra.mxu0 0
        %2754 = vmatprep.subr.bf16.mxu0 0
        %2755 = vmatpush1.bf16.msra.mxu0 0
        %2756 = vmatprep.subr.bf16.mxu0 0
        %2757 = vmatpush1.bf16.msra.mxu0 0
        %2758 = vmatprep.subr.bf16.mxu0 0
        %2759 = vmatpush1.bf16.msra.mxu0 0
        %2760 = vmatprep.subr.bf16.mxu0 0
        %2761 = vmatpush1.bf16.msra.mxu0 0
        %2762 = vmatprep.subr.bf16.mxu0 0
        %2763 = vmatpush1.bf16.msra.mxu0 0
        %2764 = vmatprep.subr.bf16.mxu0 0
        %2765 = vmatpush1.bf16.msra.mxu0 0
        %2766 = vmatprep.subr.bf16.mxu0 0
        %2767 = vmatpush1.bf16.msra.mxu0 0
        %2768 = vmatprep.mubr.bf16.mxu0 0
        %2769 = vmatmul.mubr.bf16.gmra.mrb[0].mxu0 %v2533
        %v2770 = vpop.f32.mrb[0].mxu0
        %v2771 = vadd.f32 0.0, %v2770
        %v2772 = vpop.f32.mrb[0].mxu0
        %v2773 = vadd.f32 0.0, %v2772
        %v2774 = vpop.f32.mrb[0].mxu0
        %v2775 = vpop.f32.mrb[0].mxu0
        %2776 = vdwg.mxu0
        %v2777 = vadd.f32 %v2493, %v2730
        %v2778 = vadd.f32 %v2494, %v2732
        %v2779 = vadd.f32 %v2495, %v2771
        %v2780 = vadd.f32 %v2496, %v2773
        %s2781 = scalar_lea.vmem %s375, 1792 [#allocation10]
        %v2782 = vld [vmem:[%s2781] sm:$0xff]
        %v2783 = vld [vmem:[%s2781 + $0x8] sm:$0xff]
        %v2784 = vld [vmem:[%s2781 + $0x10] sm:$0xff]
        %v2785 = vld [vmem:[%s2781 + $0x18] sm:$0xff]
        %v2786 = vld [vmem:[%s2781 + $0x20] sm:$0xff]
        %v2787 = vld [vmem:[%s2781 + $0x28] sm:$0xff]
        %v2788 = vld [vmem:[%s2781 + $0x30] sm:$0xff]
        %v2789 = vld [vmem:[%s2781 + $0x38] sm:$0xff]
        %v2790 = vld [vmem:[%s2781 + $0x40] sm:$0xff]
        %v2791 = vld [vmem:[%s2781 + $0x48] sm:$0xff]
        %v2792 = vld [vmem:[%s2781 + $0x50] sm:$0xff]
        %v2793 = vld [vmem:[%s2781 + $0x58] sm:$0xff]
        %v2794 = vld [vmem:[%s2781 + $0x60] sm:$0xff]
        %v2795 = vld [vmem:[%s2781 + $0x68] sm:$0xff]
        %v2796 = vld [vmem:[%s2781 + $0x70] sm:$0xff]
        %v2797 = vld [vmem:[%s2781 + $0x78] sm:$0xff]
        %v2798 = vld [vmem:[%s2781 + $0x80] sm:$0xff]
        %v2799 = vld [vmem:[%s2781 + $0x88] sm:$0xff]
        %v2800 = vld [vmem:[%s2781 + $0x90] sm:$0xff]
        %v2801 = vld [vmem:[%s2781 + $0x98] sm:$0xff]
        %v2802 = vld [vmem:[%s2781 + $0xa0] sm:$0xff]
        %v2803 = vld [vmem:[%s2781 + $0xa8] sm:$0xff]
        %v2804 = vld [vmem:[%s2781 + $0xb0] sm:$0xff]
        %v2805 = vld [vmem:[%s2781 + $0xb8] sm:$0xff]
        %v2806 = vld [vmem:[%s2781 + $0xc0] sm:$0xff]
        %v2807 = vld [vmem:[%s2781 + $0xc8] sm:$0xff]
        %v2808 = vld [vmem:[%s2781 + $0xd0] sm:$0xff]
        %v2809 = vld [vmem:[%s2781 + $0xd8] sm:$0xff]
        %v2810 = vld [vmem:[%s2781 + $0xe0] sm:$0xff]
        %v2811 = vld [vmem:[%s2781 + $0xe8] sm:$0xff]
        %v2812 = vld [vmem:[%s2781 + $0xf0] sm:$0xff]
        %v2813 = vld [vmem:[%s2781 + $0xf8] sm:$0xff]
        %v2814 = vrot.slane %v866, 7
        %v2815 = vrot.slane %v867, 6
        %v2816 = vsel %vm869, %v2815, %v2814
        %v2817 = vpack.c.b16 %v2816, %v2816
        %v2851 = vunpack.c.l.b16 %v2782
        %v2852 = vunpack.c.h.b16 %v2782
        %v2853 = vunpack.c.l.b16 %v2783
        %v2854 = vunpack.c.h.b16 %v2783
        %v2855 = vunpack.c.l.b16 %v2784
        %v2856 = vunpack.c.h.b16 %v2784
        %v2857 = vunpack.c.l.b16 %v2785
        %v2858 = vunpack.c.h.b16 %v2785
        %v2859 = vunpack.c.l.b16 %v2786
        %v2860 = vunpack.c.h.b16 %v2786
        %v2861 = vunpack.c.l.b16 %v2787
        %v2862 = vunpack.c.h.b16 %v2787
        %v2863 = vunpack.c.l.b16 %v2788
        %v2864 = vunpack.c.h.b16 %v2788
        %v2865 = vunpack.c.l.b16 %v2789
        %v2866 = vunpack.c.h.b16 %v2789
        %v2867 = vunpack.c.l.b16 %v2790
        %v2868 = vunpack.c.h.b16 %v2790
        %v2869 = vunpack.c.l.b16 %v2791
        %v2870 = vunpack.c.h.b16 %v2791
        %v2871 = vunpack.c.l.b16 %v2792
        %v2872 = vunpack.c.h.b16 %v2792
        %v2873 = vunpack.c.l.b16 %v2793
        %v2874 = vunpack.c.h.b16 %v2793
        %v2875 = vunpack.c.l.b16 %v2794
        %v2876 = vunpack.c.h.b16 %v2794
        %v2877 = vunpack.c.l.b16 %v2795
        %v2878 = vunpack.c.h.b16 %v2795
        %v2879 = vunpack.c.l.b16 %v2796
        %v2880 = vunpack.c.h.b16 %v2796
        %v2881 = vunpack.c.l.b16 %v2797
        %v2882 = vunpack.c.h.b16 %v2797
        %v2883 = vunpack.c.l.b16 %v2798
        %v2884 = vunpack.c.h.b16 %v2798
        %v2885 = vunpack.c.l.b16 %v2799
        %v2886 = vunpack.c.h.b16 %v2799
        %v2887 = vunpack.c.l.b16 %v2800
        %v2888 = vunpack.c.h.b16 %v2800
        %v2889 = vunpack.c.l.b16 %v2801
        %v2890 = vunpack.c.h.b16 %v2801
        %v2891 = vunpack.c.l.b16 %v2802
        %v2892 = vunpack.c.h.b16 %v2802
        %v2893 = vunpack.c.l.b16 %v2803
        %v2894 = vunpack.c.h.b16 %v2803
        %v2895 = vunpack.c.l.b16 %v2804
        %v2896 = vunpack.c.h.b16 %v2804
        %v2897 = vunpack.c.l.b16 %v2805
        %v2898 = vunpack.c.h.b16 %v2805
        %v2899 = vunpack.c.l.b16 %v2806
        %v2900 = vunpack.c.h.b16 %v2806
        %v2901 = vunpack.c.l.b16 %v2807
        %v2902 = vunpack.c.h.b16 %v2807
        %v2903 = vunpack.c.l.b16 %v2808
        %v2904 = vunpack.c.h.b16 %v2808
        %v2905 = vunpack.c.l.b16 %v2809
        %v2906 = vunpack.c.h.b16 %v2809
        %v2907 = vunpack.c.l.b16 %v2810
        %v2908 = vunpack.c.h.b16 %v2810
        %v2909 = vunpack.c.l.b16 %v2811
        %v2910 = vunpack.c.h.b16 %v2811
        %v2911 = vunpack.c.l.b16 %v2812
        %v2912 = vunpack.c.h.b16 %v2812
        %v2913 = vunpack.c.l.b16 %v2813
        %v2914 = vunpack.c.h.b16 %v2813
        %v2915 = vpack.c.b16 %v2855, %v2851
        %v2916 = vpack.c.b16 %v2856, %v2852
        %v2917 = vpack.c.b16 %v2857, %v2853
        %v2918 = vpack.c.b16 %v2858, %v2854
        %v2919 = vpack.c.b16 %v2863, %v2859
        %v2920 = vpack.c.b16 %v2864, %v2860
        %v2921 = vpack.c.b16 %v2865, %v2861
        %v2922 = vpack.c.b16 %v2866, %v2862
        %v2923 = vpack.c.b16 %v2871, %v2867
        %v2924 = vpack.c.b16 %v2872, %v2868
        %v2925 = vpack.c.b16 %v2873, %v2869
        %v2926 = vpack.c.b16 %v2874, %v2870
        %v2927 = vpack.c.b16 %v2879, %v2875
        %v2928 = vpack.c.b16 %v2880, %v2876
        %v2929 = vpack.c.b16 %v2881, %v2877
        %v2930 = vpack.c.b16 %v2882, %v2878
        %v2931 = vpack.c.b16 %v2887, %v2883
        %v2932 = vpack.c.b16 %v2888, %v2884
        %v2933 = vpack.c.b16 %v2889, %v2885
        %v2934 = vpack.c.b16 %v2890, %v2886
        %v2935 = vpack.c.b16 %v2895, %v2891
        %v2936 = vpack.c.b16 %v2896, %v2892
        %v2937 = vpack.c.b16 %v2897, %v2893
        %v2938 = vpack.c.b16 %v2898, %v2894
        %v2939 = vpack.c.b16 %v2903, %v2899
        %v2940 = vpack.c.b16 %v2904, %v2900
        %v2941 = vpack.c.b16 %v2905, %v2901
        %v2942 = vpack.c.b16 %v2906, %v2902
        %v2943 = vpack.c.b16 %v2911, %v2907
        %v2944 = vpack.c.b16 %v2912, %v2908
        %v2945 = vpack.c.b16 %v2913, %v2909
        %v2946 = vpack.c.b16 %v2914, %v2910
        %2979 = vmatprep.subr.bf16.mxu0 %v2916
        %2980 = vmatpush1.bf16.msra.mxu0 %v2915
        %2981 = vmatprep.subr.bf16.mxu0 %v2920
        %2982 = vmatpush1.bf16.msra.mxu0 %v2919
        %2983 = vmatprep.subr.bf16.mxu0 %v2924
        %2984 = vmatpush1.bf16.msra.mxu0 %v2923
        %2985 = vmatprep.subr.bf16.mxu0 %v2928
        %2986 = vmatpush1.bf16.msra.mxu0 %v2927
        %2987 = vmatprep.subr.bf16.mxu0 %v2932
        %2988 = vmatpush1.bf16.msra.mxu0 %v2931
        %2989 = vmatprep.subr.bf16.mxu0 %v2936
        %2990 = vmatpush1.bf16.msra.mxu0 %v2935
        %2991 = vmatprep.subr.bf16.mxu0 %v2940
        %2992 = vmatpush1.bf16.msra.mxu0 %v2939
        %2993 = vmatprep.subr.bf16.mxu0 %v2944
        %2994 = vmatpush1.bf16.msra.mxu0 %v2943
        %2995 = vmatprep.subr.bf16.mxu0 0
        %2996 = vmatpush1.bf16.msra.mxu0 0
        %2997 = vmatprep.subr.bf16.mxu0 0
        %2998 = vmatpush1.bf16.msra.mxu0 0
        %2999 = vmatprep.subr.bf16.mxu0 0
        %3000 = vmatpush1.bf16.msra.mxu0 0
        %3001 = vmatprep.subr.bf16.mxu0 0
        %3002 = vmatpush1.bf16.msra.mxu0 0
        %3003 = vmatprep.subr.bf16.mxu0 0
        %3004 = vmatpush1.bf16.msra.mxu0 0
        %3005 = vmatprep.subr.bf16.mxu0 0
        %3006 = vmatpush1.bf16.msra.mxu0 0
        %3007 = vmatprep.subr.bf16.mxu0 0
        %3008 = vmatpush1.bf16.msra.mxu0 0
        %3009 = vmatprep.subr.bf16.mxu0 0
        %3010 = vmatpush1.bf16.msra.mxu0 0
        %3011 = vmatprep.mubr.bf16.mxu0 0
        %3012 = vmatmul.mubr.bf16.gmra.mrb[0].mxu0 %v2817
        %v3013 = vpop.f32.mrb[0].mxu0
        %v3014 = vadd.f32 0.0, %v3013
        %v3015 = vpop.f32.mrb[0].mxu0
        %v3016 = vadd.f32 0.0, %v3015
        %v3017 = vpop.f32.mrb[0].mxu0
        %v3018 = vpop.f32.mrb[0].mxu0
        %3019 = vdwg.mxu0
        %3020 = vmatprep.subr.bf16.mxu0 %v2918
        %3021 = vmatpush1.bf16.msra.mxu0 %v2917
        %3022 = vmatprep.subr.bf16.mxu0 %v2922
        %3023 = vmatpush1.bf16.msra.mxu0 %v2921
        %3024 = vmatprep.subr.bf16.mxu0 %v2926
        %3025 = vmatpush1.bf16.msra.mxu0 %v2925
        %3026 = vmatprep.subr.bf16.mxu0 %v2930
        %3027 = vmatpush1.bf16.msra.mxu0 %v2929
        %3028 = vmatprep.subr.bf16.mxu0 %v2934
        %3029 = vmatpush1.bf16.msra.mxu0 %v2933
        %3030 = vmatprep.subr.bf16.mxu0 %v2938
        %3031 = vmatpush1.bf16.msra.mxu0 %v2937
        %3032 = vmatprep.subr.bf16.mxu0 %v2942
        %3033 = vmatpush1.bf16.msra.mxu0 %v2941
        %3034 = vmatprep.subr.bf16.mxu0 %v2946
        %3035 = vmatpush1.bf16.msra.mxu0 %v2945
        %3036 = vmatprep.subr.bf16.mxu0 0
        %3037 = vmatpush1.bf16.msra.mxu0 0
        %3038 = vmatprep.subr.bf16.mxu0 0
        %3039 = vmatpush1.bf16.msra.mxu0 0
        %3040 = vmatprep.subr.bf16.mxu0 0
        %3041 = vmatpush1.bf16.msra.mxu0 0
        %3042 = vmatprep.subr.bf16.mxu0 0
        %3043 = vmatpush1.bf16.msra.mxu0 0
        %3044 = vmatprep.subr.bf16.mxu0 0
        %3045 = vmatpush1.bf16.msra.mxu0 0
        %3046 = vmatprep.subr.bf16.mxu0 0
        %3047 = vmatpush1.bf16.msra.mxu0 0
        %3048 = vmatprep.subr.bf16.mxu0 0
        %3049 = vmatpush1.bf16.msra.mxu0 0
        %3050 = vmatprep.subr.bf16.mxu0 0
        %3051 = vmatpush1.bf16.msra.mxu0 0
        %3052 = vmatprep.mubr.bf16.mxu0 0
        %3053 = vmatmul.mubr.bf16.gmra.mrb[0].mxu0 %v2817
        %v3054 = vpop.f32.mrb[0].mxu0
        %v3055 = vadd.f32 0.0, %v3054
        %v3056 = vpop.f32.mrb[0].mxu0
        %v3057 = vadd.f32 0.0, %v3056
        %v3058 = vpop.f32.mrb[0].mxu0
        %v3059 = vpop.f32.mrb[0].mxu0
        %3060 = vdwg.mxu0
        %v3061 = vadd.f32 %v2777, %v3014
        %v3062 = vadd.f32 %v2778, %v3016
        %v3063 = vadd.f32 %v2779, %v3055
        %v3064 = vadd.f32 %v2780, %v3057
        %s3065 = scalar_lea.vmem %s375, 2048 [#allocation10]
        %v3066 = vld [vmem:[%s3065] sm:$0xff]
        %v3067 = vld [vmem:[%s3065 + $0x8] sm:$0xff]
        %v3068 = vld [vmem:[%s3065 + $0x10] sm:$0xff]
        %v3069 = vld [vmem:[%s3065 + $0x18] sm:$0xff]
        %v3070 = vld [vmem:[%s3065 + $0x20] sm:$0xff]
        %v3071 = vld [vmem:[%s3065 + $0x28] sm:$0xff]
        %v3072 = vld [vmem:[%s3065 + $0x30] sm:$0xff]
        %v3073 = vld [vmem:[%s3065 + $0x38] sm:$0xff]
        %v3074 = vld [vmem:[%s3065 + $0x40] sm:$0xff]
        %v3075 = vld [vmem:[%s3065 + $0x48] sm:$0xff]
        %v3076 = vld [vmem:[%s3065 + $0x50] sm:$0xff]
        %v3077 = vld [vmem:[%s3065 + $0x58] sm:$0xff]
        %v3078 = vld [vmem:[%s3065 + $0x60] sm:$0xff]
        %v3079 = vld [vmem:[%s3065 + $0x68] sm:$0xff]
        %v3080 = vld [vmem:[%s3065 + $0x70] sm:$0xff]
        %v3081 = vld [vmem:[%s3065 + $0x78] sm:$0xff]
        %v3082 = vld [vmem:[%s3065 + $0x80] sm:$0xff]
        %v3083 = vld [vmem:[%s3065 + $0x88] sm:$0xff]
        %v3084 = vld [vmem:[%s3065 + $0x90] sm:$0xff]
        %v3085 = vld [vmem:[%s3065 + $0x98] sm:$0xff]
        %v3086 = vld [vmem:[%s3065 + $0xa0] sm:$0xff]
        %v3087 = vld [vmem:[%s3065 + $0xa8] sm:$0xff]
        %v3088 = vld [vmem:[%s3065 + $0xb0] sm:$0xff]
        %v3089 = vld [vmem:[%s3065 + $0xb8] sm:$0xff]
        %v3090 = vld [vmem:[%s3065 + $0xc0] sm:$0xff]
        %v3091 = vld [vmem:[%s3065 + $0xc8] sm:$0xff]
        %v3092 = vld [vmem:[%s3065 + $0xd0] sm:$0xff]
        %v3093 = vld [vmem:[%s3065 + $0xd8] sm:$0xff]
        %v3094 = vld [vmem:[%s3065 + $0xe0] sm:$0xff]
        %v3095 = vld [vmem:[%s3065 + $0xe8] sm:$0xff]
        %v3096 = vld [vmem:[%s3065 + $0xf0] sm:$0xff]
        %v3097 = vld [vmem:[%s3065 + $0xf8] sm:$0xff]
        %v3098 = vunpack.c.h.b16 %v797
        %v3099 = vunpack.c.h.b16 %v798
        %v3100 = vrot.slane %v3099, 7
        %v3101 = vsel %vm869, %v3100, %v3098
        %v3102 = vpack.c.b16 %v3101, %v3101
        %v3136 = vunpack.c.l.b16 %v3066
        %v3137 = vunpack.c.h.b16 %v3066
        %v3138 = vunpack.c.l.b16 %v3067
        %v3139 = vunpack.c.h.b16 %v3067
        %v3140 = vunpack.c.l.b16 %v3068
        %v3141 = vunpack.c.h.b16 %v3068
        %v3142 = vunpack.c.l.b16 %v3069
        %v3143 = vunpack.c.h.b16 %v3069
        %v3144 = vunpack.c.l.b16 %v3070
        %v3145 = vunpack.c.h.b16 %v3070
        %v3146 = vunpack.c.l.b16 %v3071
        %v3147 = vunpack.c.h.b16 %v3071
        %v3148 = vunpack.c.l.b16 %v3072
        %v3149 = vunpack.c.h.b16 %v3072
        %v3150 = vunpack.c.l.b16 %v3073
        %v3151 = vunpack.c.h.b16 %v3073
        %v3152 = vunpack.c.l.b16 %v3074
        %v3153 = vunpack.c.h.b16 %v3074
        %v3154 = vunpack.c.l.b16 %v3075
        %v3155 = vunpack.c.h.b16 %v3075
        %v3156 = vunpack.c.l.b16 %v3076
        %v3157 = vunpack.c.h.b16 %v3076
        %v3158 = vunpack.c.l.b16 %v3077
        %v3159 = vunpack.c.h.b16 %v3077
        %v3160 = vunpack.c.l.b16 %v3078
        %v3161 = vunpack.c.h.b16 %v3078
        %v3162 = vunpack.c.l.b16 %v3079
        %v3163 = vunpack.c.h.b16 %v3079
        %v3164 = vunpack.c.l.b16 %v3080
        %v3165 = vunpack.c.h.b16 %v3080
        %v3166 = vunpack.c.l.b16 %v3081
        %v3167 = vunpack.c.h.b16 %v3081
        %v3168 = vunpack.c.l.b16 %v3082
        %v3169 = vunpack.c.h.b16 %v3082
        %v3170 = vunpack.c.l.b16 %v3083
        %v3171 = vunpack.c.h.b16 %v3083
        %v3172 = vunpack.c.l.b16 %v3084
        %v3173 = vunpack.c.h.b16 %v3084
        %v3174 = vunpack.c.l.b16 %v3085
        %v3175 = vunpack.c.h.b16 %v3085
        %v3176 = vunpack.c.l.b16 %v3086
        %v3177 = vunpack.c.h.b16 %v3086
        %v3178 = vunpack.c.l.b16 %v3087
        %v3179 = vunpack.c.h.b16 %v3087
        %v3180 = vunpack.c.l.b16 %v3088
        %v3181 = vunpack.c.h.b16 %v3088
        %v3182 = vunpack.c.l.b16 %v3089
        %v3183 = vunpack.c.h.b16 %v3089
        %v3184 = vunpack.c.l.b16 %v3090
        %v3185 = vunpack.c.h.b16 %v3090
        %v3186 = vunpack.c.l.b16 %v3091
        %v3187 = vunpack.c.h.b16 %v3091
        %v3188 = vunpack.c.l.b16 %v3092
        %v3189 = vunpack.c.h.b16 %v3092
        %v3190 = vunpack.c.l.b16 %v3093
        %v3191 = vunpack.c.h.b16 %v3093
        %v3192 = vunpack.c.l.b16 %v3094
        %v3193 = vunpack.c.h.b16 %v3094
        %v3194 = vunpack.c.l.b16 %v3095
        %v3195 = vunpack.c.h.b16 %v3095
        %v3196 = vunpack.c.l.b16 %v3096
        %v3197 = vunpack.c.h.b16 %v3096
        %v3198 = vunpack.c.l.b16 %v3097
        %v3199 = vunpack.c.h.b16 %v3097
        %v3200 = vpack.c.b16 %v3140, %v3136
        %v3201 = vpack.c.b16 %v3141, %v3137
        %v3202 = vpack.c.b16 %v3142, %v3138
        %v3203 = vpack.c.b16 %v3143, %v3139
        %v3204 = vpack.c.b16 %v3148, %v3144
        %v3205 = vpack.c.b16 %v3149, %v3145
        %v3206 = vpack.c.b16 %v3150, %v3146
        %v3207 = vpack.c.b16 %v3151, %v3147
        %v3208 = vpack.c.b16 %v3156, %v3152
        %v3209 = vpack.c.b16 %v3157, %v3153
        %v3210 = vpack.c.b16 %v3158, %v3154
        %v3211 = vpack.c.b16 %v3159, %v3155
        %v3212 = vpack.c.b16 %v3164, %v3160
        %v3213 = vpack.c.b16 %v3165, %v3161
        %v3214 = vpack.c.b16 %v3166, %v3162
        %v3215 = vpack.c.b16 %v3167, %v3163
        %v3216 = vpack.c.b16 %v3172, %v3168
        %v3217 = vpack.c.b16 %v3173, %v3169
        %v3218 = vpack.c.b16 %v3174, %v3170
        %v3219 = vpack.c.b16 %v3175, %v3171
        %v3220 = vpack.c.b16 %v3180, %v3176
        %v3221 = vpack.c.b16 %v3181, %v3177
        %v3222 = vpack.c.b16 %v3182, %v3178
        %v3223 = vpack.c.b16 %v3183, %v3179
        %v3224 = vpack.c.b16 %v3188, %v3184
        %v3225 = vpack.c.b16 %v3189, %v3185
        %v3226 = vpack.c.b16 %v3190, %v3186
        %v3227 = vpack.c.b16 %v3191, %v3187
        %v3228 = vpack.c.b16 %v3196, %v3192
        %v3229 = vpack.c.b16 %v3197, %v3193
        %v3230 = vpack.c.b16 %v3198, %v3194
        %v3231 = vpack.c.b16 %v3199, %v3195
        %3264 = vmatprep.subr.bf16.mxu0 %v3201
        %3265 = vmatpush1.bf16.msra.mxu0 %v3200
        %3266 = vmatprep.subr.bf16.mxu0 %v3205
        %3267 = vmatpush1.bf16.msra.mxu0 %v3204
        %3268 = vmatprep.subr.bf16.mxu0 %v3209
        %3269 = vmatpush1.bf16.msra.mxu0 %v3208
        %3270 = vmatprep.subr.bf16.mxu0 %v3213
        %3271 = vmatpush1.bf16.msra.mxu0 %v3212
        %3272 = vmatprep.subr.bf16.mxu0 %v3217
        %3273 = vmatpush1.bf16.msra.mxu0 %v3216
        %3274 = vmatprep.subr.bf16.mxu0 %v3221
        %3275 = vmatpush1.bf16.msra.mxu0 %v3220
        %3276 = vmatprep.subr.bf16.mxu0 %v3225
        %3277 = vmatpush1.bf16.msra.mxu0 %v3224
        %3278 = vmatprep.subr.bf16.mxu0 %v3229
        %3279 = vmatpush1.bf16.msra.mxu0 %v3228
        %3280 = vmatprep.subr.bf16.mxu0 0
        %3281 = vmatpush1.bf16.msra.mxu0 0
        %3282 = vmatprep.subr.bf16.mxu0 0
        %3283 = vmatpush1.bf16.msra.mxu0 0
        %3284 = vmatprep.subr.bf16.mxu0 0
        %3285 = vmatpush1.bf16.msra.mxu0 0
        %3286 = vmatprep.subr.bf16.mxu0 0
        %3287 = vmatpush1.bf16.msra.mxu0 0
        %3288 = vmatprep.subr.bf16.mxu0 0
        %3289 = vmatpush1.bf16.msra.mxu0 0
        %3290 = vmatprep.subr.bf16.mxu0 0
        %3291 = vmatpush1.bf16.msra.mxu0 0
        %3292 = vmatprep.subr.bf16.mxu0 0
        %3293 = vmatpush1.bf16.msra.mxu0 0
        %3294 = vmatprep.subr.bf16.mxu0 0
        %3295 = vmatpush1.bf16.msra.mxu0 0
        %3296 = vmatprep.mubr.bf16.mxu0 0
        %3297 = vmatmul.mubr.bf16.gmra.mrb[0].mxu0 %v3102
        %v3298 = vpop.f32.mrb[0].mxu0
        %v3299 = vadd.f32 0.0, %v3298
        %v3300 = vpop.f32.mrb[0].mxu0
        %v3301 = vadd.f32 0.0, %v3300
        %v3302 = vpop.f32.mrb[0].mxu0
        %v3303 = vpop.f32.mrb[0].mxu0
        %3304 = vdwg.mxu0
        %3305 = vmatprep.subr.bf16.mxu0 %v3203
        %3306 = vmatpush1.bf16.msra.mxu0 %v3202
        %3307 = vmatprep.subr.bf16.mxu0 %v3207
        %3308 = vmatpush1.bf16.msra.mxu0 %v3206
        %3309 = vmatprep.subr.bf16.mxu0 %v3211
        %3310 = vmatpush1.bf16.msra.mxu0 %v3210
        %3311 = vmatprep.subr.bf16.mxu0 %v3215
        %3312 = vmatpush1.bf16.msra.mxu0 %v3214
        %3313 = vmatprep.subr.bf16.mxu0 %v3219
        %3314 = vmatpush1.bf16.msra.mxu0 %v3218
        %3315 = vmatprep.subr.bf16.mxu0 %v3223
        %3316 = vmatpush1.bf16.msra.mxu0 %v3222
        %3317 = vmatprep.subr.bf16.mxu0 %v3227
        %3318 = vmatpush1.bf16.msra.mxu0 %v3226
        %3319 = vmatprep.subr.bf16.mxu0 %v3231
        %3320 = vmatpush1.bf16.msra.mxu0 %v3230
        %3321 = vmatprep.subr.bf16.mxu0 0
        %3322 = vmatpush1.bf16.msra.mxu0 0
        %3323 = vmatprep.subr.bf16.mxu0 0
        %3324 = vmatpush1.bf16.msra.mxu0 0
        %3325 = vmatprep.subr.bf16.mxu0 0
        %3326 = vmatpush1.bf16.msra.mxu0 0
        %3327 = vmatprep.subr.bf16.mxu0 0
        %3328 = vmatpush1.bf16.msra.mxu0 0
        %3329 = vmatprep.subr.bf16.mxu0 0
        %3330 = vmatpush1.bf16.msra.mxu0 0
        %3331 = vmatprep.subr.bf16.mxu0 0
        %3332 = vmatpush1.bf16.msra.mxu0 0
        %3333 = vmatprep.subr.bf16.mxu0 0
        %3334 = vmatpush1.bf16.msra.mxu0 0
        %3335 = vmatprep.subr.bf16.mxu0 0
        %3336 = vmatpush1.bf16.msra.mxu0 0
        %3337 = vmatprep.mubr.bf16.mxu0 0
        %3338 = vmatmul.mubr.bf16.gmra.mrb[0].mxu0 %v3102
        %v3339 = vpop.f32.mrb[0].mxu0
        %v3340 = vadd.f32 0.0, %v3339
        %v3341 = vpop.f32.mrb[0].mxu0
        %v3342 = vadd.f32 0.0, %v3341
        %v3343 = vpop.f32.mrb[0].mxu0
        %v3344 = vpop.f32.mrb[0].mxu0
        %3345 = vdwg.mxu0
        %v3346 = vadd.f32 %v3061, %v3299
        %v3347 = vadd.f32 %v3062, %v3301
        %v3348 = vadd.f32 %v3063, %v3340
        %v3349 = vadd.f32 %v3064, %v3342
        %s3350 = scalar_lea.vmem %s375, 2304 [#allocation10]
        %v3351 = vld [vmem:[%s3350] sm:$0xff]
        %v3352 = vld [vmem:[%s3350 + $0x8] sm:$0xff]
        %v3353 = vld [vmem:[%s3350 + $0x10] sm:$0xff]
        %v3354 = vld [vmem:[%s3350 + $0x18] sm:$0xff]
        %v3355 = vld [vmem:[%s3350 + $0x20] sm:$0xff]
        %v3356 = vld [vmem:[%s3350 + $0x28] sm:$0xff]
        %v3357 = vld [vmem:[%s3350 + $0x30] sm:$0xff]
        %v3358 = vld [vmem:[%s3350 + $0x38] sm:$0xff]
        %v3359 = vld [vmem:[%s3350 + $0x40] sm:$0xff]
        %v3360 = vld [vmem:[%s3350 + $0x48] sm:$0xff]
        %v3361 = vld [vmem:[%s3350 + $0x50] sm:$0xff]
        %v3362 = vld [vmem:[%s3350 + $0x58] sm:$0xff]
        %v3363 = vld [vmem:[%s3350 + $0x60] sm:$0xff]
        %v3364 = vld [vmem:[%s3350 + $0x68] sm:$0xff]
        %v3365 = vld [vmem:[%s3350 + $0x70] sm:$0xff]
        %v3366 = vld [vmem:[%s3350 + $0x78] sm:$0xff]
        %v3367 = vld [vmem:[%s3350 + $0x80] sm:$0xff]
        %v3368 = vld [vmem:[%s3350 + $0x88] sm:$0xff]
        %v3369 = vld [vmem:[%s3350 + $0x90] sm:$0xff]
        %v3370 = vld [vmem:[%s3350 + $0x98] sm:$0xff]
        %v3371 = vld [vmem:[%s3350 + $0xa0] sm:$0xff]
        %v3372 = vld [vmem:[%s3350 + $0xa8] sm:$0xff]
        %v3373 = vld [vmem:[%s3350 + $0xb0] sm:$0xff]
        %v3374 = vld [vmem:[%s3350 + $0xb8] sm:$0xff]
        %v3375 = vld [vmem:[%s3350 + $0xc0] sm:$0xff]
        %v3376 = vld [vmem:[%s3350 + $0xc8] sm:$0xff]
        %v3377 = vld [vmem:[%s3350 + $0xd0] sm:$0xff]
        %v3378 = vld [vmem:[%s3350 + $0xd8] sm:$0xff]
        %v3379 = vld [vmem:[%s3350 + $0xe0] sm:$0xff]
        %v3380 = vld [vmem:[%s3350 + $0xe8] sm:$0xff]
        %v3381 = vld [vmem:[%s3350 + $0xf0] sm:$0xff]
        %v3382 = vld [vmem:[%s3350 + $0xf8] sm:$0xff]
        %v3383 = vrot.slane %v3098, 1
        %v3384 = vsel %vm869, %v3099, %v3383
        %v3385 = vpack.c.b16 %v3384, %v3384
        %v3419 = vunpack.c.l.b16 %v3351
        %v3420 = vunpack.c.h.b16 %v3351
        %v3421 = vunpack.c.l.b16 %v3352
        %v3422 = vunpack.c.h.b16 %v3352
        %v3423 = vunpack.c.l.b16 %v3353
        %v3424 = vunpack.c.h.b16 %v3353
        %v3425 = vunpack.c.l.b16 %v3354
        %v3426 = vunpack.c.h.b16 %v3354
        %v3427 = vunpack.c.l.b16 %v3355
        %v3428 = vunpack.c.h.b16 %v3355
        %v3429 = vunpack.c.l.b16 %v3356
        %v3430 = vunpack.c.h.b16 %v3356
        %v3431 = vunpack.c.l.b16 %v3357
        %v3432 = vunpack.c.h.b16 %v3357
        %v3433 = vunpack.c.l.b16 %v3358
        %v3434 = vunpack.c.h.b16 %v3358
        %v3435 = vunpack.c.l.b16 %v3359
        %v3436 = vunpack.c.h.b16 %v3359
        %v3437 = vunpack.c.l.b16 %v3360
        %v3438 = vunpack.c.h.b16 %v3360
        %v3439 = vunpack.c.l.b16 %v3361
        %v3440 = vunpack.c.h.b16 %v3361
        %v3441 = vunpack.c.l.b16 %v3362
        %v3442 = vunpack.c.h.b16 %v3362
        %v3443 = vunpack.c.l.b16 %v3363
        %v3444 = vunpack.c.h.b16 %v3363
        %v3445 = vunpack.c.l.b16 %v3364
        %v3446 = vunpack.c.h.b16 %v3364
        %v3447 = vunpack.c.l.b16 %v3365
        %v3448 = vunpack.c.h.b16 %v3365
        %v3449 = vunpack.c.l.b16 %v3366
        %v3450 = vunpack.c.h.b16 %v3366
        %v3451 = vunpack.c.l.b16 %v3367
        %v3452 = vunpack.c.h.b16 %v3367
        %v3453 = vunpack.c.l.b16 %v3368
        %v3454 = vunpack.c.h.b16 %v3368
        %v3455 = vunpack.c.l.b16 %v3369
        %v3456 = vunpack.c.h.b16 %v3369
        %v3457 = vunpack.c.l.b16 %v3370
        %v3458 = vunpack.c.h.b16 %v3370
        %v3459 = vunpack.c.l.b16 %v3371
        %v3460 = vunpack.c.h.b16 %v3371
        %v3461 = vunpack.c.l.b16 %v3372
        %v3462 = vunpack.c.h.b16 %v3372
        %v3463 = vunpack.c.l.b16 %v3373
        %v3464 = vunpack.c.h.b16 %v3373
        %v3465 = vunpack.c.l.b16 %v3374
        %v3466 = vunpack.c.h.b16 %v3374
        %v3467 = vunpack.c.l.b16 %v3375
        %v3468 = vunpack.c.h.b16 %v3375
        %v3469 = vunpack.c.l.b16 %v3376
        %v3470 = vunpack.c.h.b16 %v3376
        %v3471 = vunpack.c.l.b16 %v3377
        %v3472 = vunpack.c.h.b16 %v3377
        %v3473 = vunpack.c.l.b16 %v3378
        %v3474 = vunpack.c.h.b16 %v3378
        %v3475 = vunpack.c.l.b16 %v3379
        %v3476 = vunpack.c.h.b16 %v3379
        %v3477 = vunpack.c.l.b16 %v3380
        %v3478 = vunpack.c.h.b16 %v3380
        %v3479 = vunpack.c.l.b16 %v3381
        %v3480 = vunpack.c.h.b16 %v3381
        %v3481 = vunpack.c.l.b16 %v3382
        %v3482 = vunpack.c.h.b16 %v3382
        %v3483 = vpack.c.b16 %v3423, %v3419
        %v3484 = vpack.c.b16 %v3424, %v3420
        %v3485 = vpack.c.b16 %v3425, %v3421
        %v3486 = vpack.c.b16 %v3426, %v3422
        %v3487 = vpack.c.b16 %v3431, %v3427
        %v3488 = vpack.c.b16 %v3432, %v3428
        %v3489 = vpack.c.b16 %v3433, %v3429
        %v3490 = vpack.c.b16 %v3434, %v3430
        %v3491 = vpack.c.b16 %v3439, %v3435
        %v3492 = vpack.c.b16 %v3440, %v3436
        %v3493 = vpack.c.b16 %v3441, %v3437
        %v3494 = vpack.c.b16 %v3442, %v3438
        %v3495 = vpack.c.b16 %v3447, %v3443
        %v3496 = vpack.c.b16 %v3448, %v3444
        %v3497 = vpack.c.b16 %v3449, %v3445
        %v3498 = vpack.c.b16 %v3450, %v3446
        %v3499 = vpack.c.b16 %v3455, %v3451
        %v3500 = vpack.c.b16 %v3456, %v3452
        %v3501 = vpack.c.b16 %v3457, %v3453
        %v3502 = vpack.c.b16 %v3458, %v3454
        %v3503 = vpack.c.b16 %v3463, %v3459
        %v3504 = vpack.c.b16 %v3464, %v3460
        %v3505 = vpack.c.b16 %v3465, %v3461
        %v3506 = vpack.c.b16 %v3466, %v3462
        %v3507 = vpack.c.b16 %v3471, %v3467
        %v3508 = vpack.c.b16 %v3472, %v3468
        %v3509 = vpack.c.b16 %v3473, %v3469
        %v3510 = vpack.c.b16 %v3474, %v3470
        %v3511 = vpack.c.b16 %v3479, %v3475
        %v3512 = vpack.c.b16 %v3480, %v3476
        %v3513 = vpack.c.b16 %v3481, %v3477
        %v3514 = vpack.c.b16 %v3482, %v3478
        %3547 = vmatprep.subr.bf16.mxu0 %v3484
        %3548 = vmatpush1.bf16.msra.mxu0 %v3483
        %3549 = vmatprep.subr.bf16.mxu0 %v3488
        %3550 = vmatpush1.bf16.msra.mxu0 %v3487
        %3551 = vmatprep.subr.bf16.mxu0 %v3492
        %3552 = vmatpush1.bf16.msra.mxu0 %v3491
        %3553 = vmatprep.subr.bf16.mxu0 %v3496
        %3554 = vmatpush1.bf16.msra.mxu0 %v3495
        %3555 = vmatprep.subr.bf16.mxu0 %v3500
        %3556 = vmatpush1.bf16.msra.mxu0 %v3499
        %3557 = vmatprep.subr.bf16.mxu0 %v3504
        %3558 = vmatpush1.bf16.msra.mxu0 %v3503
        %3559 = vmatprep.subr.bf16.mxu0 %v3508
        %3560 = vmatpush1.bf16.msra.mxu0 %v3507
        %3561 = vmatprep.subr.bf16.mxu0 %v3512
        %3562 = vmatpush1.bf16.msra.mxu0 %v3511
        %3563 = vmatprep.subr.bf16.mxu0 0
        %3564 = vmatpush1.bf16.msra.mxu0 0
        %3565 = vmatprep.subr.bf16.mxu0 0
        %3566 = vmatpush1.bf16.msra.mxu0 0
        %3567 = vmatprep.subr.bf16.mxu0 0
        %3568 = vmatpush1.bf16.msra.mxu0 0
        %3569 = vmatprep.subr.bf16.mxu0 0
        %3570 = vmatpush1.bf16.msra.mxu0 0
        %3571 = vmatprep.subr.bf16.mxu0 0
        %3572 = vmatpush1.bf16.msra.mxu0 0
        %3573 = vmatprep.subr.bf16.mxu0 0
        %3574 = vmatpush1.bf16.msra.mxu0 0
        %3575 = vmatprep.subr.bf16.mxu0 0
        %3576 = vmatpush1.bf16.msra.mxu0 0
        %3577 = vmatprep.subr.bf16.mxu0 0
        %3578 = vmatpush1.bf16.msra.mxu0 0
        %3579 = vmatprep.mubr.bf16.mxu0 0
        %3580 = vmatmul.mubr.bf16.gmra.mrb[0].mxu0 %v3385
        %v3581 = vpop.f32.mrb[0].mxu0
        %v3582 = vadd.f32 0.0, %v3581
        %v3583 = vpop.f32.mrb[0].mxu0
        %v3584 = vadd.f32 0.0, %v3583
        %v3585 = vpop.f32.mrb[0].mxu0
        %v3586 = vpop.f32.mrb[0].mxu0
        %3587 = vdwg.mxu0
        %3588 = vmatprep.subr.bf16.mxu0 %v3486
        %3589 = vmatpush1.bf16.msra.mxu0 %v3485
        %3590 = vmatprep.subr.bf16.mxu0 %v3490
        %3591 = vmatpush1.bf16.msra.mxu0 %v3489
        %3592 = vmatprep.subr.bf16.mxu0 %v3494
        %3593 = vmatpush1.bf16.msra.mxu0 %v3493
        %3594 = vmatprep.subr.bf16.mxu0 %v3498
        %3595 = vmatpush1.bf16.msra.mxu0 %v3497
        %3596 = vmatprep.subr.bf16.mxu0 %v3502
        %3597 = vmatpush1.bf16.msra.mxu0 %v3501
        %3598 = vmatprep.subr.bf16.mxu0 %v3506
        %3599 = vmatpush1.bf16.msra.mxu0 %v3505
        %3600 = vmatprep.subr.bf16.mxu0 %v3510
        %3601 = vmatpush1.bf16.msra.mxu0 %v3509
        %3602 = vmatprep.subr.bf16.mxu0 %v3514
        %3603 = vmatpush1.bf16.msra.mxu0 %v3513
        %3604 = vmatprep.subr.bf16.mxu0 0
        %3605 = vmatpush1.bf16.msra.mxu0 0
        %3606 = vmatprep.subr.bf16.mxu0 0
        %3607 = vmatpush1.bf16.msra.mxu0 0
        %3608 = vmatprep.subr.bf16.mxu0 0
        %3609 = vmatpush1.bf16.msra.mxu0 0
        %3610 = vmatprep.subr.bf16.mxu0 0
        %3611 = vmatpush1.bf16.msra.mxu0 0
        %3612 = vmatprep.subr.bf16.mxu0 0
        %3613 = vmatpush1.bf16.msra.mxu0 0
        %3614 = vmatprep.subr.bf16.mxu0 0
        %3615 = vmatpush1.bf16.msra.mxu0 0
        %3616 = vmatprep.subr.bf16.mxu0 0
        %3617 = vmatpush1.bf16.msra.mxu0 0
        %3618 = vmatprep.subr.bf16.mxu0 0
        %3619 = vmatpush1.bf16.msra.mxu0 0
        %3620 = vmatprep.mubr.bf16.mxu0 0
        %3621 = vmatmul.mubr.bf16.gmra.mrb[0].mxu0 %v3385
        %v3622 = vpop.f32.mrb[0].mxu0
        %v3623 = vadd.f32 0.0, %v3622
        %v3624 = vpop.f32.mrb[0].mxu0
        %v3625 = vadd.f32 0.0, %v3624
        %v3626 = vpop.f32.mrb[0].mxu0
        %v3627 = vpop.f32.mrb[0].mxu0
        %3628 = vdwg.mxu0
        %v3629 = vadd.f32 %v3346, %v3582
        %v3630 = vadd.f32 %v3347, %v3584
        %v3631 = vadd.f32 %v3348, %v3623
        %v3632 = vadd.f32 %v3349, %v3625
        %s3633 = scalar_lea.vmem %s375, 2560 [#allocation10]
        %v3634 = vld [vmem:[%s3633] sm:$0xff]
        %v3635 = vld [vmem:[%s3633 + $0x8] sm:$0xff]
        %v3636 = vld [vmem:[%s3633 + $0x10] sm:$0xff]
        %v3637 = vld [vmem:[%s3633 + $0x18] sm:$0xff]
        %v3638 = vld [vmem:[%s3633 + $0x20] sm:$0xff]
        %v3639 = vld [vmem:[%s3633 + $0x28] sm:$0xff]
        %v3640 = vld [vmem:[%s3633 + $0x30] sm:$0xff]
        %v3641 = vld [vmem:[%s3633 + $0x38] sm:$0xff]
        %v3642 = vld [vmem:[%s3633 + $0x40] sm:$0xff]
        %v3643 = vld [vmem:[%s3633 + $0x48] sm:$0xff]
        %v3644 = vld [vmem:[%s3633 + $0x50] sm:$0xff]
        %v3645 = vld [vmem:[%s3633 + $0x58] sm:$0xff]
        %v3646 = vld [vmem:[%s3633 + $0x60] sm:$0xff]
        %v3647 = vld [vmem:[%s3633 + $0x68] sm:$0xff]
        %v3648 = vld [vmem:[%s3633 + $0x70] sm:$0xff]
        %v3649 = vld [vmem:[%s3633 + $0x78] sm:$0xff]
        %v3650 = vld [vmem:[%s3633 + $0x80] sm:$0xff]
        %v3651 = vld [vmem:[%s3633 + $0x88] sm:$0xff]
        %v3652 = vld [vmem:[%s3633 + $0x90] sm:$0xff]
        %v3653 = vld [vmem:[%s3633 + $0x98] sm:$0xff]
        %v3654 = vld [vmem:[%s3633 + $0xa0] sm:$0xff]
        %v3655 = vld [vmem:[%s3633 + $0xa8] sm:$0xff]
        %v3656 = vld [vmem:[%s3633 + $0xb0] sm:$0xff]
        %v3657 = vld [vmem:[%s3633 + $0xb8] sm:$0xff]
        %v3658 = vld [vmem:[%s3633 + $0xc0] sm:$0xff]
        %v3659 = vld [vmem:[%s3633 + $0xc8] sm:$0xff]
        %v3660 = vld [vmem:[%s3633 + $0xd0] sm:$0xff]
        %v3661 = vld [vmem:[%s3633 + $0xd8] sm:$0xff]
        %v3662 = vld [vmem:[%s3633 + $0xe0] sm:$0xff]
        %v3663 = vld [vmem:[%s3633 + $0xe8] sm:$0xff]
        %v3664 = vld [vmem:[%s3633 + $0xf0] sm:$0xff]
        %v3665 = vld [vmem:[%s3633 + $0xf8] sm:$0xff]
        %v3666 = vrot.slane %v3098, 2
        %v3667 = vrot.slane %v3099, 1
        %v3668 = vsel %vm869, %v3667, %v3666
        %v3669 = vpack.c.b16 %v3668, %v3668
        %v3703 = vunpack.c.l.b16 %v3634
        %v3704 = vunpack.c.h.b16 %v3634
        %v3705 = vunpack.c.l.b16 %v3635
        %v3706 = vunpack.c.h.b16 %v3635
        %v3707 = vunpack.c.l.b16 %v3636
        %v3708 = vunpack.c.h.b16 %v3636
        %v3709 = vunpack.c.l.b16 %v3637
        %v3710 = vunpack.c.h.b16 %v3637
        %v3711 = vunpack.c.l.b16 %v3638
        %v3712 = vunpack.c.h.b16 %v3638
        %v3713 = vunpack.c.l.b16 %v3639
        %v3714 = vunpack.c.h.b16 %v3639
        %v3715 = vunpack.c.l.b16 %v3640
        %v3716 = vunpack.c.h.b16 %v3640
        %v3717 = vunpack.c.l.b16 %v3641
        %v3718 = vunpack.c.h.b16 %v3641
        %v3719 = vunpack.c.l.b16 %v3642
        %v3720 = vunpack.c.h.b16 %v3642
        %v3721 = vunpack.c.l.b16 %v3643
        %v3722 = vunpack.c.h.b16 %v3643
        %v3723 = vunpack.c.l.b16 %v3644
        %v3724 = vunpack.c.h.b16 %v3644
        %v3725 = vunpack.c.l.b16 %v3645
        %v3726 = vunpack.c.h.b16 %v3645
        %v3727 = vunpack.c.l.b16 %v3646
        %v3728 = vunpack.c.h.b16 %v3646
        %v3729 = vunpack.c.l.b16 %v3647
        %v3730 = vunpack.c.h.b16 %v3647
        %v3731 = vunpack.c.l.b16 %v3648
        %v3732 = vunpack.c.h.b16 %v3648
        %v3733 = vunpack.c.l.b16 %v3649
        %v3734 = vunpack.c.h.b16 %v3649
        %v3735 = vunpack.c.l.b16 %v3650
        %v3736 = vunpack.c.h.b16 %v3650
        %v3737 = vunpack.c.l.b16 %v3651
        %v3738 = vunpack.c.h.b16 %v3651
        %v3739 = vunpack.c.l.b16 %v3652
        %v3740 = vunpack.c.h.b16 %v3652
        %v3741 = vunpack.c.l.b16 %v3653
        %v3742 = vunpack.c.h.b16 %v3653
        %v3743 = vunpack.c.l.b16 %v3654
        %v3744 = vunpack.c.h.b16 %v3654
        %v3745 = vunpack.c.l.b16 %v3655
        %v3746 = vunpack.c.h.b16 %v3655
        %v3747 = vunpack.c.l.b16 %v3656
        %v3748 = vunpack.c.h.b16 %v3656
        %v3749 = vunpack.c.l.b16 %v3657
        %v3750 = vunpack.c.h.b16 %v3657
        %v3751 = vunpack.c.l.b16 %v3658
        %v3752 = vunpack.c.h.b16 %v3658
        %v3753 = vunpack.c.l.b16 %v3659
        %v3754 = vunpack.c.h.b16 %v3659
        %v3755 = vunpack.c.l.b16 %v3660
        %v3756 = vunpack.c.h.b16 %v3660
        %v3757 = vunpack.c.l.b16 %v3661
        %v3758 = vunpack.c.h.b16 %v3661
        %v3759 = vunpack.c.l.b16 %v3662
        %v3760 = vunpack.c.h.b16 %v3662
        %v3761 = vunpack.c.l.b16 %v3663
        %v3762 = vunpack.c.h.b16 %v3663
        %v3763 = vunpack.c.l.b16 %v3664
        %v3764 = vunpack.c.h.b16 %v3664
        %v3765 = vunpack.c.l.b16 %v3665
        %v3766 = vunpack.c.h.b16 %v3665
        %v3767 = vpack.c.b16 %v3707, %v3703
        %v3768 = vpack.c.b16 %v3708, %v3704
        %v3769 = vpack.c.b16 %v3709, %v3705
        %v3770 = vpack.c.b16 %v3710, %v3706
        %v3771 = vpack.c.b16 %v3715, %v3711
        %v3772 = vpack.c.b16 %v3716, %v3712
        %v3773 = vpack.c.b16 %v3717, %v3713
        %v3774 = vpack.c.b16 %v3718, %v3714
        %v3775 = vpack.c.b16 %v3723, %v3719
        %v3776 = vpack.c.b16 %v3724, %v3720
        %v3777 = vpack.c.b16 %v3725, %v3721
        %v3778 = vpack.c.b16 %v3726, %v3722
        %v3779 = vpack.c.b16 %v3731, %v3727
        %v3780 = vpack.c.b16 %v3732, %v3728
        %v3781 = vpack.c.b16 %v3733, %v3729
        %v3782 = vpack.c.b16 %v3734, %v3730
        %v3783 = vpack.c.b16 %v3739, %v3735
        %v3784 = vpack.c.b16 %v3740, %v3736
        %v3785 = vpack.c.b16 %v3741, %v3737
        %v3786 = vpack.c.b16 %v3742, %v3738
        %v3787 = vpack.c.b16 %v3747, %v3743
        %v3788 = vpack.c.b16 %v3748, %v3744
        %v3789 = vpack.c.b16 %v3749, %v3745
        %v3790 = vpack.c.b16 %v3750, %v3746
        %v3791 = vpack.c.b16 %v3755, %v3751
        %v3792 = vpack.c.b16 %v3756, %v3752
        %v3793 = vpack.c.b16 %v3757, %v3753
        %v3794 = vpack.c.b16 %v3758, %v3754
        %v3795 = vpack.c.b16 %v3763, %v3759
        %v3796 = vpack.c.b16 %v3764, %v3760
        %v3797 = vpack.c.b16 %v3765, %v3761
        %v3798 = vpack.c.b16 %v3766, %v3762
        %3831 = vmatprep.subr.bf16.mxu0 %v3768
        %3832 = vmatpush1.bf16.msra.mxu0 %v3767
        %3833 = vmatprep.subr.bf16.mxu0 %v3772
        %3834 = vmatpush1.bf16.msra.mxu0 %v3771
        %3835 = vmatprep.subr.bf16.mxu0 %v3776
        %3836 = vmatpush1.bf16.msra.mxu0 %v3775
        %3837 = vmatprep.subr.bf16.mxu0 %v3780
        %3838 = vmatpush1.bf16.msra.mxu0 %v3779
        %3839 = vmatprep.subr.bf16.mxu0 %v3784
        %3840 = vmatpush1.bf16.msra.mxu0 %v3783
        %3841 = vmatprep.subr.bf16.mxu0 %v3788
        %3842 = vmatpush1.bf16.msra.mxu0 %v3787
        %3843 = vmatprep.subr.bf16.mxu0 %v3792
        %3844 = vmatpush1.bf16.msra.mxu0 %v3791
        %3845 = vmatprep.subr.bf16.mxu0 %v3796
        %3846 = vmatpush1.bf16.msra.mxu0 %v3795
        %3847 = vmatprep.subr.bf16.mxu0 0
        %3848 = vmatpush1.bf16.msra.mxu0 0
        %3849 = vmatprep.subr.bf16.mxu0 0
        %3850 = vmatpush1.bf16.msra.mxu0 0
        %3851 = vmatprep.subr.bf16.mxu0 0
        %3852 = vmatpush1.bf16.msra.mxu0 0
        %3853 = vmatprep.subr.bf16.mxu0 0
        %3854 = vmatpush1.bf16.msra.mxu0 0
        %3855 = vmatprep.subr.bf16.mxu0 0
        %3856 = vmatpush1.bf16.msra.mxu0 0
        %3857 = vmatprep.subr.bf16.mxu0 0
        %3858 = vmatpush1.bf16.msra.mxu0 0
        %3859 = vmatprep.subr.bf16.mxu0 0
        %3860 = vmatpush1.bf16.msra.mxu0 0
        %3861 = vmatprep.subr.bf16.mxu0 0
        %3862 = vmatpush1.bf16.msra.mxu0 0
        %3863 = vmatprep.mubr.bf16.mxu0 0
        %3864 = vmatmul.mubr.bf16.gmra.mrb[0].mxu0 %v3669
        %v3865 = vpop.f32.mrb[0].mxu0
        %v3866 = vadd.f32 0.0, %v3865
        %v3867 = vpop.f32.mrb[0].mxu0
        %v3868 = vadd.f32 0.0, %v3867
        %v3869 = vpop.f32.mrb[0].mxu0
        %v3870 = vpop.f32.mrb[0].mxu0
        %3871 = vdwg.mxu0
        %3872 = vmatprep.subr.bf16.mxu0 %v3770
        %3873 = vmatpush1.bf16.msra.mxu0 %v3769
        %3874 = vmatprep.subr.bf16.mxu0 %v3774
        %3875 = vmatpush1.bf16.msra.mxu0 %v3773
        %3876 = vmatprep.subr.bf16.mxu0 %v3778
        %3877 = vmatpush1.bf16.msra.mxu0 %v3777
        %3878 = vmatprep.subr.bf16.mxu0 %v3782
        %3879 = vmatpush1.bf16.msra.mxu0 %v3781
        %3880 = vmatprep.subr.bf16.mxu0 %v3786
        %3881 = vmatpush1.bf16.msra.mxu0 %v3785
        %3882 = vmatprep.subr.bf16.mxu0 %v3790
        %3883 = vmatpush1.bf16.msra.mxu0 %v3789
        %3884 = vmatprep.subr.bf16.mxu0 %v3794
        %3885 = vmatpush1.bf16.msra.mxu0 %v3793
        %3886 = vmatprep.subr.bf16.mxu0 %v3798
        %3887 = vmatpush1.bf16.msra.mxu0 %v3797
        %3888 = vmatprep.subr.bf16.mxu0 0
        %3889 = vmatpush1.bf16.msra.mxu0 0
        %3890 = vmatprep.subr.bf16.mxu0 0
        %3891 = vmatpush1.bf16.msra.mxu0 0
        %3892 = vmatprep.subr.bf16.mxu0 0
        %3893 = vmatpush1.bf16.msra.mxu0 0
        %3894 = vmatprep.subr.bf16.mxu0 0
        %3895 = vmatpush1.bf16.msra.mxu0 0
        %3896 = vmatprep.subr.bf16.mxu0 0
        %3897 = vmatpush1.bf16.msra.mxu0 0
        %3898 = vmatprep.subr.bf16.mxu0 0
        %3899 = vmatpush1.bf16.msra.mxu0 0
        %3900 = vmatprep.subr.bf16.mxu0 0
        %3901 = vmatpush1.bf16.msra.mxu0 0
        %3902 = vmatprep.subr.bf16.mxu0 0
        %3903 = vmatpush1.bf16.msra.mxu0 0
        %3904 = vmatprep.mubr.bf16.mxu0 0
        %3905 = vmatmul.mubr.bf16.gmra.mrb[0].mxu0 %v3669
        %v3906 = vpop.f32.mrb[0].mxu0
        %v3907 = vadd.f32 0.0, %v3906
        %v3908 = vpop.f32.mrb[0].mxu0
        %v3909 = vadd.f32 0.0, %v3908
        %v3910 = vpop.f32.mrb[0].mxu0
        %v3911 = vpop.f32.mrb[0].mxu0
        %3912 = vdwg.mxu0
        %v3913 = vadd.f32 %v3629, %v3866
        %v3914 = vadd.f32 %v3630, %v3868
        %v3915 = vadd.f32 %v3631, %v3907
        %v3916 = vadd.f32 %v3632, %v3909
        %s3917 = scalar_lea.vmem %s375, 2816 [#allocation10]
        %v3918 = vld [vmem:[%s3917] sm:$0xff]
        %v3919 = vld [vmem:[%s3917 + $0x8] sm:$0xff]
        %v3920 = vld [vmem:[%s3917 + $0x10] sm:$0xff]
        %v3921 = vld [vmem:[%s3917 + $0x18] sm:$0xff]
        %v3922 = vld [vmem:[%s3917 + $0x20] sm:$0xff]
        %v3923 = vld [vmem:[%s3917 + $0x28] sm:$0xff]
        %v3924 = vld [vmem:[%s3917 + $0x30] sm:$0xff]
        %v3925 = vld [vmem:[%s3917 + $0x38] sm:$0xff]
        %v3926 = vld [vmem:[%s3917 + $0x40] sm:$0xff]
        %v3927 = vld [vmem:[%s3917 + $0x48] sm:$0xff]
        %v3928 = vld [vmem:[%s3917 + $0x50] sm:$0xff]
        %v3929 = vld [vmem:[%s3917 + $0x58] sm:$0xff]
        %v3930 = vld [vmem:[%s3917 + $0x60] sm:$0xff]
        %v3931 = vld [vmem:[%s3917 + $0x68] sm:$0xff]
        %v3932 = vld [vmem:[%s3917 + $0x70] sm:$0xff]
        %v3933 = vld [vmem:[%s3917 + $0x78] sm:$0xff]
        %v3934 = vld [vmem:[%s3917 + $0x80] sm:$0xff]
        %v3935 = vld [vmem:[%s3917 + $0x88] sm:$0xff]
        %v3936 = vld [vmem:[%s3917 + $0x90] sm:$0xff]
        %v3937 = vld [vmem:[%s3917 + $0x98] sm:$0xff]
        %v3938 = vld [vmem:[%s3917 + $0xa0] sm:$0xff]
        %v3939 = vld [vmem:[%s3917 + $0xa8] sm:$0xff]
        %v3940 = vld [vmem:[%s3917 + $0xb0] sm:$0xff]
        %v3941 = vld [vmem:[%s3917 + $0xb8] sm:$0xff]
        %v3942 = vld [vmem:[%s3917 + $0xc0] sm:$0xff]
        %v3943 = vld [vmem:[%s3917 + $0xc8] sm:$0xff]
        %v3944 = vld [vmem:[%s3917 + $0xd0] sm:$0xff]
        %v3945 = vld [vmem:[%s3917 + $0xd8] sm:$0xff]
        %v3946 = vld [vmem:[%s3917 + $0xe0] sm:$0xff]
        %v3947 = vld [vmem:[%s3917 + $0xe8] sm:$0xff]
        %v3948 = vld [vmem:[%s3917 + $0xf0] sm:$0xff]
        %v3949 = vld [vmem:[%s3917 + $0xf8] sm:$0xff]
        %v3950 = vrot.slane %v3098, 3
        %v3951 = vrot.slane %v3099, 2
        %v3952 = vsel %vm869, %v3951, %v3950
        %v3953 = vpack.c.b16 %v3952, %v3952
        %v3987 = vunpack.c.l.b16 %v3918
        %v3988 = vunpack.c.h.b16 %v3918
        %v3989 = vunpack.c.l.b16 %v3919
        %v3990 = vunpack.c.h.b16 %v3919
        %v3991 = vunpack.c.l.b16 %v3920
        %v3992 = vunpack.c.h.b16 %v3920
        %v3993 = vunpack.c.l.b16 %v3921
        %v3994 = vunpack.c.h.b16 %v3921
        %v3995 = vunpack.c.l.b16 %v3922
        %v3996 = vunpack.c.h.b16 %v3922
        %v3997 = vunpack.c.l.b16 %v3923
        %v3998 = vunpack.c.h.b16 %v3923
        %v3999 = vunpack.c.l.b16 %v3924
        %v4000 = vunpack.c.h.b16 %v3924
        %v4001 = vunpack.c.l.b16 %v3925
        %v4002 = vunpack.c.h.b16 %v3925
        %v4003 = vunpack.c.l.b16 %v3926
        %v4004 = vunpack.c.h.b16 %v3926
        %v4005 = vunpack.c.l.b16 %v3927
        %v4006 = vunpack.c.h.b16 %v3927
        %v4007 = vunpack.c.l.b16 %v3928
        %v4008 = vunpack.c.h.b16 %v3928
        %v4009 = vunpack.c.l.b16 %v3929
        %v4010 = vunpack.c.h.b16 %v3929
        %v4011 = vunpack.c.l.b16 %v3930
        %v4012 = vunpack.c.h.b16 %v3930
        %v4013 = vunpack.c.l.b16 %v3931
        %v4014 = vunpack.c.h.b16 %v3931
        %v4015 = vunpack.c.l.b16 %v3932
        %v4016 = vunpack.c.h.b16 %v3932
        %v4017 = vunpack.c.l.b16 %v3933
        %v4018 = vunpack.c.h.b16 %v3933
        %v4019 = vunpack.c.l.b16 %v3934
        %v4020 = vunpack.c.h.b16 %v3934
        %v4021 = vunpack.c.l.b16 %v3935
        %v4022 = vunpack.c.h.b16 %v3935
        %v4023 = vunpack.c.l.b16 %v3936
        %v4024 = vunpack.c.h.b16 %v3936
        %v4025 = vunpack.c.l.b16 %v3937
        %v4026 = vunpack.c.h.b16 %v3937
        %v4027 = vunpack.c.l.b16 %v3938
        %v4028 = vunpack.c.h.b16 %v3938
        %v4029 = vunpack.c.l.b16 %v3939
        %v4030 = vunpack.c.h.b16 %v3939
        %v4031 = vunpack.c.l.b16 %v3940
        %v4032 = vunpack.c.h.b16 %v3940
        %v4033 = vunpack.c.l.b16 %v3941
        %v4034 = vunpack.c.h.b16 %v3941
        %v4035 = vunpack.c.l.b16 %v3942
        %v4036 = vunpack.c.h.b16 %v3942
        %v4037 = vunpack.c.l.b16 %v3943
        %v4038 = vunpack.c.h.b16 %v3943
        %v4039 = vunpack.c.l.b16 %v3944
        %v4040 = vunpack.c.h.b16 %v3944
        %v4041 = vunpack.c.l.b16 %v3945
        %v4042 = vunpack.c.h.b16 %v3945
        %v4043 = vunpack.c.l.b16 %v3946
        %v4044 = vunpack.c.h.b16 %v3946
        %v4045 = vunpack.c.l.b16 %v3947
        %v4046 = vunpack.c.h.b16 %v3947
        %v4047 = vunpack.c.l.b16 %v3948
        %v4048 = vunpack.c.h.b16 %v3948
        %v4049 = vunpack.c.l.b16 %v3949
        %v4050 = vunpack.c.h.b16 %v3949
        %v4051 = vpack.c.b16 %v3991, %v3987
        %v4052 = vpack.c.b16 %v3992, %v3988
        %v4053 = vpack.c.b16 %v3993, %v3989
        %v4054 = vpack.c.b16 %v3994, %v3990
        %v4055 = vpack.c.b16 %v3999, %v3995
        %v4056 = vpack.c.b16 %v4000, %v3996
        %v4057 = vpack.c.b16 %v4001, %v3997
        %v4058 = vpack.c.b16 %v4002, %v3998
        %v4059 = vpack.c.b16 %v4007, %v4003
        %v4060 = vpack.c.b16 %v4008, %v4004
        %v4061 = vpack.c.b16 %v4009, %v4005
        %v4062 = vpack.c.b16 %v4010, %v4006
        %v4063 = vpack.c.b16 %v4015, %v4011
        %v4064 = vpack.c.b16 %v4016, %v4012
        %v4065 = vpack.c.b16 %v4017, %v4013
        %v4066 = vpack.c.b16 %v4018, %v4014
        %v4067 = vpack.c.b16 %v4023, %v4019
        %v4068 = vpack.c.b16 %v4024, %v4020
        %v4069 = vpack.c.b16 %v4025, %v4021
        %v4070 = vpack.c.b16 %v4026, %v4022
        %v4071 = vpack.c.b16 %v4031, %v4027
        %v4072 = vpack.c.b16 %v4032, %v4028
        %v4073 = vpack.c.b16 %v4033, %v4029
        %v4074 = vpack.c.b16 %v4034, %v4030
        %v4075 = vpack.c.b16 %v4039, %v4035
        %v4076 = vpack.c.b16 %v4040, %v4036
        %v4077 = vpack.c.b16 %v4041, %v4037
        %v4078 = vpack.c.b16 %v4042, %v4038
        %v4079 = vpack.c.b16 %v4047, %v4043
        %v4080 = vpack.c.b16 %v4048, %v4044
        %v4081 = vpack.c.b16 %v4049, %v4045
        %v4082 = vpack.c.b16 %v4050, %v4046
        %4115 = vmatprep.subr.bf16.mxu0 %v4052
        %4116 = vmatpush1.bf16.msra.mxu0 %v4051
        %4117 = vmatprep.subr.bf16.mxu0 %v4056
        %4118 = vmatpush1.bf16.msra.mxu0 %v4055
        %4119 = vmatprep.subr.bf16.mxu0 %v4060
        %4120 = vmatpush1.bf16.msra.mxu0 %v4059
        %4121 = vmatprep.subr.bf16.mxu0 %v4064
        %4122 = vmatpush1.bf16.msra.mxu0 %v4063
        %4123 = vmatprep.subr.bf16.mxu0 %v4068
        %4124 = vmatpush1.bf16.msra.mxu0 %v4067
        %4125 = vmatprep.subr.bf16.mxu0 %v4072
        %4126 = vmatpush1.bf16.msra.mxu0 %v4071
        %4127 = vmatprep.subr.bf16.mxu0 %v4076
        %4128 = vmatpush1.bf16.msra.mxu0 %v4075
        %4129 = vmatprep.subr.bf16.mxu0 %v4080
        %4130 = vmatpush1.bf16.msra.mxu0 %v4079
        %4131 = vmatprep.subr.bf16.mxu0 0
        %4132 = vmatpush1.bf16.msra.mxu0 0
        %4133 = vmatprep.subr.bf16.mxu0 0
        %4134 = vmatpush1.bf16.msra.mxu0 0
        %4135 = vmatprep.subr.bf16.mxu0 0
        %4136 = vmatpush1.bf16.msra.mxu0 0
        %4137 = vmatprep.subr.bf16.mxu0 0
        %4138 = vmatpush1.bf16.msra.mxu0 0
        %4139 = vmatprep.subr.bf16.mxu0 0
        %4140 = vmatpush1.bf16.msra.mxu0 0
        %4141 = vmatprep.subr.bf16.mxu0 0
        %4142 = vmatpush1.bf16.msra.mxu0 0
        %4143 = vmatprep.subr.bf16.mxu0 0
        %4144 = vmatpush1.bf16.msra.mxu0 0
        %4145 = vmatprep.subr.bf16.mxu0 0
        %4146 = vmatpush1.bf16.msra.mxu0 0
        %4147 = vmatprep.mubr.bf16.mxu0 0
        %4148 = vmatmul.mubr.bf16.gmra.mrb[0].mxu0 %v3953
        %v4149 = vpop.f32.mrb[0].mxu0
        %v4150 = vadd.f32 0.0, %v4149
        %v4151 = vpop.f32.mrb[0].mxu0
        %v4152 = vadd.f32 0.0, %v4151
        %v4153 = vpop.f32.mrb[0].mxu0
        %v4154 = vpop.f32.mrb[0].mxu0
        %4155 = vdwg.mxu0
        %4156 = vmatprep.subr.bf16.mxu0 %v4054
        %4157 = vmatpush1.bf16.msra.mxu0 %v4053
        %4158 = vmatprep.subr.bf16.mxu0 %v4058
        %4159 = vmatpush1.bf16.msra.mxu0 %v4057
        %4160 = vmatprep.subr.bf16.mxu0 %v4062
        %4161 = vmatpush1.bf16.msra.mxu0 %v4061
        %4162 = vmatprep.subr.bf16.mxu0 %v4066
        %4163 = vmatpush1.bf16.msra.mxu0 %v4065
        %4164 = vmatprep.subr.bf16.mxu0 %v4070
        %4165 = vmatpush1.bf16.msra.mxu0 %v4069
        %4166 = vmatprep.subr.bf16.mxu0 %v4074
        %4167 = vmatpush1.bf16.msra.mxu0 %v4073
        %4168 = vmatprep.subr.bf16.mxu0 %v4078
        %4169 = vmatpush1.bf16.msra.mxu0 %v4077
        %4170 = vmatprep.subr.bf16.mxu0 %v4082
        %4171 = vmatpush1.bf16.msra.mxu0 %v4081
        %4172 = vmatprep.subr.bf16.mxu0 0
        %4173 = vmatpush1.bf16.msra.mxu0 0
        %4174 = vmatprep.subr.bf16.mxu0 0
        %4175 = vmatpush1.bf16.msra.mxu0 0
        %4176 = vmatprep.subr.bf16.mxu0 0
        %4177 = vmatpush1.bf16.msra.mxu0 0
        %4178 = vmatprep.subr.bf16.mxu0 0
        %4179 = vmatpush1.bf16.msra.mxu0 0
        %4180 = vmatprep.subr.bf16.mxu0 0
        %4181 = vmatpush1.bf16.msra.mxu0 0
        %4182 = vmatprep.subr.bf16.mxu0 0
        %4183 = vmatpush1.bf16.msra.mxu0 0
        %4184 = vmatprep.subr.bf16.mxu0 0
        %4185 = vmatpush1.bf16.msra.mxu0 0
        %4186 = vmatprep.subr.bf16.mxu0 0
        %4187 = vmatpush1.bf16.msra.mxu0 0
        %4188 = vmatprep.mubr.bf16.mxu0 0
        %4189 = vmatmul.mubr.bf16.gmra.mrb[0].mxu0 %v3953
        %v4190 = vpop.f32.mrb[0].mxu0
        %v4191 = vadd.f32 0.0, %v4190
        %v4192 = vpop.f32.mrb[0].mxu0
        %v4193 = vadd.f32 0.0, %v4192
        %v4194 = vpop.f32.mrb[0].mxu0
        %v4195 = vpop.f32.mrb[0].mxu0
        %4196 = vdwg.mxu0
        %v4197 = vadd.f32 %v3913, %v4150
        %v4198 = vadd.f32 %v3914, %v4152
        %v4199 = vadd.f32 %v3915, %v4191
        %v4200 = vadd.f32 %v3916, %v4193
        %s4201 = scalar_lea.vmem %s375, 3072 [#allocation10]
        %v4202 = vld [vmem:[%s4201] sm:$0xff]
        %v4203 = vld [vmem:[%s4201 + $0x8] sm:$0xff]
        %v4204 = vld [vmem:[%s4201 + $0x10] sm:$0xff]
        %v4205 = vld [vmem:[%s4201 + $0x18] sm:$0xff]
        %v4206 = vld [vmem:[%s4201 + $0x20] sm:$0xff]
        %v4207 = vld [vmem:[%s4201 + $0x28] sm:$0xff]
        %v4208 = vld [vmem:[%s4201 + $0x30] sm:$0xff]
        %v4209 = vld [vmem:[%s4201 + $0x38] sm:$0xff]
        %v4210 = vld [vmem:[%s4201 + $0x40] sm:$0xff]
        %v4211 = vld [vmem:[%s4201 + $0x48] sm:$0xff]
        %v4212 = vld [vmem:[%s4201 + $0x50] sm:$0xff]
        %v4213 = vld [vmem:[%s4201 + $0x58] sm:$0xff]
        %v4214 = vld [vmem:[%s4201 + $0x60] sm:$0xff]
        %v4215 = vld [vmem:[%s4201 + $0x68] sm:$0xff]
        %v4216 = vld [vmem:[%s4201 + $0x70] sm:$0xff]
        %v4217 = vld [vmem:[%s4201 + $0x78] sm:$0xff]
        %v4218 = vld [vmem:[%s4201 + $0x80] sm:$0xff]
        %v4219 = vld [vmem:[%s4201 + $0x88] sm:$0xff]
        %v4220 = vld [vmem:[%s4201 + $0x90] sm:$0xff]
        %v4221 = vld [vmem:[%s4201 + $0x98] sm:$0xff]
        %v4222 = vld [vmem:[%s4201 + $0xa0] sm:$0xff]
        %v4223 = vld [vmem:[%s4201 + $0xa8] sm:$0xff]
        %v4224 = vld [vmem:[%s4201 + $0xb0] sm:$0xff]
        %v4225 = vld [vmem:[%s4201 + $0xb8] sm:$0xff]
        %v4226 = vld [vmem:[%s4201 + $0xc0] sm:$0xff]
        %v4227 = vld [vmem:[%s4201 + $0xc8] sm:$0xff]
        %v4228 = vld [vmem:[%s4201 + $0xd0] sm:$0xff]
        %v4229 = vld [vmem:[%s4201 + $0xd8] sm:$0xff]
        %v4230 = vld [vmem:[%s4201 + $0xe0] sm:$0xff]
        %v4231 = vld [vmem:[%s4201 + $0xe8] sm:$0xff]
        %v4232 = vld [vmem:[%s4201 + $0xf0] sm:$0xff]
        %v4233 = vld [vmem:[%s4201 + $0xf8] sm:$0xff]
        %v4234 = vrot.slane %v3098, 4
        %v4235 = vrot.slane %v3099, 3
        %v4236 = vsel %vm869, %v4235, %v4234
        %v4237 = vpack.c.b16 %v4236, %v4236
        %v4271 = vunpack.c.l.b16 %v4202
        %v4272 = vunpack.c.h.b16 %v4202
        %v4273 = vunpack.c.l.b16 %v4203
        %v4274 = vunpack.c.h.b16 %v4203
        %v4275 = vunpack.c.l.b16 %v4204
        %v4276 = vunpack.c.h.b16 %v4204
        %v4277 = vunpack.c.l.b16 %v4205
        %v4278 = vunpack.c.h.b16 %v4205
        %v4279 = vunpack.c.l.b16 %v4206
        %v4280 = vunpack.c.h.b16 %v4206
        %v4281 = vunpack.c.l.b16 %v4207
        %v4282 = vunpack.c.h.b16 %v4207
        %v4283 = vunpack.c.l.b16 %v4208
        %v4284 = vunpack.c.h.b16 %v4208
        %v4285 = vunpack.c.l.b16 %v4209
        %v4286 = vunpack.c.h.b16 %v4209
        %v4287 = vunpack.c.l.b16 %v4210
        %v4288 = vunpack.c.h.b16 %v4210
        %v4289 = vunpack.c.l.b16 %v4211
        %v4290 = vunpack.c.h.b16 %v4211
        %v4291 = vunpack.c.l.b16 %v4212
        %v4292 = vunpack.c.h.b16 %v4212
        %v4293 = vunpack.c.l.b16 %v4213
        %v4294 = vunpack.c.h.b16 %v4213
        %v4295 = vunpack.c.l.b16 %v4214
        %v4296 = vunpack.c.h.b16 %v4214
        %v4297 = vunpack.c.l.b16 %v4215
        %v4298 = vunpack.c.h.b16 %v4215
        %v4299 = vunpack.c.l.b16 %v4216
        %v4300 = vunpack.c.h.b16 %v4216
        %v4301 = vunpack.c.l.b16 %v4217
        %v4302 = vunpack.c.h.b16 %v4217
        %v4303 = vunpack.c.l.b16 %v4218
        %v4304 = vunpack.c.h.b16 %v4218
        %v4305 = vunpack.c.l.b16 %v4219
        %v4306 = vunpack.c.h.b16 %v4219
        %v4307 = vunpack.c.l.b16 %v4220
        %v4308 = vunpack.c.h.b16 %v4220
        %v4309 = vunpack.c.l.b16 %v4221
        %v4310 = vunpack.c.h.b16 %v4221
        %v4311 = vunpack.c.l.b16 %v4222
        %v4312 = vunpack.c.h.b16 %v4222
        %v4313 = vunpack.c.l.b16 %v4223
        %v4314 = vunpack.c.h.b16 %v4223
        %v4315 = vunpack.c.l.b16 %v4224
        %v4316 = vunpack.c.h.b16 %v4224
        %v4317 = vunpack.c.l.b16 %v4225
        %v4318 = vunpack.c.h.b16 %v4225
        %v4319 = vunpack.c.l.b16 %v4226
        %v4320 = vunpack.c.h.b16 %v4226
        %v4321 = vunpack.c.l.b16 %v4227
        %v4322 = vunpack.c.h.b16 %v4227
        %v4323 = vunpack.c.l.b16 %v4228
        %v4324 = vunpack.c.h.b16 %v4228
        %v4325 = vunpack.c.l.b16 %v4229
        %v4326 = vunpack.c.h.b16 %v4229
        %v4327 = vunpack.c.l.b16 %v4230
        %v4328 = vunpack.c.h.b16 %v4230
        %v4329 = vunpack.c.l.b16 %v4231
        %v4330 = vunpack.c.h.b16 %v4231
        %v4331 = vunpack.c.l.b16 %v4232
        %v4332 = vunpack.c.h.b16 %v4232
        %v4333 = vunpack.c.l.b16 %v4233
        %v4334 = vunpack.c.h.b16 %v4233
        %v4335 = vpack.c.b16 %v4275, %v4271
        %v4336 = vpack.c.b16 %v4276, %v4272
        %v4337 = vpack.c.b16 %v4277, %v4273
        %v4338 = vpack.c.b16 %v4278, %v4274
        %v4339 = vpack.c.b16 %v4283, %v4279
        %v4340 = vpack.c.b16 %v4284, %v4280
        %v4341 = vpack.c.b16 %v4285, %v4281
        %v4342 = vpack.c.b16 %v4286, %v4282
        %v4343 = vpack.c.b16 %v4291, %v4287
        %v4344 = vpack.c.b16 %v4292, %v4288
        %v4345 = vpack.c.b16 %v4293, %v4289
        %v4346 = vpack.c.b16 %v4294, %v4290
        %v4347 = vpack.c.b16 %v4299, %v4295
        %v4348 = vpack.c.b16 %v4300, %v4296
        %v4349 = vpack.c.b16 %v4301, %v4297
        %v4350 = vpack.c.b16 %v4302, %v4298
        %v4351 = vpack.c.b16 %v4307, %v4303
        %v4352 = vpack.c.b16 %v4308, %v4304
        %v4353 = vpack.c.b16 %v4309, %v4305
        %v4354 = vpack.c.b16 %v4310, %v4306
        %v4355 = vpack.c.b16 %v4315, %v4311
        %v4356 = vpack.c.b16 %v4316, %v4312
        %v4357 = vpack.c.b16 %v4317, %v4313
        %v4358 = vpack.c.b16 %v4318, %v4314
        %v4359 = vpack.c.b16 %v4323, %v4319
        %v4360 = vpack.c.b16 %v4324, %v4320
        %v4361 = vpack.c.b16 %v4325, %v4321
        %v4362 = vpack.c.b16 %v4326, %v4322
        %v4363 = vpack.c.b16 %v4331, %v4327
        %v4364 = vpack.c.b16 %v4332, %v4328
        %v4365 = vpack.c.b16 %v4333, %v4329
        %v4366 = vpack.c.b16 %v4334, %v4330
        %4399 = vmatprep.subr.bf16.mxu0 %v4336
        %4400 = vmatpush1.bf16.msra.mxu0 %v4335
        %4401 = vmatprep.subr.bf16.mxu0 %v4340
        %4402 = vmatpush1.bf16.msra.mxu0 %v4339
        %4403 = vmatprep.subr.bf16.mxu0 %v4344
        %4404 = vmatpush1.bf16.msra.mxu0 %v4343
        %4405 = vmatprep.subr.bf16.mxu0 %v4348
        %4406 = vmatpush1.bf16.msra.mxu0 %v4347
        %4407 = vmatprep.subr.bf16.mxu0 %v4352
        %4408 = vmatpush1.bf16.msra.mxu0 %v4351
        %4409 = vmatprep.subr.bf16.mxu0 %v4356
        %4410 = vmatpush1.bf16.msra.mxu0 %v4355
        %4411 = vmatprep.subr.bf16.mxu0 %v4360
        %4412 = vmatpush1.bf16.msra.mxu0 %v4359
        %4413 = vmatprep.subr.bf16.mxu0 %v4364
        %4414 = vmatpush1.bf16.msra.mxu0 %v4363
        %4415 = vmatprep.subr.bf16.mxu0 0
        %4416 = vmatpush1.bf16.msra.mxu0 0
        %4417 = vmatprep.subr.bf16.mxu0 0
        %4418 = vmatpush1.bf16.msra.mxu0 0
        %4419 = vmatprep.subr.bf16.mxu0 0
        %4420 = vmatpush1.bf16.msra.mxu0 0
        %4421 = vmatprep.subr.bf16.mxu0 0
        %4422 = vmatpush1.bf16.msra.mxu0 0
        %4423 = vmatprep.subr.bf16.mxu0 0
        %4424 = vmatpush1.bf16.msra.mxu0 0
        %4425 = vmatprep.subr.bf16.mxu0 0
        %4426 = vmatpush1.bf16.msra.mxu0 0
        %4427 = vmatprep.subr.bf16.mxu0 0
        %4428 = vmatpush1.bf16.msra.mxu0 0
        %4429 = vmatprep.subr.bf16.mxu0 0
        %4430 = vmatpush1.bf16.msra.mxu0 0
        %4431 = vmatprep.mubr.bf16.mxu0 0
        %4432 = vmatmul.mubr.bf16.gmra.mrb[0].mxu0 %v4237
        %v4433 = vpop.f32.mrb[0].mxu0
        %v4434 = vadd.f32 0.0, %v4433
        %v4435 = vpop.f32.mrb[0].mxu0
        %v4436 = vadd.f32 0.0, %v4435
        %v4437 = vpop.f32.mrb[0].mxu0
        %v4438 = vpop.f32.mrb[0].mxu0
        %4439 = vdwg.mxu0
        %4440 = vmatprep.subr.bf16.mxu0 %v4338
        %4441 = vmatpush1.bf16.msra.mxu0 %v4337
        %4442 = vmatprep.subr.bf16.mxu0 %v4342
        %4443 = vmatpush1.bf16.msra.mxu0 %v4341
        %4444 = vmatprep.subr.bf16.mxu0 %v4346
        %4445 = vmatpush1.bf16.msra.mxu0 %v4345
        %4446 = vmatprep.subr.bf16.mxu0 %v4350
        %4447 = vmatpush1.bf16.msra.mxu0 %v4349
        %4448 = vmatprep.subr.bf16.mxu0 %v4354
        %4449 = vmatpush1.bf16.msra.mxu0 %v4353
        %4450 = vmatprep.subr.bf16.mxu0 %v4358
        %4451 = vmatpush1.bf16.msra.mxu0 %v4357
        %4452 = vmatprep.subr.bf16.mxu0 %v4362
        %4453 = vmatpush1.bf16.msra.mxu0 %v4361
        %4454 = vmatprep.subr.bf16.mxu0 %v4366
        %4455 = vmatpush1.bf16.msra.mxu0 %v4365
        %4456 = vmatprep.subr.bf16.mxu0 0
        %4457 = vmatpush1.bf16.msra.mxu0 0
        %4458 = vmatprep.subr.bf16.mxu0 0
        %4459 = vmatpush1.bf16.msra.mxu0 0
        %4460 = vmatprep.subr.bf16.mxu0 0
        %4461 = vmatpush1.bf16.msra.mxu0 0
        %4462 = vmatprep.subr.bf16.mxu0 0
        %4463 = vmatpush1.bf16.msra.mxu0 0
        %4464 = vmatprep.subr.bf16.mxu0 0
        %4465 = vmatpush1.bf16.msra.mxu0 0
        %4466 = vmatprep.subr.bf16.mxu0 0
        %4467 = vmatpush1.bf16.msra.mxu0 0
        %4468 = vmatprep.subr.bf16.mxu0 0
        %4469 = vmatpush1.bf16.msra.mxu0 0
        %4470 = vmatprep.subr.bf16.mxu0 0
        %4471 = vmatpush1.bf16.msra.mxu0 0
        %4472 = vmatprep.mubr.bf16.mxu0 0
        %4473 = vmatmul.mubr.bf16.gmra.mrb[0].mxu0 %v4237
        %v4474 = vpop.f32.mrb[0].mxu0
        %v4475 = vadd.f32 0.0, %v4474
        %v4476 = vpop.f32.mrb[0].mxu0
        %v4477 = vadd.f32 0.0, %v4476
        %v4478 = vpop.f32.mrb[0].mxu0
        %v4479 = vpop.f32.mrb[0].mxu0
        %4480 = vdwg.mxu0
        %v4481 = vadd.f32 %v4197, %v4434
        %v4482 = vadd.f32 %v4198, %v4436
        %v4483 = vadd.f32 %v4199, %v4475
        %v4484 = vadd.f32 %v4200, %v4477
        %s4485 = scalar_lea.vmem %s375, 3328 [#allocation10]
        %v4486 = vld [vmem:[%s4485] sm:$0xff]
        %v4487 = vld [vmem:[%s4485 + $0x8] sm:$0xff]
        %v4488 = vld [vmem:[%s4485 + $0x10] sm:$0xff]
        %v4489 = vld [vmem:[%s4485 + $0x18] sm:$0xff]
        %v4490 = vld [vmem:[%s4485 + $0x20] sm:$0xff]
        %v4491 = vld [vmem:[%s4485 + $0x28] sm:$0xff]
        %v4492 = vld [vmem:[%s4485 + $0x30] sm:$0xff]
        %v4493 = vld [vmem:[%s4485 + $0x38] sm:$0xff]
        %v4494 = vld [vmem:[%s4485 + $0x40] sm:$0xff]
        %v4495 = vld [vmem:[%s4485 + $0x48] sm:$0xff]
        %v4496 = vld [vmem:[%s4485 + $0x50] sm:$0xff]
        %v4497 = vld [vmem:[%s4485 + $0x58] sm:$0xff]
        %v4498 = vld [vmem:[%s4485 + $0x60] sm:$0xff]
        %v4499 = vld [vmem:[%s4485 + $0x68] sm:$0xff]
        %v4500 = vld [vmem:[%s4485 + $0x70] sm:$0xff]
        %v4501 = vld [vmem:[%s4485 + $0x78] sm:$0xff]
        %v4502 = vld [vmem:[%s4485 + $0x80] sm:$0xff]
        %v4503 = vld [vmem:[%s4485 + $0x88] sm:$0xff]
        %v4504 = vld [vmem:[%s4485 + $0x90] sm:$0xff]
        %v4505 = vld [vmem:[%s4485 + $0x98] sm:$0xff]
        %v4506 = vld [vmem:[%s4485 + $0xa0] sm:$0xff]
        %v4507 = vld [vmem:[%s4485 + $0xa8] sm:$0xff]
        %v4508 = vld [vmem:[%s4485 + $0xb0] sm:$0xff]
        %v4509 = vld [vmem:[%s4485 + $0xb8] sm:$0xff]
        %v4510 = vld [vmem:[%s4485 + $0xc0] sm:$0xff]
        %v4511 = vld [vmem:[%s4485 + $0xc8] sm:$0xff]
        %v4512 = vld [vmem:[%s4485 + $0xd0] sm:$0xff]
        %v4513 = vld [vmem:[%s4485 + $0xd8] sm:$0xff]
        %v4514 = vld [vmem:[%s4485 + $0xe0] sm:$0xff]
        %v4515 = vld [vmem:[%s4485 + $0xe8] sm:$0xff]
        %v4516 = vld [vmem:[%s4485 + $0xf0] sm:$0xff]
        %v4517 = vld [vmem:[%s4485 + $0xf8] sm:$0xff]
        %v4518 = vrot.slane %v3098, 5
        %v4519 = vrot.slane %v3099, 4
        %v4520 = vsel %vm869, %v4519, %v4518
        %v4521 = vpack.c.b16 %v4520, %v4520
        %v4555 = vunpack.c.l.b16 %v4486
        %v4556 = vunpack.c.h.b16 %v4486
        %v4557 = vunpack.c.l.b16 %v4487
        %v4558 = vunpack.c.h.b16 %v4487
        %v4559 = vunpack.c.l.b16 %v4488
        %v4560 = vunpack.c.h.b16 %v4488
        %v4561 = vunpack.c.l.b16 %v4489
        %v4562 = vunpack.c.h.b16 %v4489
        %v4563 = vunpack.c.l.b16 %v4490
        %v4564 = vunpack.c.h.b16 %v4490
        %v4565 = vunpack.c.l.b16 %v4491
        %v4566 = vunpack.c.h.b16 %v4491
        %v4567 = vunpack.c.l.b16 %v4492
        %v4568 = vunpack.c.h.b16 %v4492
        %v4569 = vunpack.c.l.b16 %v4493
        %v4570 = vunpack.c.h.b16 %v4493
        %v4571 = vunpack.c.l.b16 %v4494
        %v4572 = vunpack.c.h.b16 %v4494
        %v4573 = vunpack.c.l.b16 %v4495
        %v4574 = vunpack.c.h.b16 %v4495
        %v4575 = vunpack.c.l.b16 %v4496
        %v4576 = vunpack.c.h.b16 %v4496
        %v4577 = vunpack.c.l.b16 %v4497
        %v4578 = vunpack.c.h.b16 %v4497
        %v4579 = vunpack.c.l.b16 %v4498
        %v4580 = vunpack.c.h.b16 %v4498
        %v4581 = vunpack.c.l.b16 %v4499
        %v4582 = vunpack.c.h.b16 %v4499
        %v4583 = vunpack.c.l.b16 %v4500
        %v4584 = vunpack.c.h.b16 %v4500
        %v4585 = vunpack.c.l.b16 %v4501
        %v4586 = vunpack.c.h.b16 %v4501
        %v4587 = vunpack.c.l.b16 %v4502
        %v4588 = vunpack.c.h.b16 %v4502
        %v4589 = vunpack.c.l.b16 %v4503
        %v4590 = vunpack.c.h.b16 %v4503
        %v4591 = vunpack.c.l.b16 %v4504
        %v4592 = vunpack.c.h.b16 %v4504
        %v4593 = vunpack.c.l.b16 %v4505
        %v4594 = vunpack.c.h.b16 %v4505
        %v4595 = vunpack.c.l.b16 %v4506
        %v4596 = vunpack.c.h.b16 %v4506
        %v4597 = vunpack.c.l.b16 %v4507
        %v4598 = vunpack.c.h.b16 %v4507
        %v4599 = vunpack.c.l.b16 %v4508
        %v4600 = vunpack.c.h.b16 %v4508
        %v4601 = vunpack.c.l.b16 %v4509
        %v4602 = vunpack.c.h.b16 %v4509
        %v4603 = vunpack.c.l.b16 %v4510
        %v4604 = vunpack.c.h.b16 %v4510
        %v4605 = vunpack.c.l.b16 %v4511
        %v4606 = vunpack.c.h.b16 %v4511
        %v4607 = vunpack.c.l.b16 %v4512
        %v4608 = vunpack.c.h.b16 %v4512
        %v4609 = vunpack.c.l.b16 %v4513
        %v4610 = vunpack.c.h.b16 %v4513
        %v4611 = vunpack.c.l.b16 %v4514
        %v4612 = vunpack.c.h.b16 %v4514
        %v4613 = vunpack.c.l.b16 %v4515
        %v4614 = vunpack.c.h.b16 %v4515
        %v4615 = vunpack.c.l.b16 %v4516
        %v4616 = vunpack.c.h.b16 %v4516
        %v4617 = vunpack.c.l.b16 %v4517
        %v4618 = vunpack.c.h.b16 %v4517
        %v4619 = vpack.c.b16 %v4559, %v4555
        %v4620 = vpack.c.b16 %v4560, %v4556
        %v4621 = vpack.c.b16 %v4561, %v4557
        %v4622 = vpack.c.b16 %v4562, %v4558
        %v4623 = vpack.c.b16 %v4567, %v4563
        %v4624 = vpack.c.b16 %v4568, %v4564
        %v4625 = vpack.c.b16 %v4569, %v4565
        %v4626 = vpack.c.b16 %v4570, %v4566
        %v4627 = vpack.c.b16 %v4575, %v4571
        %v4628 = vpack.c.b16 %v4576, %v4572
        %v4629 = vpack.c.b16 %v4577, %v4573
        %v4630 = vpack.c.b16 %v4578, %v4574
        %v4631 = vpack.c.b16 %v4583, %v4579
        %v4632 = vpack.c.b16 %v4584, %v4580
        %v4633 = vpack.c.b16 %v4585, %v4581
        %v4634 = vpack.c.b16 %v4586, %v4582
        %v4635 = vpack.c.b16 %v4591, %v4587
        %v4636 = vpack.c.b16 %v4592, %v4588
        %v4637 = vpack.c.b16 %v4593, %v4589
        %v4638 = vpack.c.b16 %v4594, %v4590
        %v4639 = vpack.c.b16 %v4599, %v4595
        %v4640 = vpack.c.b16 %v4600, %v4596
        %v4641 = vpack.c.b16 %v4601, %v4597
        %v4642 = vpack.c.b16 %v4602, %v4598
        %v4643 = vpack.c.b16 %v4607, %v4603
        %v4644 = vpack.c.b16 %v4608, %v4604
        %v4645 = vpack.c.b16 %v4609, %v4605
        %v4646 = vpack.c.b16 %v4610, %v4606
        %v4647 = vpack.c.b16 %v4615, %v4611
        %v4648 = vpack.c.b16 %v4616, %v4612
        %v4649 = vpack.c.b16 %v4617, %v4613
        %v4650 = vpack.c.b16 %v4618, %v4614
        %4683 = vmatprep.subr.bf16.mxu0 %v4620
        %4684 = vmatpush1.bf16.msra.mxu0 %v4619
        %4685 = vmatprep.subr.bf16.mxu0 %v4624
        %4686 = vmatpush1.bf16.msra.mxu0 %v4623
        %4687 = vmatprep.subr.bf16.mxu0 %v4628
        %4688 = vmatpush1.bf16.msra.mxu0 %v4627
        %4689 = vmatprep.subr.bf16.mxu0 %v4632
        %4690 = vmatpush1.bf16.msra.mxu0 %v4631
        %4691 = vmatprep.subr.bf16.mxu0 %v4636
        %4692 = vmatpush1.bf16.msra.mxu0 %v4635
        %4693 = vmatprep.subr.bf16.mxu0 %v4640
        %4694 = vmatpush1.bf16.msra.mxu0 %v4639
        %4695 = vmatprep.subr.bf16.mxu0 %v4644
        %4696 = vmatpush1.bf16.msra.mxu0 %v4643
        %4697 = vmatprep.subr.bf16.mxu0 %v4648
        %4698 = vmatpush1.bf16.msra.mxu0 %v4647
        %4699 = vmatprep.subr.bf16.mxu0 0
        %4700 = vmatpush1.bf16.msra.mxu0 0
        %4701 = vmatprep.subr.bf16.mxu0 0
        %4702 = vmatpush1.bf16.msra.mxu0 0
        %4703 = vmatprep.subr.bf16.mxu0 0
        %4704 = vmatpush1.bf16.msra.mxu0 0
        %4705 = vmatprep.subr.bf16.mxu0 0
        %4706 = vmatpush1.bf16.msra.mxu0 0
        %4707 = vmatprep.subr.bf16.mxu0 0
        %4708 = vmatpush1.bf16.msra.mxu0 0
        %4709 = vmatprep.subr.bf16.mxu0 0
        %4710 = vmatpush1.bf16.msra.mxu0 0
        %4711 = vmatprep.subr.bf16.mxu0 0
        %4712 = vmatpush1.bf16.msra.mxu0 0
        %4713 = vmatprep.subr.bf16.mxu0 0
        %4714 = vmatpush1.bf16.msra.mxu0 0
        %4715 = vmatprep.mubr.bf16.mxu0 0
        %4716 = vmatmul.mubr.bf16.gmra.mrb[0].mxu0 %v4521
        %v4717 = vpop.f32.mrb[0].mxu0
        %v4718 = vadd.f32 0.0, %v4717
        %v4719 = vpop.f32.mrb[0].mxu0
        %v4720 = vadd.f32 0.0, %v4719
        %v4721 = vpop.f32.mrb[0].mxu0
        %v4722 = vpop.f32.mrb[0].mxu0
        %4723 = vdwg.mxu0
        %4724 = vmatprep.subr.bf16.mxu0 %v4622
        %4725 = vmatpush1.bf16.msra.mxu0 %v4621
        %4726 = vmatprep.subr.bf16.mxu0 %v4626
        %4727 = vmatpush1.bf16.msra.mxu0 %v4625
        %4728 = vmatprep.subr.bf16.mxu0 %v4630
        %4729 = vmatpush1.bf16.msra.mxu0 %v4629
        %4730 = vmatprep.subr.bf16.mxu0 %v4634
        %4731 = vmatpush1.bf16.msra.mxu0 %v4633
        %4732 = vmatprep.subr.bf16.mxu0 %v4638
        %4733 = vmatpush1.bf16.msra.mxu0 %v4637
        %4734 = vmatprep.subr.bf16.mxu0 %v4642
        %4735 = vmatpush1.bf16.msra.mxu0 %v4641
        %4736 = vmatprep.subr.bf16.mxu0 %v4646
        %4737 = vmatpush1.bf16.msra.mxu0 %v4645
        %4738 = vmatprep.subr.bf16.mxu0 %v4650
        %4739 = vmatpush1.bf16.msra.mxu0 %v4649
        %4740 = vmatprep.subr.bf16.mxu0 0
        %4741 = vmatpush1.bf16.msra.mxu0 0
        %4742 = vmatprep.subr.bf16.mxu0 0
        %4743 = vmatpush1.bf16.msra.mxu0 0
        %4744 = vmatprep.subr.bf16.mxu0 0
        %4745 = vmatpush1.bf16.msra.mxu0 0
        %4746 = vmatprep.subr.bf16.mxu0 0
        %4747 = vmatpush1.bf16.msra.mxu0 0
        %4748 = vmatprep.subr.bf16.mxu0 0
        %4749 = vmatpush1.bf16.msra.mxu0 0
        %4750 = vmatprep.subr.bf16.mxu0 0
        %4751 = vmatpush1.bf16.msra.mxu0 0
        %4752 = vmatprep.subr.bf16.mxu0 0
        %4753 = vmatpush1.bf16.msra.mxu0 0
        %4754 = vmatprep.subr.bf16.mxu0 0
        %4755 = vmatpush1.bf16.msra.mxu0 0
        %4756 = vmatprep.mubr.bf16.mxu0 0
        %4757 = vmatmul.mubr.bf16.gmra.mrb[0].mxu0 %v4521
        %v4758 = vpop.f32.mrb[0].mxu0
        %v4759 = vadd.f32 0.0, %v4758
        %v4760 = vpop.f32.mrb[0].mxu0
        %v4761 = vadd.f32 0.0, %v4760
        %v4762 = vpop.f32.mrb[0].mxu0
        %v4763 = vpop.f32.mrb[0].mxu0
        %4764 = vdwg.mxu0
        %v4765 = vadd.f32 %v4481, %v4718
        %v4766 = vadd.f32 %v4482, %v4720
        %v4767 = vadd.f32 %v4483, %v4759
        %v4768 = vadd.f32 %v4484, %v4761
        %s4769 = scalar_lea.vmem %s375, 3584 [#allocation10]
        %v4770 = vld [vmem:[%s4769] sm:$0xff]
        %v4771 = vld [vmem:[%s4769 + $0x8] sm:$0xff]
        %v4772 = vld [vmem:[%s4769 + $0x10] sm:$0xff]
        %v4773 = vld [vmem:[%s4769 + $0x18] sm:$0xff]
        %v4774 = vld [vmem:[%s4769 + $0x20] sm:$0xff]
        %v4775 = vld [vmem:[%s4769 + $0x28] sm:$0xff]
        %v4776 = vld [vmem:[%s4769 + $0x30] sm:$0xff]
        %v4777 = vld [vmem:[%s4769 + $0x38] sm:$0xff]
        %v4778 = vld [vmem:[%s4769 + $0x40] sm:$0xff]
        %v4779 = vld [vmem:[%s4769 + $0x48] sm:$0xff]
        %v4780 = vld [vmem:[%s4769 + $0x50] sm:$0xff]
        %v4781 = vld [vmem:[%s4769 + $0x58] sm:$0xff]
        %v4782 = vld [vmem:[%s4769 + $0x60] sm:$0xff]
        %v4783 = vld [vmem:[%s4769 + $0x68] sm:$0xff]
        %v4784 = vld [vmem:[%s4769 + $0x70] sm:$0xff]
        %v4785 = vld [vmem:[%s4769 + $0x78] sm:$0xff]
        %v4786 = vld [vmem:[%s4769 + $0x80] sm:$0xff]
        %v4787 = vld [vmem:[%s4769 + $0x88] sm:$0xff]
        %v4788 = vld [vmem:[%s4769 + $0x90] sm:$0xff]
        %v4789 = vld [vmem:[%s4769 + $0x98] sm:$0xff]
        %v4790 = vld [vmem:[%s4769 + $0xa0] sm:$0xff]
        %v4791 = vld [vmem:[%s4769 + $0xa8] sm:$0xff]
        %v4792 = vld [vmem:[%s4769 + $0xb0] sm:$0xff]
        %v4793 = vld [vmem:[%s4769 + $0xb8] sm:$0xff]
        %v4794 = vld [vmem:[%s4769 + $0xc0] sm:$0xff]
        %v4795 = vld [vmem:[%s4769 + $0xc8] sm:$0xff]
        %v4796 = vld [vmem:[%s4769 + $0xd0] sm:$0xff]
        %v4797 = vld [vmem:[%s4769 + $0xd8] sm:$0xff]
        %v4798 = vld [vmem:[%s4769 + $0xe0] sm:$0xff]
        %v4799 = vld [vmem:[%s4769 + $0xe8] sm:$0xff]
        %v4800 = vld [vmem:[%s4769 + $0xf0] sm:$0xff]
        %v4801 = vld [vmem:[%s4769 + $0xf8] sm:$0xff]
        %v4802 = vrot.slane %v3098, 6
        %v4803 = vrot.slane %v3099, 5
        %v4804 = vsel %vm869, %v4803, %v4802
        %v4805 = vpack.c.b16 %v4804, %v4804
        %v4839 = vunpack.c.l.b16 %v4770
        %v4840 = vunpack.c.h.b16 %v4770
        %v4841 = vunpack.c.l.b16 %v4771
        %v4842 = vunpack.c.h.b16 %v4771
        %v4843 = vunpack.c.l.b16 %v4772
        %v4844 = vunpack.c.h.b16 %v4772
        %v4845 = vunpack.c.l.b16 %v4773
        %v4846 = vunpack.c.h.b16 %v4773
        %v4847 = vunpack.c.l.b16 %v4774
        %v4848 = vunpack.c.h.b16 %v4774
        %v4849 = vunpack.c.l.b16 %v4775
        %v4850 = vunpack.c.h.b16 %v4775
        %v4851 = vunpack.c.l.b16 %v4776
        %v4852 = vunpack.c.h.b16 %v4776
        %v4853 = vunpack.c.l.b16 %v4777
        %v4854 = vunpack.c.h.b16 %v4777
        %v4855 = vunpack.c.l.b16 %v4778
        %v4856 = vunpack.c.h.b16 %v4778
        %v4857 = vunpack.c.l.b16 %v4779
        %v4858 = vunpack.c.h.b16 %v4779
        %v4859 = vunpack.c.l.b16 %v4780
        %v4860 = vunpack.c.h.b16 %v4780
        %v4861 = vunpack.c.l.b16 %v4781
        %v4862 = vunpack.c.h.b16 %v4781
        %v4863 = vunpack.c.l.b16 %v4782
        %v4864 = vunpack.c.h.b16 %v4782
        %v4865 = vunpack.c.l.b16 %v4783
        %v4866 = vunpack.c.h.b16 %v4783
        %v4867 = vunpack.c.l.b16 %v4784
        %v4868 = vunpack.c.h.b16 %v4784
        %v4869 = vunpack.c.l.b16 %v4785
        %v4870 = vunpack.c.h.b16 %v4785
        %v4871 = vunpack.c.l.b16 %v4786
        %v4872 = vunpack.c.h.b16 %v4786
        %v4873 = vunpack.c.l.b16 %v4787
        %v4874 = vunpack.c.h.b16 %v4787
        %v4875 = vunpack.c.l.b16 %v4788
        %v4876 = vunpack.c.h.b16 %v4788
        %v4877 = vunpack.c.l.b16 %v4789
        %v4878 = vunpack.c.h.b16 %v4789
        %v4879 = vunpack.c.l.b16 %v4790
        %v4880 = vunpack.c.h.b16 %v4790
        %v4881 = vunpack.c.l.b16 %v4791
        %v4882 = vunpack.c.h.b16 %v4791
        %v4883 = vunpack.c.l.b16 %v4792
        %v4884 = vunpack.c.h.b16 %v4792
        %v4885 = vunpack.c.l.b16 %v4793
        %v4886 = vunpack.c.h.b16 %v4793
        %v4887 = vunpack.c.l.b16 %v4794
        %v4888 = vunpack.c.h.b16 %v4794
        %v4889 = vunpack.c.l.b16 %v4795
        %v4890 = vunpack.c.h.b16 %v4795
        %v4891 = vunpack.c.l.b16 %v4796
        %v4892 = vunpack.c.h.b16 %v4796
        %v4893 = vunpack.c.l.b16 %v4797
        %v4894 = vunpack.c.h.b16 %v4797
        %v4895 = vunpack.c.l.b16 %v4798
        %v4896 = vunpack.c.h.b16 %v4798
        %v4897 = vunpack.c.l.b16 %v4799
        %v4898 = vunpack.c.h.b16 %v4799
        %v4899 = vunpack.c.l.b16 %v4800
        %v4900 = vunpack.c.h.b16 %v4800
        %v4901 = vunpack.c.l.b16 %v4801
        %v4902 = vunpack.c.h.b16 %v4801
        %v4903 = vpack.c.b16 %v4843, %v4839
        %v4904 = vpack.c.b16 %v4844, %v4840
        %v4905 = vpack.c.b16 %v4845, %v4841
        %v4906 = vpack.c.b16 %v4846, %v4842
        %v4907 = vpack.c.b16 %v4851, %v4847
        %v4908 = vpack.c.b16 %v4852, %v4848
        %v4909 = vpack.c.b16 %v4853, %v4849
        %v4910 = vpack.c.b16 %v4854, %v4850
        %v4911 = vpack.c.b16 %v4859, %v4855
        %v4912 = vpack.c.b16 %v4860, %v4856
        %v4913 = vpack.c.b16 %v4861, %v4857
        %v4914 = vpack.c.b16 %v4862, %v4858
        %v4915 = vpack.c.b16 %v4867, %v4863
        %v4916 = vpack.c.b16 %v4868, %v4864
        %v4917 = vpack.c.b16 %v4869, %v4865
        %v4918 = vpack.c.b16 %v4870, %v4866
        %v4919 = vpack.c.b16 %v4875, %v4871
        %v4920 = vpack.c.b16 %v4876, %v4872
        %v4921 = vpack.c.b16 %v4877, %v4873
        %v4922 = vpack.c.b16 %v4878, %v4874
        %v4923 = vpack.c.b16 %v4883, %v4879
        %v4924 = vpack.c.b16 %v4884, %v4880
        %v4925 = vpack.c.b16 %v4885, %v4881
        %v4926 = vpack.c.b16 %v4886, %v4882
        %v4927 = vpack.c.b16 %v4891, %v4887
        %v4928 = vpack.c.b16 %v4892, %v4888
        %v4929 = vpack.c.b16 %v4893, %v4889
        %v4930 = vpack.c.b16 %v4894, %v4890
        %v4931 = vpack.c.b16 %v4899, %v4895
        %v4932 = vpack.c.b16 %v4900, %v4896
        %v4933 = vpack.c.b16 %v4901, %v4897
        %v4934 = vpack.c.b16 %v4902, %v4898
        %4967 = vmatprep.subr.bf16.mxu0 %v4904
        %4968 = vmatpush1.bf16.msra.mxu0 %v4903
        %4969 = vmatprep.subr.bf16.mxu0 %v4908
        %4970 = vmatpush1.bf16.msra.mxu0 %v4907
        %4971 = vmatprep.subr.bf16.mxu0 %v4912
        %4972 = vmatpush1.bf16.msra.mxu0 %v4911
        %4973 = vmatprep.subr.bf16.mxu0 %v4916
        %4974 = vmatpush1.bf16.msra.mxu0 %v4915
        %4975 = vmatprep.subr.bf16.mxu0 %v4920
        %4976 = vmatpush1.bf16.msra.mxu0 %v4919
        %4977 = vmatprep.subr.bf16.mxu0 %v4924
        %4978 = vmatpush1.bf16.msra.mxu0 %v4923
        %4979 = vmatprep.subr.bf16.mxu0 %v4928
        %4980 = vmatpush1.bf16.msra.mxu0 %v4927
        %4981 = vmatprep.subr.bf16.mxu0 %v4932
        %4982 = vmatpush1.bf16.msra.mxu0 %v4931
        %4983 = vmatprep.subr.bf16.mxu0 0
        %4984 = vmatpush1.bf16.msra.mxu0 0
        %4985 = vmatprep.subr.bf16.mxu0 0
        %4986 = vmatpush1.bf16.msra.mxu0 0
        %4987 = vmatprep.subr.bf16.mxu0 0
        %4988 = vmatpush1.bf16.msra.mxu0 0
        %4989 = vmatprep.subr.bf16.mxu0 0
        %4990 = vmatpush1.bf16.msra.mxu0 0
        %4991 = vmatprep.subr.bf16.mxu0 0
        %4992 = vmatpush1.bf16.msra.mxu0 0
        %4993 = vmatprep.subr.bf16.mxu0 0
        %4994 = vmatpush1.bf16.msra.mxu0 0
        %4995 = vmatprep.subr.bf16.mxu0 0
        %4996 = vmatpush1.bf16.msra.mxu0 0
        %4997 = vmatprep.subr.bf16.mxu0 0
        %4998 = vmatpush1.bf16.msra.mxu0 0
        %4999 = vmatprep.mubr.bf16.mxu0 0
        %5000 = vmatmul.mubr.bf16.gmra.mrb[0].mxu0 %v4805
        %v5001 = vpop.f32.mrb[0].mxu0
        %v5002 = vadd.f32 0.0, %v5001
        %v5003 = vpop.f32.mrb[0].mxu0
        %v5004 = vadd.f32 0.0, %v5003
        %v5005 = vpop.f32.mrb[0].mxu0
        %v5006 = vpop.f32.mrb[0].mxu0
        %5007 = vdwg.mxu0
        %5008 = vmatprep.subr.bf16.mxu0 %v4906
        %5009 = vmatpush1.bf16.msra.mxu0 %v4905
        %5010 = vmatprep.subr.bf16.mxu0 %v4910
        %5011 = vmatpush1.bf16.msra.mxu0 %v4909
        %5012 = vmatprep.subr.bf16.mxu0 %v4914
        %5013 = vmatpush1.bf16.msra.mxu0 %v4913
        %5014 = vmatprep.subr.bf16.mxu0 %v4918
        %5015 = vmatpush1.bf16.msra.mxu0 %v4917
        %5016 = vmatprep.subr.bf16.mxu0 %v4922
        %5017 = vmatpush1.bf16.msra.mxu0 %v4921
        %5018 = vmatprep.subr.bf16.mxu0 %v4926
        %5019 = vmatpush1.bf16.msra.mxu0 %v4925
        %5020 = vmatprep.subr.bf16.mxu0 %v4930
        %5021 = vmatpush1.bf16.msra.mxu0 %v4929
        %5022 = vmatprep.subr.bf16.mxu0 %v4934
        %5023 = vmatpush1.bf16.msra.mxu0 %v4933
        %5024 = vmatprep.subr.bf16.mxu0 0
        %5025 = vmatpush1.bf16.msra.mxu0 0
        %5026 = vmatprep.subr.bf16.mxu0 0
        %5027 = vmatpush1.bf16.msra.mxu0 0
        %5028 = vmatprep.subr.bf16.mxu0 0
        %5029 = vmatpush1.bf16.msra.mxu0 0
        %5030 = vmatprep.subr.bf16.mxu0 0
        %5031 = vmatpush1.bf16.msra.mxu0 0
        %5032 = vmatprep.subr.bf16.mxu0 0
        %5033 = vmatpush1.bf16.msra.mxu0 0
        %5034 = vmatprep.subr.bf16.mxu0 0
        %5035 = vmatpush1.bf16.msra.mxu0 0
        %5036 = vmatprep.subr.bf16.mxu0 0
        %5037 = vmatpush1.bf16.msra.mxu0 0
        %5038 = vmatprep.subr.bf16.mxu0 0
        %5039 = vmatpush1.bf16.msra.mxu0 0
        %5040 = vmatprep.mubr.bf16.mxu0 0
        %5041 = vmatmul.mubr.bf16.gmra.mrb[0].mxu0 %v4805
        %v5042 = vpop.f32.mrb[0].mxu0
        %v5043 = vadd.f32 0.0, %v5042
        %v5044 = vpop.f32.mrb[0].mxu0
        %v5045 = vadd.f32 0.0, %v5044
        %v5046 = vpop.f32.mrb[0].mxu0
        %v5047 = vpop.f32.mrb[0].mxu0
        %5048 = vdwg.mxu0
        %v5049 = vadd.f32 %v4765, %v5002
        %v5050 = vadd.f32 %v4766, %v5004
        %v5051 = vadd.f32 %v4767, %v5043
        %v5052 = vadd.f32 %v4768, %v5045
        %s5053 = scalar_lea.vmem %s375, 3840 [#allocation10]
        %v5054 = vld [vmem:[%s5053] sm:$0xff]
        %v5055 = vld [vmem:[%s5053 + $0x8] sm:$0xff]
        %v5056 = vld [vmem:[%s5053 + $0x10] sm:$0xff]
        %v5057 = vld [vmem:[%s5053 + $0x18] sm:$0xff]
        %v5058 = vld [vmem:[%s5053 + $0x20] sm:$0xff]
        %v5059 = vld [vmem:[%s5053 + $0x28] sm:$0xff]
        %v5060 = vld [vmem:[%s5053 + $0x30] sm:$0xff]
        %v5061 = vld [vmem:[%s5053 + $0x38] sm:$0xff]
        %v5062 = vld [vmem:[%s5053 + $0x40] sm:$0xff]
        %v5063 = vld [vmem:[%s5053 + $0x48] sm:$0xff]
        %v5064 = vld [vmem:[%s5053 + $0x50] sm:$0xff]
        %v5065 = vld [vmem:[%s5053 + $0x58] sm:$0xff]
        %v5066 = vld [vmem:[%s5053 + $0x60] sm:$0xff]
        %v5067 = vld [vmem:[%s5053 + $0x68] sm:$0xff]
        %v5068 = vld [vmem:[%s5053 + $0x70] sm:$0xff]
        %v5069 = vld [vmem:[%s5053 + $0x78] sm:$0xff]
        %v5070 = vld [vmem:[%s5053 + $0x80] sm:$0xff]
        %v5071 = vld [vmem:[%s5053 + $0x88] sm:$0xff]
        %v5072 = vld [vmem:[%s5053 + $0x90] sm:$0xff]
        %v5073 = vld [vmem:[%s5053 + $0x98] sm:$0xff]
        %v5074 = vld [vmem:[%s5053 + $0xa0] sm:$0xff]
        %v5075 = vld [vmem:[%s5053 + $0xa8] sm:$0xff]
        %v5076 = vld [vmem:[%s5053 + $0xb0] sm:$0xff]
        %v5077 = vld [vmem:[%s5053 + $0xb8] sm:$0xff]
        %v5078 = vld [vmem:[%s5053 + $0xc0] sm:$0xff]
        %v5079 = vld [vmem:[%s5053 + $0xc8] sm:$0xff]
        %v5080 = vld [vmem:[%s5053 + $0xd0] sm:$0xff]
        %v5081 = vld [vmem:[%s5053 + $0xd8] sm:$0xff]
        %v5082 = vld [vmem:[%s5053 + $0xe0] sm:$0xff]
        %v5083 = vld [vmem:[%s5053 + $0xe8] sm:$0xff]
        %v5084 = vld [vmem:[%s5053 + $0xf0] sm:$0xff]
        %v5085 = vld [vmem:[%s5053 + $0xf8] sm:$0xff]
        %v5086 = vrot.slane %v3098, 7
        %v5087 = vrot.slane %v3099, 6
        %v5088 = vsel %vm869, %v5087, %v5086
        %v5089 = vpack.c.b16 %v5088, %v5088
        %v5123 = vunpack.c.l.b16 %v5054
        %v5124 = vunpack.c.h.b16 %v5054
        %v5125 = vunpack.c.l.b16 %v5055
        %v5126 = vunpack.c.h.b16 %v5055
        %v5127 = vunpack.c.l.b16 %v5056
        %v5128 = vunpack.c.h.b16 %v5056
        %v5129 = vunpack.c.l.b16 %v5057
        %v5130 = vunpack.c.h.b16 %v5057
        %v5131 = vunpack.c.l.b16 %v5058
        %v5132 = vunpack.c.h.b16 %v5058
        %v5133 = vunpack.c.l.b16 %v5059
        %v5134 = vunpack.c.h.b16 %v5059
        %v5135 = vunpack.c.l.b16 %v5060
        %v5136 = vunpack.c.h.b16 %v5060
        %v5137 = vunpack.c.l.b16 %v5061
        %v5138 = vunpack.c.h.b16 %v5061
        %v5139 = vunpack.c.l.b16 %v5062
        %v5140 = vunpack.c.h.b16 %v5062
        %v5141 = vunpack.c.l.b16 %v5063
        %v5142 = vunpack.c.h.b16 %v5063
        %v5143 = vunpack.c.l.b16 %v5064
        %v5144 = vunpack.c.h.b16 %v5064
        %v5145 = vunpack.c.l.b16 %v5065
        %v5146 = vunpack.c.h.b16 %v5065
        %v5147 = vunpack.c.l.b16 %v5066
        %v5148 = vunpack.c.h.b16 %v5066
        %v5149 = vunpack.c.l.b16 %v5067
        %v5150 = vunpack.c.h.b16 %v5067
        %v5151 = vunpack.c.l.b16 %v5068
        %v5152 = vunpack.c.h.b16 %v5068
        %v5153 = vunpack.c.l.b16 %v5069
        %v5154 = vunpack.c.h.b16 %v5069
        %v5155 = vunpack.c.l.b16 %v5070
        %v5156 = vunpack.c.h.b16 %v5070
        %v5157 = vunpack.c.l.b16 %v5071
        %v5158 = vunpack.c.h.b16 %v5071
        %v5159 = vunpack.c.l.b16 %v5072
        %v5160 = vunpack.c.h.b16 %v5072
        %v5161 = vunpack.c.l.b16 %v5073
        %v5162 = vunpack.c.h.b16 %v5073
        %v5163 = vunpack.c.l.b16 %v5074
        %v5164 = vunpack.c.h.b16 %v5074
        %v5165 = vunpack.c.l.b16 %v5075
        %v5166 = vunpack.c.h.b16 %v5075
        %v5167 = vunpack.c.l.b16 %v5076
        %v5168 = vunpack.c.h.b16 %v5076
        %v5169 = vunpack.c.l.b16 %v5077
        %v5170 = vunpack.c.h.b16 %v5077
        %v5171 = vunpack.c.l.b16 %v5078
        %v5172 = vunpack.c.h.b16 %v5078
        %v5173 = vunpack.c.l.b16 %v5079
        %v5174 = vunpack.c.h.b16 %v5079
        %v5175 = vunpack.c.l.b16 %v5080
        %v5176 = vunpack.c.h.b16 %v5080
        %v5177 = vunpack.c.l.b16 %v5081
        %v5178 = vunpack.c.h.b16 %v5081
        %v5179 = vunpack.c.l.b16 %v5082
        %v5180 = vunpack.c.h.b16 %v5082
        %v5181 = vunpack.c.l.b16 %v5083
        %v5182 = vunpack.c.h.b16 %v5083
        %v5183 = vunpack.c.l.b16 %v5084
        %v5184 = vunpack.c.h.b16 %v5084
        %v5185 = vunpack.c.l.b16 %v5085
        %v5186 = vunpack.c.h.b16 %v5085
        %v5187 = vpack.c.b16 %v5127, %v5123
        %v5188 = vpack.c.b16 %v5128, %v5124
        %v5189 = vpack.c.b16 %v5129, %v5125
        %v5190 = vpack.c.b16 %v5130, %v5126
        %v5191 = vpack.c.b16 %v5135, %v5131
        %v5192 = vpack.c.b16 %v5136, %v5132
        %v5193 = vpack.c.b16 %v5137, %v5133
        %v5194 = vpack.c.b16 %v5138, %v5134
        %v5195 = vpack.c.b16 %v5143, %v5139
        %v5196 = vpack.c.b16 %v5144, %v5140
        %v5197 = vpack.c.b16 %v5145, %v5141
        %v5198 = vpack.c.b16 %v5146, %v5142
        %v5199 = vpack.c.b16 %v5151, %v5147
        %v5200 = vpack.c.b16 %v5152, %v5148
        %v5201 = vpack.c.b16 %v5153, %v5149
        %v5202 = vpack.c.b16 %v5154, %v5150
        %v5203 = vpack.c.b16 %v5159, %v5155
        %v5204 = vpack.c.b16 %v5160, %v5156
        %v5205 = vpack.c.b16 %v5161, %v5157
        %v5206 = vpack.c.b16 %v5162, %v5158
        %v5207 = vpack.c.b16 %v5167, %v5163
        %v5208 = vpack.c.b16 %v5168, %v5164
        %v5209 = vpack.c.b16 %v5169, %v5165
        %v5210 = vpack.c.b16 %v5170, %v5166
        %v5211 = vpack.c.b16 %v5175, %v5171
        %v5212 = vpack.c.b16 %v5176, %v5172
        %v5213 = vpack.c.b16 %v5177, %v5173
        %v5214 = vpack.c.b16 %v5178, %v5174
        %v5215 = vpack.c.b16 %v5183, %v5179
        %v5216 = vpack.c.b16 %v5184, %v5180
        %v5217 = vpack.c.b16 %v5185, %v5181
        %v5218 = vpack.c.b16 %v5186, %v5182
        %5251 = vmatprep.subr.bf16.mxu0 %v5188
        %5252 = vmatpush1.bf16.msra.mxu0 %v5187
        %5253 = vmatprep.subr.bf16.mxu0 %v5192
        %5254 = vmatpush1.bf16.msra.mxu0 %v5191
        %5255 = vmatprep.subr.bf16.mxu0 %v5196
        %5256 = vmatpush1.bf16.msra.mxu0 %v5195
        %5257 = vmatprep.subr.bf16.mxu0 %v5200
        %5258 = vmatpush1.bf16.msra.mxu0 %v5199
        %5259 = vmatprep.subr.bf16.mxu0 %v5204
        %5260 = vmatpush1.bf16.msra.mxu0 %v5203
        %5261 = vmatprep.subr.bf16.mxu0 %v5208
        %5262 = vmatpush1.bf16.msra.mxu0 %v5207
        %5263 = vmatprep.subr.bf16.mxu0 %v5212
        %5264 = vmatpush1.bf16.msra.mxu0 %v5211
        %5265 = vmatprep.subr.bf16.mxu0 %v5216
        %5266 = vmatpush1.bf16.msra.mxu0 %v5215
        %5267 = vmatprep.subr.bf16.mxu0 0
        %5268 = vmatpush1.bf16.msra.mxu0 0
        %5269 = vmatprep.subr.bf16.mxu0 0
        %5270 = vmatpush1.bf16.msra.mxu0 0
        %5271 = vmatprep.subr.bf16.mxu0 0
        %5272 = vmatpush1.bf16.msra.mxu0 0
        %5273 = vmatprep.subr.bf16.mxu0 0
        %5274 = vmatpush1.bf16.msra.mxu0 0
        %5275 = vmatprep.subr.bf16.mxu0 0
        %5276 = vmatpush1.bf16.msra.mxu0 0
        %5277 = vmatprep.subr.bf16.mxu0 0
        %5278 = vmatpush1.bf16.msra.mxu0 0
        %5279 = vmatprep.subr.bf16.mxu0 0
        %5280 = vmatpush1.bf16.msra.mxu0 0
        %5281 = vmatprep.subr.bf16.mxu0 0
        %5282 = vmatpush1.bf16.msra.mxu0 0
        %5283 = vmatprep.mubr.bf16.mxu0 0
        %5284 = vmatmul.mubr.bf16.gmra.mrb[0].mxu0 %v5089
        %v5285 = vpop.f32.mrb[0].mxu0
        %v5286 = vadd.f32 0.0, %v5285
        %v5287 = vpop.f32.mrb[0].mxu0
        %v5288 = vadd.f32 0.0, %v5287
        %v5289 = vpop.f32.mrb[0].mxu0
        %v5290 = vpop.f32.mrb[0].mxu0
        %5291 = vdwg.mxu0
        %5292 = vmatprep.subr.bf16.mxu0 %v5190
        %5293 = vmatpush1.bf16.msra.mxu0 %v5189
        %5294 = vmatprep.subr.bf16.mxu0 %v5194
        %5295 = vmatpush1.bf16.msra.mxu0 %v5193
        %5296 = vmatprep.subr.bf16.mxu0 %v5198
        %5297 = vmatpush1.bf16.msra.mxu0 %v5197
        %5298 = vmatprep.subr.bf16.mxu0 %v5202
        %5299 = vmatpush1.bf16.msra.mxu0 %v5201
        %5300 = vmatprep.subr.bf16.mxu0 %v5206
        %5301 = vmatpush1.bf16.msra.mxu0 %v5205
        %5302 = vmatprep.subr.bf16.mxu0 %v5210
        %5303 = vmatpush1.bf16.msra.mxu0 %v5209
        %5304 = vmatprep.subr.bf16.mxu0 %v5214
        %5305 = vmatpush1.bf16.msra.mxu0 %v5213
        %5306 = vmatprep.subr.bf16.mxu0 %v5218
        %5307 = vmatpush1.bf16.msra.mxu0 %v5217
        %5308 = vmatprep.subr.bf16.mxu0 0
        %5309 = vmatpush1.bf16.msra.mxu0 0
        %5310 = vmatprep.subr.bf16.mxu0 0
        %5311 = vmatpush1.bf16.msra.mxu0 0
        %5312 = vmatprep.subr.bf16.mxu0 0
        %5313 = vmatpush1.bf16.msra.mxu0 0
        %5314 = vmatprep.subr.bf16.mxu0 0
        %5315 = vmatpush1.bf16.msra.mxu0 0
        %5316 = vmatprep.subr.bf16.mxu0 0
        %5317 = vmatpush1.bf16.msra.mxu0 0
        %5318 = vmatprep.subr.bf16.mxu0 0
        %5319 = vmatpush1.bf16.msra.mxu0 0
        %5320 = vmatprep.subr.bf16.mxu0 0
        %5321 = vmatpush1.bf16.msra.mxu0 0
        %5322 = vmatprep.subr.bf16.mxu0 0
        %5323 = vmatpush1.bf16.msra.mxu0 0
        %5324 = vmatprep.mubr.bf16.mxu0 0
        %5325 = vmatmul.mubr.bf16.gmra.mrb[0].mxu0 %v5089
        %v5326 = vpop.f32.mrb[0].mxu0
        %v5327 = vadd.f32 0.0, %v5326
        %v5328 = vpop.f32.mrb[0].mxu0
        %v5329 = vadd.f32 0.0, %v5328
        %v5330 = vpop.f32.mrb[0].mxu0
        %v5331 = vpop.f32.mrb[0].mxu0
        %5332 = vdwg.mxu0
        %v5333 = vadd.f32 %v5049, %v5286
        %v5334 = vadd.f32 %v5050, %v5288
        %v5335 = vadd.f32 %v5051, %v5327
        %v5336 = vadd.f32 %v5052, %v5329
        %v5337 = vld [vmem:[%s362] sm:$0xf]
        %v5339 = vlaneseq
        %v5340 = vshrl.u32 %v5339, 7
        %v5341 = vsub.s32 0, %v5340
        %v5342 = vrot.slane %v5337, %v5341
        %v5343 = vlaneseq
        %v5344 = vshrl.u32 %v5343, 7
        %v5345 = vsub.s32 1, %v5344
        %v5346 = vrot.slane %v5337, %v5345
        %v5347 = vlaneseq
        %v5348 = vshrl.u32 %v5347, 7
        %v5349 = vsub.s32 2, %v5348
        %v5350 = vrot.slane %v5337, %v5349
        %v5351 = vlaneseq
        %v5352 = vshrl.u32 %v5351, 7
        %v5353 = vsub.s32 3, %v5352
        %v5354 = vrot.slane %v5337, %v5353
        %v5359 = vadd.f32 %v5333, %v5342
        %v5360 = vadd.f32 %v5334, %v5346
        %v5361 = vadd.f32 %v5335, %v5350
        %v5362 = vadd.f32 %v5336, %v5354
        %v5363 = vmax.f32 %v5359, 0.0
        %v5364 = vmax.f32 %v5360, 0.0
        %v5365 = vmax.f32 %v5361, 0.0
        %v5366 = vmax.f32 %v5362, 0.0
        %v5367 = vld [vmem:[#allocation13] sm:$0x3]
        %v5368 = vpack.c.bf16 %v5363, %v5363
        %v5369 = vpack.c.bf16 %v5364, %v5364
        %v5370 = vpack.c.bf16 %v5365, %v5365
        %v5371 = vpack.c.bf16 %v5366, %v5366
        %v5372 = vld [vmem:[%s384] sm:$0xf]
        %v5373 = vld [vmem:[%s384 + $0x4] sm:$0xf]
        %v5374 = vld [vmem:[%s384 + $0x8] sm:$0xf]
        %v5375 = vld [vmem:[%s384 + $0xc] sm:$0xf]
        %v5376 = vld [vmem:[%s384 + $0x10] sm:$0xf]
        %v5377 = vld [vmem:[%s384 + $0x14] sm:$0xf]
        %v5378 = vld [vmem:[%s384 + $0x18] sm:$0xf]
        %v5379 = vld [vmem:[%s384 + $0x1c] sm:$0xf]
        %v5380 = vld [vmem:[%s384 + $0x20] sm:$0xf]
        %v5381 = vld [vmem:[%s384 + $0x24] sm:$0xf]
        %v5382 = vld [vmem:[%s384 + $0x28] sm:$0xf]
        %v5383 = vld [vmem:[%s384 + $0x2c] sm:$0xf]
        %v5384 = vld [vmem:[%s384 + $0x30] sm:$0xf]
        %v5385 = vld [vmem:[%s384 + $0x34] sm:$0xf]
        %v5386 = vld [vmem:[%s384 + $0x38] sm:$0xf]
        %v5387 = vld [vmem:[%s384 + $0x3c] sm:$0xf]
        %v5388 = vld [vmem:[%s384 + $0x40] sm:$0xf]
        %v5389 = vld [vmem:[%s384 + $0x44] sm:$0xf]
        %v5390 = vld [vmem:[%s384 + $0x48] sm:$0xf]
        %v5391 = vld [vmem:[%s384 + $0x4c] sm:$0xf]
        %v5392 = vld [vmem:[%s384 + $0x50] sm:$0xf]
        %v5393 = vld [vmem:[%s384 + $0x54] sm:$0xf]
        %v5394 = vld [vmem:[%s384 + $0x58] sm:$0xf]
        %v5395 = vld [vmem:[%s384 + $0x5c] sm:$0xf]
        %v5396 = vld [vmem:[%s384 + $0x60] sm:$0xf]
        %v5397 = vld [vmem:[%s384 + $0x64] sm:$0xf]
        %v5398 = vld [vmem:[%s384 + $0x68] sm:$0xf]
        %v5399 = vld [vmem:[%s384 + $0x6c] sm:$0xf]
        %v5400 = vld [vmem:[%s384 + $0x70] sm:$0xf]
        %v5401 = vld [vmem:[%s384 + $0x74] sm:$0xf]
        %v5402 = vld [vmem:[%s384 + $0x78] sm:$0xf]
        %v5403 = vld [vmem:[%s384 + $0x7c] sm:$0xf]
        %v5404 = vld [vmem:[%s384 + $0x80] sm:$0xf]
        %v5405 = vld [vmem:[%s384 + $0x84] sm:$0xf]
        %v5406 = vld [vmem:[%s384 + $0x88] sm:$0xf]
        %v5407 = vld [vmem:[%s384 + $0x8c] sm:$0xf]
        %v5408 = vld [vmem:[%s384 + $0x90] sm:$0xf]
        %v5409 = vld [vmem:[%s384 + $0x94] sm:$0xf]
        %v5410 = vld [vmem:[%s384 + $0x98] sm:$0xf]
        %v5411 = vld [vmem:[%s384 + $0x9c] sm:$0xf]
        %v5412 = vld [vmem:[%s384 + $0xa0] sm:$0xf]
        %v5413 = vld [vmem:[%s384 + $0xa4] sm:$0xf]
        %v5414 = vld [vmem:[%s384 + $0xa8] sm:$0xf]
        %v5415 = vld [vmem:[%s384 + $0xac] sm:$0xf]
        %v5416 = vld [vmem:[%s384 + $0xb0] sm:$0xf]
        %v5417 = vld [vmem:[%s384 + $0xb4] sm:$0xf]
        %v5418 = vld [vmem:[%s384 + $0xb8] sm:$0xf]
        %v5419 = vld [vmem:[%s384 + $0xbc] sm:$0xf]
        %v5420 = vld [vmem:[%s384 + $0xc0] sm:$0xf]
        %v5421 = vld [vmem:[%s384 + $0xc4] sm:$0xf]
        %v5422 = vld [vmem:[%s384 + $0xc8] sm:$0xf]
        %v5423 = vld [vmem:[%s384 + $0xcc] sm:$0xf]
        %v5424 = vld [vmem:[%s384 + $0xd0] sm:$0xf]
        %v5425 = vld [vmem:[%s384 + $0xd4] sm:$0xf]
        %v5426 = vld [vmem:[%s384 + $0xd8] sm:$0xf]
        %v5427 = vld [vmem:[%s384 + $0xdc] sm:$0xf]
        %v5428 = vld [vmem:[%s384 + $0xe0] sm:$0xf]
        %v5429 = vld [vmem:[%s384 + $0xe4] sm:$0xf]
        %v5430 = vld [vmem:[%s384 + $0xe8] sm:$0xf]
        %v5431 = vld [vmem:[%s384 + $0xec] sm:$0xf]
        %v5432 = vld [vmem:[%s384 + $0xf0] sm:$0xf]
        %v5433 = vld [vmem:[%s384 + $0xf4] sm:$0xf]
        %v5434 = vld [vmem:[%s384 + $0xf8] sm:$0xf]
        %v5435 = vld [vmem:[%s384 + $0xfc] sm:$0xf]
        %v5500 = vunpack.c.l.b16 %v5372
        %v5501 = vunpack.c.l.b16 %v5373
        %v5502 = vunpack.c.l.b16 %v5374
        %v5503 = vunpack.c.l.b16 %v5375
        %v5504 = vunpack.c.l.b16 %v5376
        %v5505 = vunpack.c.l.b16 %v5377
        %v5506 = vunpack.c.l.b16 %v5378
        %v5507 = vunpack.c.l.b16 %v5379
        %v5508 = vunpack.c.l.b16 %v5380
        %v5509 = vunpack.c.l.b16 %v5381
        %v5510 = vunpack.c.l.b16 %v5382
        %v5511 = vunpack.c.l.b16 %v5383
        %v5512 = vunpack.c.l.b16 %v5384
        %v5513 = vunpack.c.l.b16 %v5385
        %v5514 = vunpack.c.l.b16 %v5386
        %v5515 = vunpack.c.l.b16 %v5387
        %v5516 = vunpack.c.l.b16 %v5388
        %v5517 = vunpack.c.l.b16 %v5389
        %v5518 = vunpack.c.l.b16 %v5390
        %v5519 = vunpack.c.l.b16 %v5391
        %v5520 = vunpack.c.l.b16 %v5392
        %v5521 = vunpack.c.l.b16 %v5393
        %v5522 = vunpack.c.l.b16 %v5394
        %v5523 = vunpack.c.l.b16 %v5395
        %v5524 = vunpack.c.l.b16 %v5396
        %v5525 = vunpack.c.l.b16 %v5397
        %v5526 = vunpack.c.l.b16 %v5398
        %v5527 = vunpack.c.l.b16 %v5399
        %v5528 = vunpack.c.l.b16 %v5400
        %v5529 = vunpack.c.l.b16 %v5401
        %v5530 = vunpack.c.l.b16 %v5402
        %v5531 = vunpack.c.l.b16 %v5403
        %v5532 = vunpack.c.l.b16 %v5404
        %v5533 = vunpack.c.l.b16 %v5405
        %v5534 = vunpack.c.l.b16 %v5406
        %v5535 = vunpack.c.l.b16 %v5407
        %v5536 = vunpack.c.l.b16 %v5408
        %v5537 = vunpack.c.l.b16 %v5409
        %v5538 = vunpack.c.l.b16 %v5410
        %v5539 = vunpack.c.l.b16 %v5411
        %v5540 = vunpack.c.l.b16 %v5412
        %v5541 = vunpack.c.l.b16 %v5413
        %v5542 = vunpack.c.l.b16 %v5414
        %v5543 = vunpack.c.l.b16 %v5415
        %v5544 = vunpack.c.l.b16 %v5416
        %v5545 = vunpack.c.l.b16 %v5417
        %v5546 = vunpack.c.l.b16 %v5418
        %v5547 = vunpack.c.l.b16 %v5419
        %v5548 = vunpack.c.l.b16 %v5420
        %v5549 = vunpack.c.l.b16 %v5421
        %v5550 = vunpack.c.l.b16 %v5422
        %v5551 = vunpack.c.l.b16 %v5423
        %v5552 = vunpack.c.l.b16 %v5424
        %v5553 = vunpack.c.l.b16 %v5425
        %v5554 = vunpack.c.l.b16 %v5426
        %v5555 = vunpack.c.l.b16 %v5427
        %v5556 = vunpack.c.l.b16 %v5428
        %v5557 = vunpack.c.l.b16 %v5429
        %v5558 = vunpack.c.l.b16 %v5430
        %v5559 = vunpack.c.l.b16 %v5431
        %v5560 = vunpack.c.l.b16 %v5432
        %v5561 = vunpack.c.l.b16 %v5433
        %v5562 = vunpack.c.l.b16 %v5434
        %v5563 = vunpack.c.l.b16 %v5435
        %v5564 = vpack.c.b16 %v5501, %v5500
        %v5565 = vpack.c.b16 %v5503, %v5502
        %v5566 = vpack.c.b16 %v5505, %v5504
        %v5567 = vpack.c.b16 %v5507, %v5506
        %v5568 = vpack.c.b16 %v5509, %v5508
        %v5569 = vpack.c.b16 %v5511, %v5510
        %v5570 = vpack.c.b16 %v5513, %v5512
        %v5571 = vpack.c.b16 %v5515, %v5514
        %v5572 = vpack.c.b16 %v5517, %v5516
        %v5573 = vpack.c.b16 %v5519, %v5518
        %v5574 = vpack.c.b16 %v5521, %v5520
        %v5575 = vpack.c.b16 %v5523, %v5522
        %v5576 = vpack.c.b16 %v5525, %v5524
        %v5577 = vpack.c.b16 %v5527, %v5526
        %v5578 = vpack.c.b16 %v5529, %v5528
        %v5579 = vpack.c.b16 %v5531, %v5530
        %v5580 = vpack.c.b16 %v5533, %v5532
        %v5581 = vpack.c.b16 %v5535, %v5534
        %v5582 = vpack.c.b16 %v5537, %v5536
        %v5583 = vpack.c.b16 %v5539, %v5538
        %v5584 = vpack.c.b16 %v5541, %v5540
        %v5585 = vpack.c.b16 %v5543, %v5542
        %v5586 = vpack.c.b16 %v5545, %v5544
        %v5587 = vpack.c.b16 %v5547, %v5546
        %v5588 = vpack.c.b16 %v5549, %v5548
        %v5589 = vpack.c.b16 %v5551, %v5550
        %v5590 = vpack.c.b16 %v5553, %v5552
        %v5591 = vpack.c.b16 %v5555, %v5554
        %v5592 = vpack.c.b16 %v5557, %v5556
        %v5593 = vpack.c.b16 %v5559, %v5558
        %v5594 = vpack.c.b16 %v5561, %v5560
        %v5595 = vpack.c.b16 %v5563, %v5562
        %5628 = vmatprep.subr.bf16.mxu0 0
        %5629 = vmatpush1.bf16.msra.mxu0 %v5564
        %5630 = vmatprep.subr.bf16.mxu0 0
        %5631 = vmatpush1.bf16.msra.mxu0 %v5565
        %5632 = vmatprep.subr.bf16.mxu0 0
        %5633 = vmatpush1.bf16.msra.mxu0 %v5566
        %5634 = vmatprep.subr.bf16.mxu0 0
        %5635 = vmatpush1.bf16.msra.mxu0 %v5567
        %5636 = vmatprep.subr.bf16.mxu0 0
        %5637 = vmatpush1.bf16.msra.mxu0 %v5568
        %5638 = vmatprep.subr.bf16.mxu0 0
        %5639 = vmatpush1.bf16.msra.mxu0 %v5569
        %5640 = vmatprep.subr.bf16.mxu0 0
        %5641 = vmatpush1.bf16.msra.mxu0 %v5570
        %5642 = vmatprep.subr.bf16.mxu0 0
        %5643 = vmatpush1.bf16.msra.mxu0 %v5571
        %5644 = vmatprep.subr.bf16.mxu0 0
        %5645 = vmatpush1.bf16.msra.mxu0 %v5572
        %5646 = vmatprep.subr.bf16.mxu0 0
        %5647 = vmatpush1.bf16.msra.mxu0 %v5573
        %5648 = vmatprep.subr.bf16.mxu0 0
        %5649 = vmatpush1.bf16.msra.mxu0 %v5574
        %5650 = vmatprep.subr.bf16.mxu0 0
        %5651 = vmatpush1.bf16.msra.mxu0 %v5575
        %5652 = vmatprep.subr.bf16.mxu0 0
        %5653 = vmatpush1.bf16.msra.mxu0 %v5576
        %5654 = vmatprep.subr.bf16.mxu0 0
        %5655 = vmatpush1.bf16.msra.mxu0 %v5577
        %5656 = vmatprep.subr.bf16.mxu0 0
        %5657 = vmatpush1.bf16.msra.mxu0 %v5578
        %5658 = vmatprep.subr.bf16.mxu0 0
        %5659 = vmatpush1.bf16.msra.mxu0 %v5579
        %5660 = vmatprep.mubr.bf16.mxu0 %v5369
        %5661 = vmatmul.mubr.bf16.gmra.mrb[0].mxu0 %v5368
        %v5662 = vpop.f32.mrb[0].mxu0
        %v5663 = vadd.f32 0.0, %v5662
        %v5664 = vpop.f32.mrb[0].mxu0
        %v5665 = vpop.f32.mrb[0].mxu0
        %v5666 = vpop.f32.mrb[0].mxu0
        %5667 = vdwg.mxu0
        %5668 = vmatprep.subr.bf16.mxu0 0
        %5669 = vmatpush1.bf16.msra.mxu0 %v5580
        %5670 = vmatprep.subr.bf16.mxu0 0
        %5671 = vmatpush1.bf16.msra.mxu0 %v5581
        %5672 = vmatprep.subr.bf16.mxu0 0
        %5673 = vmatpush1.bf16.msra.mxu0 %v5582
        %5674 = vmatprep.subr.bf16.mxu0 0
        %5675 = vmatpush1.bf16.msra.mxu0 %v5583
        %5676 = vmatprep.subr.bf16.mxu0 0
        %5677 = vmatpush1.bf16.msra.mxu0 %v5584
        %5678 = vmatprep.subr.bf16.mxu0 0
        %5679 = vmatpush1.bf16.msra.mxu0 %v5585
        %5680 = vmatprep.subr.bf16.mxu0 0
        %5681 = vmatpush1.bf16.msra.mxu0 %v5586
        %5682 = vmatprep.subr.bf16.mxu0 0
        %5683 = vmatpush1.bf16.msra.mxu0 %v5587
        %5684 = vmatprep.subr.bf16.mxu0 0
        %5685 = vmatpush1.bf16.msra.mxu0 %v5588
        %5686 = vmatprep.subr.bf16.mxu0 0
        %5687 = vmatpush1.bf16.msra.mxu0 %v5589
        %5688 = vmatprep.subr.bf16.mxu0 0
        %5689 = vmatpush1.bf16.msra.mxu0 %v5590
        %5690 = vmatprep.subr.bf16.mxu0 0
        %5691 = vmatpush1.bf16.msra.mxu0 %v5591
        %5692 = vmatprep.subr.bf16.mxu0 0
        %5693 = vmatpush1.bf16.msra.mxu0 %v5592
        %5694 = vmatprep.subr.bf16.mxu0 0
        %5695 = vmatpush1.bf16.msra.mxu0 %v5593
        %5696 = vmatprep.subr.bf16.mxu0 0
        %5697 = vmatpush1.bf16.msra.mxu0 %v5594
        %5698 = vmatprep.subr.bf16.mxu0 0
        %5699 = vmatpush1.bf16.msra.mxu0 %v5595
        %5700 = vmatprep.mubr.bf16.mxu0 %v5371
        %5701 = vmatmul.mubr.bf16.gmra.mrb[0].mxu0 %v5370
        %v5702 = vpop.f32.mrb[0].mxu0
        %v5703 = vadd.f32 %v5663, %v5702
        %v5704 = vpop.f32.mrb[0].mxu0
        %v5705 = vpop.f32.mrb[0].mxu0
        %v5706 = vpop.f32.mrb[0].mxu0
        %5707 = vdwg.mxu0
        %v5708 = vadd.f32 %v5367, %v5703
        %5709 = vst [vmem:[#allocation13] sm:$0x3] %v5708
        // Predicated region
        $region81: #{aux_block_forward.1} parent=51 // pred_check
          %p5710 = pneg %p221
        $region82: #{aux_block_forward.1} parent=51 // pred_check_branch
          %5712 = sbr.rel (%p5710) target = $region84
        $region83: #{aux_block_forward.1} parent=51 // pred_region
          %s5714 = ssub.s32 32, 32
          %5715 = vsyncadd [#allocation5], %s5714
          %s5717 = sshll.u32 [#allocation13], 4
          %s5718 = int_to_ptr.vmem [resolvable:$true] %s5717
          %5720 = dma.vmem_to_hbm [thread:$0]  %s5718, 32, %s8, [#allocation5]
        $region84: #{aux_block_forward.1} parent=51 // pred_fallthru
          _
        // Predicated region
        $region85: #{aux_block_forward.1} parent=51 // pred_check
          %p5721 = pneg %p221
        $region86: #{aux_block_forward.1} parent=51 // pred_check_branch
          %5723 = sbr.rel (%p5721) target = $region88
        $region87: #{aux_block_forward.1} parent=51 // pred_region
          %5724 = dma.done [#allocation5], 32
        $region88: #{aux_block_forward.1} parent=51 // pred_fallthru
          _
      $region52: #{aux_block_forward.1} parent=5 // pred_fallthru
        _
      %p5725 = scmp.le.s32.totalorder 2, %s20
      // Predicated region
      $region89: #{aux_block_forward.1} parent=5 // pred_check
        %p5726 = pneg %p5725
      $region90: #{aux_block_forward.1} parent=5 // pred_check_branch
        %5728 = sbr.rel (%p5726) target = $region92
      $region91: #{aux_block_forward.1} parent=5 // pred_region
        %s5729 = ssub.s32 %s20, 2
      $region92: #{aux_block_forward.1} parent=5 // pred_fallthru
        _
    $region6: #{aux_block_forward.1} parent=1 // loop_footer
      %s24 = sadd.s32 1, %s20
    $region7: #{aux_block_forward.1} parent=1 // loop_footer_branch
      %19 = sbr.rel target = $region3
    $region8: #{aux_block_forward.1} parent=1 // loop_exit
      _
    %5730 = vsyncpa [#allocation4], 1
    %s5731 = scalar_lea.sflag [#allocation4], 1
    %5732 = vsyncpa %s5731, 1
    %5733 = vsyncpa [#allocation7], 1
    %5734 = vsyncpa [#allocation11], 1
    %s5735 = scalar_lea.sflag [#allocation11], 1
    %5736 = vsyncpa %s5735, 1
    %5737 = vsyncpa [#allocation5], 1
    %s5738 = scalar_lea.sflag [#allocation5], 1
    %5739 = vsyncpa %s5738, 1

</llo_original>
